<compile_context>
chip_gen: v7x
topology: tpu7x:2x2x1
jax: 0.10.0
libtpu: 0.0.40
codegen_flags: <defaults>
</compile_context>

<pallas_src>
import functools

import jax
import jax.numpy as jnp
import numpy as np
from jax import lax
from jax.experimental import pallas as pl
from jax.experimental.pallas import tpu as pltpu


# ----------------------------------------------------------------------------
# Parameter construction (deterministic, glue code)
# ----------------------------------------------------------------------------
def make_tt_dense_weight(key, in_shape, out_shape, ranks, scale=0.3):
    """Build TT cores deterministically and contract to the dense equivalent
    (prod(in_shape), prod(out_shape)) matrix of the TTLinear layer."""
    d = len(in_shape)
    keys = jax.random.split(key, d)
    cores = []
    for k in range(d):
        shp = (int(ranks[k]), int(in_shape[k]), int(out_shape[k]), int(ranks[k + 1]))
        cores.append(scale * jax.random.normal(keys[k], shp, dtype=jnp.float32))

    W = jnp.ones((1, 1, 1), dtype=jnp.float32)
    for core in cores:
        Ia, Oa, _ = W.shape
        _, n, m, r2 = core.shape
        W = jnp.einsum("abr,rnms->anbms", W, core).reshape(Ia * n, Oa * m, r2)
    return W.reshape(int(np.prod(in_shape)), int(np.prod(out_shape)))


def make_hidden_weight(key, hidden_size):
    """nn.Linear(hidden, 4*hidden, bias=False), uniform(-sqrt(1/H), sqrt(1/H)),
    stored transposed so hid2hid = h @ W_hh (shape (H, 4H))."""
    k = 1.0 / hidden_size
    lim = k ** 0.5
    return jax.random.uniform(
        key, (hidden_size, 4 * hidden_size), minval=-lim, maxval=lim, dtype=jnp.float32
    )


def _pick_block(n, target, align=1):
    """Largest divisor of n that is <= target and a multiple of `align`.
    Falls back to n itself (a full-extent block is always legal)."""
    for d in range(min(n, target), 0, -1):
        if n % d == 0 and d % align == 0:
            return d
    return n


# ----------------------------------------------------------------------------
# Kernel 1: hoisted input projection  pre_gates = x @ W_in
# ----------------------------------------------------------------------------
def _input_proj_kernel(x_ref, w_ref, o_ref):
    o_ref[...] = jnp.dot(
        x_ref[...], w_ref[...], preferred_element_type=jnp.float32
    ).astype(o_ref.dtype)


def tt_input_projection(x, w_in, *, use_bf16=True):
    """(T, B, I) x (I, 4H) -> (T, B, 4H) as one large batched MXU matmul.

    use_bf16=True casts operands to bf16 (f32 accumulation) and stores the
    pre-gates in bf16.  The MXU is bf16-native on v5e/v6e/v7x, so this is the
    recommended default on all generations; use_bf16=False is only for tight
    f32 reference checks.
    """
    T, B, I = x.shape
    G = w_in.shape[1]
    TB = T * B
    x2 = x.reshape(TB, I)
    out_dtype = jnp.float32
    if use_bf16:
        x2 = x2.astype(jnp.bfloat16)
        w_in = w_in.astype(jnp.bfloat16)
        out_dtype = jnp.bfloat16

    row_block = _pick_block(TB, 512, align=8)
    grid = (TB // row_block,)

    pre = pl.pallas_call(
        _input_proj_kernel,
        out_shape=jax.ShapeDtypeStruct((TB, G), out_dtype),
        grid_spec=pltpu.PrefetchScalarGridSpec(
            num_scalar_prefetch=0,
            grid=grid,
            in_specs=[
                pl.BlockSpec((row_block, I), lambda r: (r, 0)),
                pl.BlockSpec((I, G), lambda r: (0, 0)),   # weight resident
            ],
            out_specs=pl.BlockSpec((row_block, G), lambda r: (r, 0)),
        ),
        compiler_params=pltpu.CompilerParams(
            dimension_semantics=("parallel",),   # shards rows across v7x cores
        ),
    )(x2, w_in)
    return pre.reshape(T, B, G)


# ----------------------------------------------------------------------------
# VMEM budget helpers for the recurrence
# ----------------------------------------------------------------------------
def _recurrence_vmem_bytes(block_t, block_b, H, G, compact, pre_itemsize, w_itemsize):
    y_lanes = H if compact else G
    w_rows = H if compact else G
    b = 2 * block_t * block_b * G * pre_itemsize       # pre-gates input (2x buffered)
    b += 2 * w_rows * G * w_itemsize                   # resident W_hh (2x buffered)
    b += block_t * block_b * y_lanes * 4               # y accumulator scratch
    b += 2 * block_t * block_b * y_lanes * 4           # y output block (2x buffered)
    b += 2 * block_b * y_lanes * 4                     # h / c carry scratch
    b += 2 * block_b * y_lanes * 4                     # final-c output block
    return b


def _select_block_t(T, block_b, H, G, compact, pre_itemsize, w_itemsize,
                    budget_bytes=12 * 2**20, max_unroll=32):
    """Largest divisor of T (<= max_unroll for code size) fitting the budget.
    The 12 MiB budget is conservative even for v5e's 16 MiB default scoped
    VMEM; vmem_limit_bytes is still raised explicitly at the call site."""
    best = 1
    for bt in range(1, min(T, max_unroll) + 1):
        if T % bt == 0 and _recurrence_vmem_bytes(
                bt, block_b, H, G, compact, pre_itemsize, w_itemsize) <= budget_bytes:
            best = bt
    return best


# ----------------------------------------------------------------------------
# Kernel 2a: recurrence, padded full-lane-carry path (H < 128)
# ----------------------------------------------------------------------------
def _ttlstm_recurrence_kernel_padded(pre_ref, w_hh_ref, y_ref, cN_ref,
                                     h_scr, c_scr, y_scr, *, hidden_size, block_t):
    # NOTE: this scheme depends on (a) gate column order [i | f | g | o] and
    # (b) the specific roll shifts below being rotation-direction agnostic.
    # Do not change one without re-deriving the other.
    H = hidden_size
    G = 4 * H
    t_idx = pl.program_id(1)          # time-block index (axis 0 is batch block)

    @pl.when(t_idx == 0)
    def _init():
        h_scr[...] = jnp.zeros_like(h_scr)
        c_scr[...] = jnp.zeros_like(c_scr)

    Bb = h_scr.shape[0]
    lane = lax.broadcasted_iota(jnp.int32, (Bb, G), 1)
    is_g = (lane >= 2 * H) & (lane < 3 * H)
    # Single-tanh activation: the i/f/o columns of W_in/W_hh were pre-scaled
    # by 0.5 in the wrapper, so sigmoid(x) = 0.5*tanh(x/2) + 0.5 is recovered
    # as gate_scale*tanh(gates) + gate_bias.  These vectors are loop-invariant
    # (hoisted out of the per-step loop).
    gate_scale = jnp.where(is_g, 1.0, 0.5).astype(jnp.float32)
    gate_bias = jnp.where(is_g, 0.0, 0.5).astype(jnp.float32)

    w_hh = w_hh_ref[...]              # (4H, 4H); only rows [H,2H) are nonzero.

    # The h/c carries live full-lane as (Bb, 4H); the real values sit in lane
    # group [H, 2H).  Junk in the other groups stays bounded (every multiplier
    # is a post-sigmoid/tanh value in (-1,1)) and is annihilated by the zero
    # rows of w_hh, so it is never observable.
    def step(tl, carry):
        h_full, c_full = carry
        gates = pre_ref[tl].astype(jnp.float32) + jnp.dot(
            h_full.astype(w_hh.dtype), w_hh, preferred_element_type=jnp.float32)
        t = jnp.tanh(gates)                          # ONE EUP pass over 4H lanes
        act = gate_scale * t + gate_bias             # lanes: i | f | g | o
        # Two INDEPENDENT XLU rolls (both depend only on `act`): at lane group
        # [H,2H) one of them delivers i and the other delivers g, for EITHER
        # hardware rotation direction, so their product is i*g there.
        ig_at_h = pltpu.roll(act, H, axis=1) * pltpu.roll(act, 3 * H, axis=1)
        c_new = act * c_full + ig_at_h               # group [H,2H): f*c + i*g
        # Half-rotation (2H) is direction-agnostic; only feeds h_new, so it
        # overlaps with the tanh(c_new) chain.
        o_at_h = pltpu.roll(act, 2 * H, axis=1)
        h_new = o_at_h * jnp.tanh(c_new)             # group [H,2H): o*tanh(c)
        y_scr[tl] = h_new                            # full-lane VMEM store
        return h_new, c_new

    h_last, c_last = lax.fori_loop(
        0, block_t, step, (h_scr[...], c_scr[...]), unroll=True)
    h_scr[...] = h_last
    c_scr[...] = c_last

    # Lane-dense (block_t, Bb, 4H) writeback (no masked 32-lane stores); the
    # real h in lanes [H,2H) is sliced out in the wrapper.
    y_ref[...] = y_scr[...]

    @pl.when(t_idx == pl.num_programs(1) - 1)
    def _final():
        cN_ref[...] = c_last                         # full-lane; sliced in wrapper


# ----------------------------------------------------------------------------
# Kernel 2b: recurrence, compact path (H a multiple of 128 — no padding/rolls)
# ----------------------------------------------------------------------------
def _ttlstm_recurrence_kernel_compact(pre_ref, w_hh_ref, y_ref, cN_ref,
                                      h_scr, c_scr, y_scr, *, hidden_size, block_t):
    H = hidden_size
    t_idx = pl.program_id(1)

    @pl.when(t_idx == 0)
    def _init():
        h_scr[...] = jnp.zeros_like(h_scr)
        c_scr[...] = jnp.zeros_like(c_scr)

    w_hh = w_hh_ref[...]              # (H, 4H), i/f/o columns pre-scaled by 0.5

    def step(tl, carry):
        h, c = carry
        gates = pre_ref[tl].astype(jnp.float32) + jnp.dot(
            h.astype(w_hh.dtype), w_hh, preferred_element_type=jnp.float32)
        t = jnp.tanh(gates)                          # single EUP pass
        # Gate groups are whole 128-lane multiples -> register-aligned slices.
        i = 0.5 * t[:, 0 * H:1 * H] + 0.5
        f = 0.5 * t[:, 1 * H:2 * H] + 0.5
        g = t[:, 2 * H:3 * H]
        o = 0.5 * t[:, 3 * H:4 * H] + 0.5
        c_new = f * c + i * g
        h_new = o * jnp.tanh(c_new)
        y_scr[tl] = h_new
        return h_new, c_new

    h_last, c_last = lax.fori_loop(
        0, block_t, step, (h_scr[...], c_scr[...]), unroll=True)
    h_scr[...] = h_last
    c_scr[...] = c_last

    y_ref[...] = y_scr[...]           # lane-dense (block_t, Bb, H) writeback

    @pl.when(t_idx == pl.num_programs(1) - 1)
    def _final():
        cN_ref[...] = c_last


# ----------------------------------------------------------------------------
# One TTLSTM layer
# ----------------------------------------------------------------------------
def ttlstm_layer(x, w_in, w_hh, *, block_t=None, block_b=None, use_bf16_matmul=True):
    """One TTLSTM layer over a time-major sequence.

    x:    (T, B, input_size) float32
    w_in: (input_size, 4*hidden_size)   dense equivalent of TTLinear
    w_hh: (hidden_size, 4*hidden_size)  hidden-to-hidden weight (transposed)
    Returns (outputs (T, B, H), (h_T (B, H), c_T (B, H))).
    """
    T, B, I = x.shape
    G = w_in.shape[1]
    H = G // 4
    assert w_hh.shape == (H, G)

    # Fold the sigmoid half-scale into the i/f/o gate columns (single-tanh trick).
    col = jnp.arange(G)
    col_scale = jnp.where((col >= 2 * H) & (col < 3 * H), 1.0, 0.5).astype(jnp.float32)
    w_in_s = w_in.astype(jnp.float32) * col_scale[None, :]
    w_hh_s = w_hh.astype(jnp.float32) * col_scale[None, :]

    # (1) Hoisted input projection — only h @ W_hh stays in the serial loop.
    # TODO(synk): for v5e-class HBM bandwidth, fuse this matmul into the
    # recurrence kernel (stream x blocks) to avoid the pre-gates HBM round-trip.
    pre = tt_input_projection(x, w_in_s, use_bf16=use_bf16_matmul)    # (T, B, 4H)

    compact = (H % 128 == 0)
    w_dtype = jnp.bfloat16 if use_bf16_matmul else jnp.float32
    if compact:
        # H >= 128: gate groups are lane-aligned; no padding, compact (H,4H) weight.
        w_rec = w_hh_s.astype(w_dtype)
    else:
        # H < 128: pad W_hh to (4H,4H) with the real rows at [H,2H) so the
        # recurrent matmul can consume the full-lane (B,4H) h carry unsliced.
        w_rec = jnp.zeros((G, G), jnp.float32).at[H:2 * H, :].set(w_hh_s).astype(w_dtype)

    if block_b is None:
        # Batch blocks shard across v7x's 2 TensorCores ("parallel" axis);
        # keep blocks a multiple of 8 sublanes.
        block_b = B if (B < 16 or B % 16 != 0) else B // 2
    assert B % block_b == 0

    pre_itemsize = jnp.dtype(pre.dtype).itemsize
    w_itemsize = jnp.dtype(w_dtype).itemsize
    if block_t is None:
        block_t = _select_block_t(T, block_b, H, G, compact, pre_itemsize, w_itemsize)
    assert T % block_t == 0

    need = _recurrence_vmem_bytes(block_t, block_b, H, G, compact,
                                  pre_itemsize, w_itemsize)
    vmem_limit = int(min(64 * 2**20, max(32 * 2**20, 2 * need)))

    grid = (B // block_b, T // block_t)

    if compact:
        kernel = functools.partial(
            _ttlstm_recurrence_kernel_compact, hidden_size=H, block_t=block_t)
        y_lanes = H
        w_spec = pl.BlockSpec((H, G), lambda b, t: (0, 0))
    else:
        kernel = functools.partial(
            _ttlstm_recurrence_kernel_padded, hidden_size=H, block_t=block_t)
        y_lanes = G
        w_spec = pl.BlockSpec((G, G), lambda b, t: (0, 0))

    y_raw, c_raw = pl.pallas_call(
        kernel,
        out_shape=(
            jax.ShapeDtypeStruct((T, B, y_lanes), jnp.float32),   # per-step hidden
            jax.ShapeDtypeStruct((B, y_lanes), jnp.float32),      # final c
        ),
        grid_spec=pltpu.PrefetchScalarGridSpec(
            num_scalar_prefetch=0,
            grid=grid,
            in_specs=[
                pl.BlockSpec((block_t, block_b, G), lambda b, t: (t, b, 0)),  # pre
                w_spec,                                                       # W_hh
            ],
            out_specs=[
                pl.BlockSpec((block_t, block_b, y_lanes), lambda b, t: (t, b, 0)),
                pl.BlockSpec((block_b, y_lanes), lambda b, t: (b, 0)),
            ],
            scratch_shapes=[
                pltpu.VMEM((block_b, y_lanes), jnp.float32),           # h carry
                pltpu.VMEM((block_b, y_lanes), jnp.float32),           # c carry
                pltpu.VMEM((block_t, block_b, y_lanes), jnp.float32),  # y accumulator
            ],
        ),
        compiler_params=pltpu.CompilerParams(
            dimension_semantics=("parallel", "arbitrary"),  # batch || , time seq
            vmem_limit_bytes=vmem_limit,
        ),
    )(pre, w_rec)

    if compact:
        y = y_raw
        c_last = c_raw
    else:
        y = y_raw[:, :, H:2 * H]       # lane-dense kernel writeback; slice in XLA
        c_last = c_raw[:, H:2 * H]
    h_last = y[-1]                     # final h recovered from the outputs
    return y, (h_last, c_last)


# ----------------------------------------------------------------------------
# TTLSTM forward (padded / tensor path)
# ----------------------------------------------------------------------------
def ttlstm_forward(x, params, *, block_t=None, use_bf16_matmul=True):
    """Mirrors TTLSTM.forward for a padded (T, B, input_size) tensor input.

    Returns (layer_output (T, B, H),
             (final_hy (num_layers, B, H), final_cy (num_layers, B, H))).
    """
    # TODO(synk): multi-layer TTLSTM mutates hid_shape in place in the
    # reference (hid_shape[0] *= 4), which makes num_layers > 1
    # shape-inconsistent; only the num_layers == 1 configuration is exercised.
    final_hy, final_cy = [], []
    layer_input = x
    for (w_in, w_hh) in params:
        layer_output, (hy, cy) = ttlstm_layer(
            layer_input, w_in, w_hh,
            block_t=block_t, use_bf16_matmul=use_bf16_matmul)
        final_hy.append(hy)
        final_cy.append(cy)
        layer_input = layer_output
    return layer_input, (jnp.stack(final_hy, 0), jnp.stack(final_cy, 0))


# ----------------------------------------------------------------------------
# Pure-JAX f32 reference (same math as the PyTorch module)
# ----------------------------------------------------------------------------
def ttlstm_reference(x, params):
    final_h, final_c = [], []
    layer_input = x
    for (w_in, w_hh) in params:
        T, B, _ = layer_input.shape
        H = w_hh.shape[0]
        h = jnp.zeros((B, H), jnp.float32)
        c = jnp.zeros((B, H), jnp.float32)
        outs = []
        for t in range(T):
            gates = layer_input[t] @ w_in + h @ w_hh
            i = jax.nn.sigmoid(gates[:, :H])
            f = jax.nn.sigmoid(gates[:, H:2 * H])
            g = jnp.tanh(gates[:, 2 * H:3 * H])
            o = jax.nn.sigmoid(gates[:, 3 * H:])
            c = f * c + i * g
            h = o * jnp.tanh(c)
            outs.append(h)
        layer_input = jnp.stack(outs, 0)
        final_h.append(h)
        final_c.append(c)
    return layer_input, (jnp.stack(final_h, 0), jnp.stack(final_c, 0))


if __name__ == "__main__":
    def build_params(key, in_shape, hid_shape, ranks):
        # TTLSTMCell._set_hidden_shape: hid_shape[0] *= 4
        all_gate_hidden = [4 * hid_shape[0]] + list(hid_shape[1:])
        input_size = int(np.prod(in_shape))
        hidden_size = int(np.prod(hid_shape))
        k_tt, k_hh = jax.random.split(key)
        w_in = make_tt_dense_weight(k_tt, in_shape, all_gate_hidden, ranks)
        w_hh = make_hidden_weight(k_hh, hidden_size)
        return [(w_in, w_hh)], input_size, hidden_size

    key = jax.random.PRNGKey(0)
    k_p1, k_x1, k_p2, k_x2 = jax.random.split(key, 4)

    # ---- Config A: input_size=64, hidden=32 (padded full-lane-carry path) ----
    #   in_shape=[4,4,4], hid_shape=[2,4,4], ranks=[1,2,2,1], dims=3, 1 layer.
    T1, B1 = 32, 8
    params1, I1, H1 = build_params(k_p1, [4, 4, 4], [2, 4, 4], [1, 2, 2, 1])
    x1 = jax.random.normal(k_x1, (T1, B1, I1), dtype=jnp.float32)
    ref1_out, (ref1_h, ref1_c) = ttlstm_reference(x1, params1)

    # A1: f32 matmul operands — tight check of the kernel math.
    f32_fwd = jax.jit(functools.partial(ttlstm_forward, use_bf16_matmul=False))
    out, (hy, cy) = f32_fwd(x1, params1)
    out = jax.block_until_ready(out)
    assert out.shape == (T1, B1, H1)
    assert hy.shape == (1, B1, H1) and cy.shape == (1, B1, H1)
    np.testing.assert_allclose(np.asarray(out), np.asarray(ref1_out), rtol=1e-3, atol=1e-3)
    np.testing.assert_allclose(np.asarray(hy), np.asarray(ref1_h), rtol=1e-3, atol=1e-3)
    np.testing.assert_allclose(np.asarray(cy), np.asarray(ref1_c), rtol=1e-3, atol=1e-3)

    # A2: bf16 matmul operands (recommended default) — loose tolerance vs f32 ref.
    bf16_fwd = jax.jit(functools.partial(ttlstm_forward, use_bf16_matmul=True))
    out_b, (hy_b, cy_b) = bf16_fwd(x1, params1)
    out_b = jax.block_until_ready(out_b)
    np.testing.assert_allclose(np.asarray(out_b), np.asarray(ref1_out), rtol=3e-2, atol=3e-2)
    np.testing.assert_allclose(np.asarray(cy_b), np.asarray(ref1_c), rtol=3e-2, atol=3e-2)

    # ---- Config B: hidden=128 (compact lane-aligned path, no padding/rolls) ----
    #   in_shape=[4,4,4], hid_shape=[8,4,4], ranks=[1,2,2,1].
    T2, B2 = 16, 8
    params2, I2, H2 = build_params(k_p2, [4, 4, 4], [8, 4, 4], [1, 2, 2, 1])
    x2 = jax.random.normal(k_x2, (T2, B2, I2), dtype=jnp.float32)
    ref2_out, (ref2_h, ref2_c) = ttlstm_reference(x2, params2)
    out2, (hy2, cy2) = bf16_fwd(x2, params2)
    out2 = jax.block_until_ready(out2)
    assert out2.shape == (T2, B2, H2)
    np.testing.assert_allclose(np.asarray(out2), np.asarray(ref2_out), rtol=3e-2, atol=3e-2)
    np.testing.assert_allclose(np.asarray(cy2), np.asarray(ref2_c), rtol=3e-2, atol=3e-2)

    print("KERNEL_OK")
</pallas_src>

<mosaic_0001>
module attributes {stable_mosaic.version = 11 : i64} {
  func.func @_ttlstm_recurrence_kernel_padded(%arg0: i32, %arg1: i32, %arg2: memref<32x8x128xf32, #tpu.memory_space<vmem>>, %arg3: memref<128x128xf32, #tpu.memory_space<vmem>>, %arg4: memref<32x8x128xf32, #tpu.memory_space<vmem>>, %arg5: memref<8x128xf32, #tpu.memory_space<vmem>>, %arg6: memref<8x128xf32, #tpu.memory_space<vmem>>, %arg7: memref<8x128xf32, #tpu.memory_space<vmem>>, %arg8: memref<32x8x128xf32, #tpu.memory_space<vmem>>) attributes {dimension_semantics = [#tpu.dimension_semantics<parallel>, #tpu.dimension_semantics<arbitrary>], iteration_bounds = array<i64: 1, 1>, scalar_prefetch = 0 : i64, scratch_operands = 3 : i64, tpu.core_type = #tpu.core_type<tc>, window_params = [{transform_indices = @transform_0, window_bounds = array<i64: 32, 8, 128>}, {pipeline_mode = #tpu.pipeline_mode<synchronous>, transform_indices = @transform_1, window_bounds = array<i64: 128, 128>}, {transform_indices = @transform_2, window_bounds = array<i64: 32, 8, 128>}, {transform_indices = @transform_3, window_bounds = array<i64: 8, 128>}]} {
    %c0_i32 = arith.constant 0 : i32
    %0 = arith.cmpi eq, %arg1, %c0_i32 : i32
    %1 = arith.extui %0 : i1 to i32
    %c0_i32_0 = arith.constant 0 : i32
    %2 = arith.cmpi ne, %1, %c0_i32_0 : i32
    scf.if %2 {
      %cst_278 = arith.constant 0.000000e+00 : f32
      %665 = vector.broadcast %cst_278 : f32 to vector<8x128xf32>
      %c0_279 = arith.constant 0 : index
      %c0_280 = arith.constant 0 : index
      %666 = vector.load %arg6[%c0_279, %c0_280] : memref<8x128xf32, #tpu.memory_space<vmem>>, vector<8x128xf32>
      tpu.vector_store %arg6[%c0_279, %c0_280], %665 {strides = array<i32>} : memref<8x128xf32, #tpu.memory_space<vmem>>, vector<8x128xf32>,
      %cst_281 = arith.constant 0.000000e+00 : f32
      %667 = vector.broadcast %cst_281 : f32 to vector<8x128xf32>
      %c0_282 = arith.constant 0 : index
      %c0_283 = arith.constant 0 : index
      %668 = vector.load %arg7[%c0_282, %c0_283] : memref<8x128xf32, #tpu.memory_space<vmem>>, vector<8x128xf32>
      tpu.vector_store %arg7[%c0_282, %c0_283], %667 {strides = array<i32>} : memref<8x128xf32, #tpu.memory_space<vmem>>, vector<8x128xf32>,
    } else {
    }
    %3 = tpu.iota {dimensions = array<i32: 1>} : vector<8x128xi32>
    %c64_i32 = arith.constant 64 : i32
    %4 = vector.broadcast %c64_i32 : i32 to vector<8x128xi32>
    %5 = arith.cmpi sge, %3, %4 : vector<8x128xi32>
    %c96_i32 = arith.constant 96 : i32
    %6 = vector.broadcast %c96_i32 : i32 to vector<8x128xi32>
    %7 = arith.cmpi slt, %3, %6 : vector<8x128xi32>
    %8 = arith.andi %5, %7 : vector<8x128xi1>
    %cst = arith.constant 1.000000e+00 : f32
    %cst_1 = arith.constant 5.000000e-01 : f32
    %9 = vector.broadcast %cst : f32 to vector<8x128xf32>
    %10 = vector.broadcast %cst_1 : f32 to vector<8x128xf32>
    %11 = arith.select %8, %9, %10 : vector<8x128xi1>, vector<8x128xf32>
    %cst_2 = arith.constant 0.000000e+00 : f32
    %cst_3 = arith.constant 5.000000e-01 : f32
    %12 = vector.broadcast %cst_2 : f32 to vector<8x128xf32>
    %13 = vector.broadcast %cst_3 : f32 to vector<8x128xf32>
    %14 = arith.select %8, %12, %13 : vector<8x128xi1>, vector<8x128xf32>
    %c0 = arith.constant 0 : index
    %c0_4 = arith.constant 0 : index
    %15 = vector.load %arg3[%c0, %c0_4] : memref<128x128xf32, #tpu.memory_space<vmem>>, vector<128x128xf32>
    %c0_5 = arith.constant 0 : index
    %c0_6 = arith.constant 0 : index
    %16 = vector.load %arg6[%c0_5, %c0_6] : memref<8x128xf32, #tpu.memory_space<vmem>>, vector<8x128xf32>
    %c0_7 = arith.constant 0 : index
    %c0_8 = arith.constant 0 : index
    %17 = vector.load %arg7[%c0_7, %c0_8] : memref<8x128xf32, #tpu.memory_space<vmem>>, vector<8x128xf32>
    %c0_i32_9 = arith.constant 0 : i32
    %18 = arith.index_cast %c0_i32_9 : i32 to index
    %c0_10 = arith.constant 0 : index
    %c0_11 = arith.constant 0 : index
    %19 = vector.load %arg2[%18, %c0_10, %c0_11] : memref<32x8x128xf32, #tpu.memory_space<vmem>>, vector<1x8x128xf32>
    %20 = vector.shape_cast %19 : vector<1x8x128xf32> to vector<8x128xf32>
    %cst_12 = arith.constant dense<0.000000e+00> : vector<8x128xf32>
    %21 = tpu.matmul %16, %15, %cst_12 {dimension_numbers = #tpu.dot_dimension_numbers<[1], [0], [0], [1], [0, 0, 1, 1], [], []>} : vector<8x128xf32>, vector<128x128xf32>, vector<8x128xf32> -> vector<8x128xf32>
    %22 = arith.addf %20, %21 : vector<8x128xf32>
    %23 = math.tanh %22 : vector<8x128xf32>
    %24 = arith.mulf %11, %23 : vector<8x128xf32>
    %25 = arith.addf %24, %14 : vector<8x128xf32>
    %c32_i32 = arith.constant 32 : i32
    %26 = tpu.dynamic_rotate %25 by %c32_i32 dim 1 : vector<8x128xf32>, i32 -> vector<8x128xf32>
    %c96_i32_13 = arith.constant 96 : i32
    %27 = tpu.dynamic_rotate %25 by %c96_i32_13 dim 1 : vector<8x128xf32>, i32 -> vector<8x128xf32>
    %28 = arith.mulf %26, %27 : vector<8x128xf32>
    %29 = arith.mulf %25, %17 : vector<8x128xf32>
    %30 = arith.addf %29, %28 : vector<8x128xf32>
    %c64_i32_14 = arith.constant 64 : i32
    %31 = tpu.dynamic_rotate %25 by %c64_i32_14 dim 1 : vector<8x128xf32>, i32 -> vector<8x128xf32>
    %32 = math.tanh %30 : vector<8x128xf32>
    %33 = arith.mulf %31, %32 : vector<8x128xf32>
    %34 = arith.index_cast %c0_i32_9 : i32 to index
    %c0_15 = arith.constant 0 : index
    %c0_16 = arith.constant 0 : index
    %35 = vector.load %arg8[%34, %c0_15, %c0_16] : memref<32x8x128xf32, #tpu.memory_space<vmem>>, vector<1x8x128xf32>
    %36 = vector.shape_cast %35 : vector<1x8x128xf32> to vector<8x128xf32>
    %37 = vector.shape_cast %33 : vector<8x128xf32> to vector<1x8x128xf32>
    tpu.vector_store %arg8[%34, %c0_15, %c0_16], %37 {strides = array<i32>} : memref<32x8x128xf32, #tpu.memory_space<vmem>>, vector<1x8x128xf32>,
    %c1_i32 = arith.constant 1 : i32
    %38 = arith.index_cast %c1_i32 : i32 to index
    %c0_17 = arith.constant 0 : index
    %c0_18 = arith.constant 0 : index
    %39 = vector.load %arg2[%38, %c0_17, %c0_18] : memref<32x8x128xf32, #tpu.memory_space<vmem>>, vector<1x8x128xf32>
    %40 = vector.shape_cast %39 : vector<1x8x128xf32> to vector<8x128xf32>
    %cst_19 = arith.constant dense<0.000000e+00> : vector<8x128xf32>
    %41 = tpu.matmul %33, %15, %cst_19 {dimension_numbers = #tpu.dot_dimension_numbers<[1], [0], [0], [1], [0, 0, 1, 1], [], []>} : vector<8x128xf32>, vector<128x128xf32>, vector<8x128xf32> -> vector<8x128xf32>
    %42 = arith.addf %40, %41 : vector<8x128xf32>
    %43 = math.tanh %42 : vector<8x128xf32>
    %44 = arith.mulf %11, %43 : vector<8x128xf32>
    %45 = arith.addf %44, %14 : vector<8x128xf32>
    %c32_i32_20 = arith.constant 32 : i32
    %46 = tpu.dynamic_rotate %45 by %c32_i32_20 dim 1 : vector<8x128xf32>, i32 -> vector<8x128xf32>
    %c96_i32_21 = arith.constant 96 : i32
    %47 = tpu.dynamic_rotate %45 by %c96_i32_21 dim 1 : vector<8x128xf32>, i32 -> vector<8x128xf32>
    %48 = arith.mulf %46, %47 : vector<8x128xf32>
    %49 = arith.mulf %45, %30 : vector<8x128xf32>
    %50 = arith.addf %49, %48 : vector<8x128xf32>
    %c64_i32_22 = arith.constant 64 : i32
    %51 = tpu.dynamic_rotate %45 by %c64_i32_22 dim 1 : vector<8x128xf32>, i32 -> vector<8x128xf32>
    %52 = math.tanh %50 : vector<8x128xf32>
    %53 = arith.mulf %51, %52 : vector<8x128xf32>
    %54 = arith.index_cast %c1_i32 : i32 to index
    %c0_23 = arith.constant 0 : index
    %c0_24 = arith.constant 0 : index
    %55 = vector.load %arg8[%54, %c0_23, %c0_24] : memref<32x8x128xf32, #tpu.memory_space<vmem>>, vector<1x8x128xf32>
    %56 = vector.shape_cast %55 : vector<1x8x128xf32> to vector<8x128xf32>
    %57 = vector.shape_cast %53 : vector<8x128xf32> to vector<1x8x128xf32>
    tpu.vector_store %arg8[%54, %c0_23, %c0_24], %57 {strides = array<i32>} : memref<32x8x128xf32, #tpu.memory_space<vmem>>, vector<1x8x128xf32>,
    %c2_i32 = arith.constant 2 : i32
    %58 = arith.index_cast %c2_i32 : i32 to index
    %c0_25 = arith.constant 0 : index
    %c0_26 = arith.constant 0 : index
    %59 = vector.load %arg2[%58, %c0_25, %c0_26] : memref<32x8x128xf32, #tpu.memory_space<vmem>>, vector<1x8x128xf32>
    %60 = vector.shape_cast %59 : vector<1x8x128xf32> to vector<8x128xf32>
    %cst_27 = arith.constant dense<0.000000e+00> : vector<8x128xf32>
    %61 = tpu.matmul %53, %15, %cst_27 {dimension_numbers = #tpu.dot_dimension_numbers<[1], [0], [0], [1], [0, 0, 1, 1], [], []>} : vector<8x128xf32>, vector<128x128xf32>, vector<8x128xf32> -> vector<8x128xf32>
    %62 = arith.addf %60, %61 : vector<8x128xf32>
    %63 = math.tanh %62 : vector<8x128xf32>
    %64 = arith.mulf %11, %63 : vector<8x128xf32>
    %65 = arith.addf %64, %14 : vector<8x128xf32>
    %c32_i32_28 = arith.constant 32 : i32
    %66 = tpu.dynamic_rotate %65 by %c32_i32_28 dim 1 : vector<8x128xf32>, i32 -> vector<8x128xf32>
    %c96_i32_29 = arith.constant 96 : i32
    %67 = tpu.dynamic_rotate %65 by %c96_i32_29 dim 1 : vector<8x128xf32>, i32 -> vector<8x128xf32>
    %68 = arith.mulf %66, %67 : vector<8x128xf32>
    %69 = arith.mulf %65, %50 : vector<8x128xf32>
    %70 = arith.addf %69, %68 : vector<8x128xf32>
    %c64_i32_30 = arith.constant 64 : i32
    %71 = tpu.dynamic_rotate %65 by %c64_i32_30 dim 1 : vector<8x128xf32>, i32 -> vector<8x128xf32>
    %72 = math.tanh %70 : vector<8x128xf32>
    %73 = arith.mulf %71, %72 : vector<8x128xf32>
    %74 = arith.index_cast %c2_i32 : i32 to index
    %c0_31 = arith.constant 0 : index
    %c0_32 = arith.constant 0 : index
    %75 = vector.load %arg8[%74, %c0_31, %c0_32] : memref<32x8x128xf32, #tpu.memory_space<vmem>>, vector<1x8x128xf32>
    %76 = vector.shape_cast %75 : vector<1x8x128xf32> to vector<8x128xf32>
    %77 = vector.shape_cast %73 : vector<8x128xf32> to vector<1x8x128xf32>
    tpu.vector_store %arg8[%74, %c0_31, %c0_32], %77 {strides = array<i32>} : memref<32x8x128xf32, #tpu.memory_space<vmem>>, vector<1x8x128xf32>,
    %c3_i32 = arith.constant 3 : i32
    %78 = arith.index_cast %c3_i32 : i32 to index
    %c0_33 = arith.constant 0 : index
    %c0_34 = arith.constant 0 : index
    %79 = vector.load %arg2[%78, %c0_33, %c0_34] : memref<32x8x128xf32, #tpu.memory_space<vmem>>, vector<1x8x128xf32>
    %80 = vector.shape_cast %79 : vector<1x8x128xf32> to vector<8x128xf32>
    %cst_35 = arith.constant dense<0.000000e+00> : vector<8x128xf32>
    %81 = tpu.matmul %73, %15, %cst_35 {dimension_numbers = #tpu.dot_dimension_numbers<[1], [0], [0], [1], [0, 0, 1, 1], [], []>} : vector<8x128xf32>, vector<128x128xf32>, vector<8x128xf32> -> vector<8x128xf32>
    %82 = arith.addf %80, %81 : vector<8x128xf32>
    %83 = math.tanh %82 : vector<8x128xf32>
    %84 = arith.mulf %11, %83 : vector<8x128xf32>
    %85 = arith.addf %84, %14 : vector<8x128xf32>
    %c32_i32_36 = arith.constant 32 : i32
    %86 = tpu.dynamic_rotate %85 by %c32_i32_36 dim 1 : vector<8x128xf32>, i32 -> vector<8x128xf32>
    %c96_i32_37 = arith.constant 96 : i32
    %87 = tpu.dynamic_rotate %85 by %c96_i32_37 dim 1 : vector<8x128xf32>, i32 -> vector<8x128xf32>
    %88 = arith.mulf %86, %87 : vector<8x128xf32>
    %89 = arith.mulf %85, %70 : vector<8x128xf32>
    %90 = arith.addf %89, %88 : vector<8x128xf32>
    %c64_i32_38 = arith.constant 64 : i32
    %91 = tpu.dynamic_rotate %85 by %c64_i32_38 dim 1 : vector<8x128xf32>, i32 -> vector<8x128xf32>
    %92 = math.tanh %90 : vector<8x128xf32>
    %93 = arith.mulf %91, %92 : vector<8x128xf32>
    %94 = arith.index_cast %c3_i32 : i32 to index
    %c0_39 = arith.constant 0 : index
    %c0_40 = arith.constant 0 : index
    %95 = vector.load %arg8[%94, %c0_39, %c0_40] : memref<32x8x128xf32, #tpu.memory_space<vmem>>, vector<1x8x128xf32>
    %96 = vector.shape_cast %95 : vector<1x8x128xf32> to vector<8x128xf32>
    %97 = vector.shape_cast %93 : vector<8x128xf32> to vector<1x8x128xf32>
    tpu.vector_store %arg8[%94, %c0_39, %c0_40], %97 {strides = array<i32>} : memref<32x8x128xf32, #tpu.memory_space<vmem>>, vector<1x8x128xf32>,
    %c4_i32 = arith.constant 4 : i32
    %98 = arith.index_cast %c4_i32 : i32 to index
    %c0_41 = arith.constant 0 : index
    %c0_42 = arith.constant 0 : index
    %99 = vector.load %arg2[%98, %c0_41, %c0_42] : memref<32x8x128xf32, #tpu.memory_space<vmem>>, vector<1x8x128xf32>
    %100 = vector.shape_cast %99 : vector<1x8x128xf32> to vector<8x128xf32>
    %cst_43 = arith.constant dense<0.000000e+00> : vector<8x128xf32>
    %101 = tpu.matmul %93, %15, %cst_43 {dimension_numbers = #tpu.dot_dimension_numbers<[1], [0], [0], [1], [0, 0, 1, 1], [], []>} : vector<8x128xf32>, vector<128x128xf32>, vector<8x128xf32> -> vector<8x128xf32>
    %102 = arith.addf %100, %101 : vector<8x128xf32>
    %103 = math.tanh %102 : vector<8x128xf32>
    %104 = arith.mulf %11, %103 : vector<8x128xf32>
    %105 = arith.addf %104, %14 : vector<8x128xf32>
    %c32_i32_44 = arith.constant 32 : i32
    %106 = tpu.dynamic_rotate %105 by %c32_i32_44 dim 1 : vector<8x128xf32>, i32 -> vector<8x128xf32>
    %c96_i32_45 = arith.constant 96 : i32
    %107 = tpu.dynamic_rotate %105 by %c96_i32_45 dim 1 : vector<8x128xf32>, i32 -> vector<8x128xf32>
    %108 = arith.mulf %106, %107 : vector<8x128xf32>
    %109 = arith.mulf %105, %90 : vector<8x128xf32>
    %110 = arith.addf %109, %108 : vector<8x128xf32>
    %c64_i32_46 = arith.constant 64 : i32
    %111 = tpu.dynamic_rotate %105 by %c64_i32_46 dim 1 : vector<8x128xf32>, i32 -> vector<8x128xf32>
    %112 = math.tanh %110 : vector<8x128xf32>
    %113 = arith.mulf %111, %112 : vector<8x128xf32>
    %114 = arith.index_cast %c4_i32 : i32 to index
    %c0_47 = arith.constant 0 : index
    %c0_48 = arith.constant 0 : index
    %115 = vector.load %arg8[%114, %c0_47, %c0_48] : memref<32x8x128xf32, #tpu.memory_space<vmem>>, vector<1x8x128xf32>
    %116 = vector.shape_cast %115 : vector<1x8x128xf32> to vector<8x128xf32>
    %117 = vector.shape_cast %113 : vector<8x128xf32> to vector<1x8x128xf32>
    tpu.vector_store %arg8[%114, %c0_47, %c0_48], %117 {strides = array<i32>} : memref<32x8x128xf32, #tpu.memory_space<vmem>>, vector<1x8x128xf32>,
    %c5_i32 = arith.constant 5 : i32
    %118 = arith.index_cast %c5_i32 : i32 to index
    %c0_49 = arith.constant 0 : index
    %c0_50 = arith.constant 0 : index
    %119 = vector.load %arg2[%118, %c0_49, %c0_50] : memref<32x8x128xf32, #tpu.memory_space<vmem>>, vector<1x8x128xf32>
    %120 = vector.shape_cast %119 : vector<1x8x128xf32> to vector<8x128xf32>
    %cst_51 = arith.constant dense<0.000000e+00> : vector<8x128xf32>
    %121 = tpu.matmul %113, %15, %cst_51 {dimension_numbers = #tpu.dot_dimension_numbers<[1], [0], [0], [1], [0, 0, 1, 1], [], []>} : vector<8x128xf32>, vector<128x128xf32>, vector<8x128xf32> -> vector<8x128xf32>
    %122 = arith.addf %120, %121 : vector<8x128xf32>
    %123 = math.tanh %122 : vector<8x128xf32>
    %124 = arith.mulf %11, %123 : vector<8x128xf32>
    %125 = arith.addf %124, %14 : vector<8x128xf32>
    %c32_i32_52 = arith.constant 32 : i32
    %126 = tpu.dynamic_rotate %125 by %c32_i32_52 dim 1 : vector<8x128xf32>, i32 -> vector<8x128xf32>
    %c96_i32_53 = arith.constant 96 : i32
    %127 = tpu.dynamic_rotate %125 by %c96_i32_53 dim 1 : vector<8x128xf32>, i32 -> vector<8x128xf32>
    %128 = arith.mulf %126, %127 : vector<8x128xf32>
    %129 = arith.mulf %125, %110 : vector<8x128xf32>
    %130 = arith.addf %129, %128 : vector<8x128xf32>
    %c64_i32_54 = arith.constant 64 : i32
    %131 = tpu.dynamic_rotate %125 by %c64_i32_54 dim 1 : vector<8x128xf32>, i32 -> vector<8x128xf32>
    %132 = math.tanh %130 : vector<8x128xf32>
    %133 = arith.mulf %131, %132 : vector<8x128xf32>
    %134 = arith.index_cast %c5_i32 : i32 to index
    %c0_55 = arith.constant 0 : index
    %c0_56 = arith.constant 0 : index
    %135 = vector.load %arg8[%134, %c0_55, %c0_56] : memref<32x8x128xf32, #tpu.memory_space<vmem>>, vector<1x8x128xf32>
    %136 = vector.shape_cast %135 : vector<1x8x128xf32> to vector<8x128xf32>
    %137 = vector.shape_cast %133 : vector<8x128xf32> to vector<1x8x128xf32>
    tpu.vector_store %arg8[%134, %c0_55, %c0_56], %137 {strides = array<i32>} : memref<32x8x128xf32, #tpu.memory_space<vmem>>, vector<1x8x128xf32>,
    %c6_i32 = arith.constant 6 : i32
    %138 = arith.index_cast %c6_i32 : i32 to index
    %c0_57 = arith.constant 0 : index
    %c0_58 = arith.constant 0 : index
    %139 = vector.load %arg2[%138, %c0_57, %c0_58] : memref<32x8x128xf32, #tpu.memory_space<vmem>>, vector<1x8x128xf32>
    %140 = vector.shape_cast %139 : vector<1x8x128xf32> to vector<8x128xf32>
    %cst_59 = arith.constant dense<0.000000e+00> : vector<8x128xf32>
    %141 = tpu.matmul %133, %15, %cst_59 {dimension_numbers = #tpu.dot_dimension_numbers<[1], [0], [0], [1], [0, 0, 1, 1], [], []>} : vector<8x128xf32>, vector<128x128xf32>, vector<8x128xf32> -> vector<8x128xf32>
    %142 = arith.addf %140, %141 : vector<8x128xf32>
    %143 = math.tanh %142 : vector<8x128xf32>
    %144 = arith.mulf %11, %143 : vector<8x128xf32>
    %145 = arith.addf %144, %14 : vector<8x128xf32>
    %c32_i32_60 = arith.constant 32 : i32
    %146 = tpu.dynamic_rotate %145 by %c32_i32_60 dim 1 : vector<8x128xf32>, i32 -> vector<8x128xf32>
    %c96_i32_61 = arith.constant 96 : i32
    %147 = tpu.dynamic_rotate %145 by %c96_i32_61 dim 1 : vector<8x128xf32>, i32 -> vector<8x128xf32>
    %148 = arith.mulf %146, %147 : vector<8x128xf32>
    %149 = arith.mulf %145, %130 : vector<8x128xf32>
    %150 = arith.addf %149, %148 : vector<8x128xf32>
    %c64_i32_62 = arith.constant 64 : i32
    %151 = tpu.dynamic_rotate %145 by %c64_i32_62 dim 1 : vector<8x128xf32>, i32 -> vector<8x128xf32>
    %152 = math.tanh %150 : vector<8x128xf32>
    %153 = arith.mulf %151, %152 : vector<8x128xf32>
    %154 = arith.index_cast %c6_i32 : i32 to index
    %c0_63 = arith.constant 0 : index
    %c0_64 = arith.constant 0 : index
    %155 = vector.load %arg8[%154, %c0_63, %c0_64] : memref<32x8x128xf32, #tpu.memory_space<vmem>>, vector<1x8x128xf32>
    %156 = vector.shape_cast %155 : vector<1x8x128xf32> to vector<8x128xf32>
    %157 = vector.shape_cast %153 : vector<8x128xf32> to vector<1x8x128xf32>
    tpu.vector_store %arg8[%154, %c0_63, %c0_64], %157 {strides = array<i32>} : memref<32x8x128xf32, #tpu.memory_space<vmem>>, vector<1x8x128xf32>,
    %c7_i32 = arith.constant 7 : i32
    %158 = arith.index_cast %c7_i32 : i32 to index
    %c0_65 = arith.constant 0 : index
    %c0_66 = arith.constant 0 : index
    %159 = vector.load %arg2[%158, %c0_65, %c0_66] : memref<32x8x128xf32, #tpu.memory_space<vmem>>, vector<1x8x128xf32>
    %160 = vector.shape_cast %159 : vector<1x8x128xf32> to vector<8x128xf32>
    %cst_67 = arith.constant dense<0.000000e+00> : vector<8x128xf32>
    %161 = tpu.matmul %153, %15, %cst_67 {dimension_numbers = #tpu.dot_dimension_numbers<[1], [0], [0], [1], [0, 0, 1, 1], [], []>} : vector<8x128xf32>, vector<128x128xf32>, vector<8x128xf32> -> vector<8x128xf32>
    %162 = arith.addf %160, %161 : vector<8x128xf32>
    %163 = math.tanh %162 : vector<8x128xf32>
    %164 = arith.mulf %11, %163 : vector<8x128xf32>
    %165 = arith.addf %164, %14 : vector<8x128xf32>
    %c32_i32_68 = arith.constant 32 : i32
    %166 = tpu.dynamic_rotate %165 by %c32_i32_68 dim 1 : vector<8x128xf32>, i32 -> vector<8x128xf32>
    %c96_i32_69 = arith.constant 96 : i32
    %167 = tpu.dynamic_rotate %165 by %c96_i32_69 dim 1 : vector<8x128xf32>, i32 -> vector<8x128xf32>
    %168 = arith.mulf %166, %167 : vector<8x128xf32>
    %169 = arith.mulf %165, %150 : vector<8x128xf32>
    %170 = arith.addf %169, %168 : vector<8x128xf32>
    %c64_i32_70 = arith.constant 64 : i32
    %171 = tpu.dynamic_rotate %165 by %c64_i32_70 dim 1 : vector<8x128xf32>, i32 -> vector<8x128xf32>
    %172 = math.tanh %170 : vector<8x128xf32>
    %173 = arith.mulf %171, %172 : vector<8x128xf32>
    %174 = arith.index_cast %c7_i32 : i32 to index
    %c0_71 = arith.constant 0 : index
    %c0_72 = arith.constant 0 : index
    %175 = vector.load %arg8[%174, %c0_71, %c0_72] : memref<32x8x128xf32, #tpu.memory_space<vmem>>, vector<1x8x128xf32>
    %176 = vector.shape_cast %175 : vector<1x8x128xf32> to vector<8x128xf32>
    %177 = vector.shape_cast %173 : vector<8x128xf32> to vector<1x8x128xf32>
    tpu.vector_store %arg8[%174, %c0_71, %c0_72], %177 {strides = array<i32>} : memref<32x8x128xf32, #tpu.memory_space<vmem>>, vector<1x8x128xf32>,
    %c8_i32 = arith.constant 8 : i32
    %178 = arith.index_cast %c8_i32 : i32 to index
    %c0_73 = arith.constant 0 : index
    %c0_74 = arith.constant 0 : index
    %179 = vector.load %arg2[%178, %c0_73, %c0_74] : memref<32x8x128xf32, #tpu.memory_space<vmem>>, vector<1x8x128xf32>
    %180 = vector.shape_cast %179 : vector<1x8x128xf32> to vector<8x128xf32>
    %cst_75 = arith.constant dense<0.000000e+00> : vector<8x128xf32>
    %181 = tpu.matmul %173, %15, %cst_75 {dimension_numbers = #tpu.dot_dimension_numbers<[1], [0], [0], [1], [0, 0, 1, 1], [], []>} : vector<8x128xf32>, vector<128x128xf32>, vector<8x128xf32> -> vector<8x128xf32>
    %182 = arith.addf %180, %181 : vector<8x128xf32>
    %183 = math.tanh %182 : vector<8x128xf32>
    %184 = arith.mulf %11, %183 : vector<8x128xf32>
    %185 = arith.addf %184, %14 : vector<8x128xf32>
    %c32_i32_76 = arith.constant 32 : i32
    %186 = tpu.dynamic_rotate %185 by %c32_i32_76 dim 1 : vector<8x128xf32>, i32 -> vector<8x128xf32>
    %c96_i32_77 = arith.constant 96 : i32
    %187 = tpu.dynamic_rotate %185 by %c96_i32_77 dim 1 : vector<8x128xf32>, i32 -> vector<8x128xf32>
    %188 = arith.mulf %186, %187 : vector<8x128xf32>
    %189 = arith.mulf %185, %170 : vector<8x128xf32>
    %190 = arith.addf %189, %188 : vector<8x128xf32>
    %c64_i32_78 = arith.constant 64 : i32
    %191 = tpu.dynamic_rotate %185 by %c64_i32_78 dim 1 : vector<8x128xf32>, i32 -> vector<8x128xf32>
    %192 = math.tanh %190 : vector<8x128xf32>
    %193 = arith.mulf %191, %192 : vector<8x128xf32>
    %194 = arith.index_cast %c8_i32 : i32 to index
    %c0_79 = arith.constant 0 : index
    %c0_80 = arith.constant 0 : index
    %195 = vector.load %arg8[%194, %c0_79, %c0_80] : memref<32x8x128xf32, #tpu.memory_space<vmem>>, vector<1x8x128xf32>
    %196 = vector.shape_cast %195 : vector<1x8x128xf32> to vector<8x128xf32>
    %197 = vector.shape_cast %193 : vector<8x128xf32> to vector<1x8x128xf32>
    tpu.vector_store %arg8[%194, %c0_79, %c0_80], %197 {strides = array<i32>} : memref<32x8x128xf32, #tpu.memory_space<vmem>>, vector<1x8x128xf32>,
    %c9_i32 = arith.constant 9 : i32
    %198 = arith.index_cast %c9_i32 : i32 to index
    %c0_81 = arith.constant 0 : index
    %c0_82 = arith.constant 0 : index
    %199 = vector.load %arg2[%198, %c0_81, %c0_82] : memref<32x8x128xf32, #tpu.memory_space<vmem>>, vector<1x8x128xf32>
    %200 = vector.shape_cast %199 : vector<1x8x128xf32> to vector<8x128xf32>
    %cst_83 = arith.constant dense<0.000000e+00> : vector<8x128xf32>
    %201 = tpu.matmul %193, %15, %cst_83 {dimension_numbers = #tpu.dot_dimension_numbers<[1], [0], [0], [1], [0, 0, 1, 1], [], []>} : vector<8x128xf32>, vector<128x128xf32>, vector<8x128xf32> -> vector<8x128xf32>
    %202 = arith.addf %200, %201 : vector<8x128xf32>
    %203 = math.tanh %202 : vector<8x128xf32>
    %204 = arith.mulf %11, %203 : vector<8x128xf32>
    %205 = arith.addf %204, %14 : vector<8x128xf32>
    %c32_i32_84 = arith.constant 32 : i32
    %206 = tpu.dynamic_rotate %205 by %c32_i32_84 dim 1 : vector<8x128xf32>, i32 -> vector<8x128xf32>
    %c96_i32_85 = arith.constant 96 : i32
    %207 = tpu.dynamic_rotate %205 by %c96_i32_85 dim 1 : vector<8x128xf32>, i32 -> vector<8x128xf32>
    %208 = arith.mulf %206, %207 : vector<8x128xf32>
    %209 = arith.mulf %205, %190 : vector<8x128xf32>
    %210 = arith.addf %209, %208 : vector<8x128xf32>
    %c64_i32_86 = arith.constant 64 : i32
    %211 = tpu.dynamic_rotate %205 by %c64_i32_86 dim 1 : vector<8x128xf32>, i32 -> vector<8x128xf32>
    %212 = math.tanh %210 : vector<8x128xf32>
    %213 = arith.mulf %211, %212 : vector<8x128xf32>
    %214 = arith.index_cast %c9_i32 : i32 to index
    %c0_87 = arith.constant 0 : index
    %c0_88 = arith.constant 0 : index
    %215 = vector.load %arg8[%214, %c0_87, %c0_88] : memref<32x8x128xf32, #tpu.memory_space<vmem>>, vector<1x8x128xf32>
    %216 = vector.shape_cast %215 : vector<1x8x128xf32> to vector<8x128xf32>
    %217 = vector.shape_cast %213 : vector<8x128xf32> to vector<1x8x128xf32>
    tpu.vector_store %arg8[%214, %c0_87, %c0_88], %217 {strides = array<i32>} : memref<32x8x128xf32, #tpu.memory_space<vmem>>, vector<1x8x128xf32>,
    %c10_i32 = arith.constant 10 : i32
    %218 = arith.index_cast %c10_i32 : i32 to index
    %c0_89 = arith.constant 0 : index
    %c0_90 = arith.constant 0 : index
    %219 = vector.load %arg2[%218, %c0_89, %c0_90] : memref<32x8x128xf32, #tpu.memory_space<vmem>>, vector<1x8x128xf32>
    %220 = vector.shape_cast %219 : vector<1x8x128xf32> to vector<8x128xf32>
    %cst_91 = arith.constant dense<0.000000e+00> : vector<8x128xf32>
    %221 = tpu.matmul %213, %15, %cst_91 {dimension_numbers = #tpu.dot_dimension_numbers<[1], [0], [0], [1], [0, 0, 1, 1], [], []>} : vector<8x128xf32>, vector<128x128xf32>, vector<8x128xf32> -> vector<8x128xf32>
    %222 = arith.addf %220, %221 : vector<8x128xf32>
    %223 = math.tanh %222 : vector<8x128xf32>
    %224 = arith.mulf %11, %223 : vector<8x128xf32>
    %225 = arith.addf %224, %14 : vector<8x128xf32>
    %c32_i32_92 = arith.constant 32 : i32
    %226 = tpu.dynamic_rotate %225 by %c32_i32_92 dim 1 : vector<8x128xf32>, i32 -> vector<8x128xf32>
    %c96_i32_93 = arith.constant 96 : i32
    %227 = tpu.dynamic_rotate %225 by %c96_i32_93 dim 1 : vector<8x128xf32>, i32 -> vector<8x128xf32>
    %228 = arith.mulf %226, %227 : vector<8x128xf32>
    %229 = arith.mulf %225, %210 : vector<8x128xf32>
    %230 = arith.addf %229, %228 : vector<8x128xf32>
    %c64_i32_94 = arith.constant 64 : i32
    %231 = tpu.dynamic_rotate %225 by %c64_i32_94 dim 1 : vector<8x128xf32>, i32 -> vector<8x128xf32>
    %232 = math.tanh %230 : vector<8x128xf32>
    %233 = arith.mulf %231, %232 : vector<8x128xf32>
    %234 = arith.index_cast %c10_i32 : i32 to index
    %c0_95 = arith.constant 0 : index
    %c0_96 = arith.constant 0 : index
    %235 = vector.load %arg8[%234, %c0_95, %c0_96] : memref<32x8x128xf32, #tpu.memory_space<vmem>>, vector<1x8x128xf32>
    %236 = vector.shape_cast %235 : vector<1x8x128xf32> to vector<8x128xf32>
    %237 = vector.shape_cast %233 : vector<8x128xf32> to vector<1x8x128xf32>
    tpu.vector_store %arg8[%234, %c0_95, %c0_96], %237 {strides = array<i32>} : memref<32x8x128xf32, #tpu.memory_space<vmem>>, vector<1x8x128xf32>,
    %c11_i32 = arith.constant 11 : i32
    %238 = arith.index_cast %c11_i32 : i32 to index
    %c0_97 = arith.constant 0 : index
    %c0_98 = arith.constant 0 : index
    %239 = vector.load %arg2[%238, %c0_97, %c0_98] : memref<32x8x128xf32, #tpu.memory_space<vmem>>, vector<1x8x128xf32>
    %240 = vector.shape_cast %239 : vector<1x8x128xf32> to vector<8x128xf32>
    %cst_99 = arith.constant dense<0.000000e+00> : vector<8x128xf32>
    %241 = tpu.matmul %233, %15, %cst_99 {dimension_numbers = #tpu.dot_dimension_numbers<[1], [0], [0], [1], [0, 0, 1, 1], [], []>} : vector<8x128xf32>, vector<128x128xf32>, vector<8x128xf32> -> vector<8x128xf32>
    %242 = arith.addf %240, %241 : vector<8x128xf32>
    %243 = math.tanh %242 : vector<8x128xf32>
    %244 = arith.mulf %11, %243 : vector<8x128xf32>
    %245 = arith.addf %244, %14 : vector<8x128xf32>
    %c32_i32_100 = arith.constant 32 : i32
    %246 = tpu.dynamic_rotate %245 by %c32_i32_100 dim 1 : vector<8x128xf32>, i32 -> vector<8x128xf32>
    %c96_i32_101 = arith.constant 96 : i32
    %247 = tpu.dynamic_rotate %245 by %c96_i32_101 dim 1 : vector<8x128xf32>, i32 -> vector<8x128xf32>
    %248 = arith.mulf %246, %247 : vector<8x128xf32>
    %249 = arith.mulf %245, %230 : vector<8x128xf32>
    %250 = arith.addf %249, %248 : vector<8x128xf32>
    %c64_i32_102 = arith.constant 64 : i32
    %251 = tpu.dynamic_rotate %245 by %c64_i32_102 dim 1 : vector<8x128xf32>, i32 -> vector<8x128xf32>
    %252 = math.tanh %250 : vector<8x128xf32>
    %253 = arith.mulf %251, %252 : vector<8x128xf32>
    %254 = arith.index_cast %c11_i32 : i32 to index
    %c0_103 = arith.constant 0 : index
    %c0_104 = arith.constant 0 : index
    %255 = vector.load %arg8[%254, %c0_103, %c0_104] : memref<32x8x128xf32, #tpu.memory_space<vmem>>, vector<1x8x128xf32>
    %256 = vector.shape_cast %255 : vector<1x8x128xf32> to vector<8x128xf32>
    %257 = vector.shape_cast %253 : vector<8x128xf32> to vector<1x8x128xf32>
    tpu.vector_store %arg8[%254, %c0_103, %c0_104], %257 {strides = array<i32>} : memref<32x8x128xf32, #tpu.memory_space<vmem>>, vector<1x8x128xf32>,
    %c12_i32 = arith.constant 12 : i32
    %258 = arith.index_cast %c12_i32 : i32 to index
    %c0_105 = arith.constant 0 : index
    %c0_106 = arith.constant 0 : index
    %259 = vector.load %arg2[%258, %c0_105, %c0_106] : memref<32x8x128xf32, #tpu.memory_space<vmem>>, vector<1x8x128xf32>
    %260 = vector.shape_cast %259 : vector<1x8x128xf32> to vector<8x128xf32>
    %cst_107 = arith.constant dense<0.000000e+00> : vector<8x128xf32>
    %261 = tpu.matmul %253, %15, %cst_107 {dimension_numbers = #tpu.dot_dimension_numbers<[1], [0], [0], [1], [0, 0, 1, 1], [], []>} : vector<8x128xf32>, vector<128x128xf32>, vector<8x128xf32> -> vector<8x128xf32>
    %262 = arith.addf %260, %261 : vector<8x128xf32>
    %263 = math.tanh %262 : vector<8x128xf32>
    %264 = arith.mulf %11, %263 : vector<8x128xf32>
    %265 = arith.addf %264, %14 : vector<8x128xf32>
    %c32_i32_108 = arith.constant 32 : i32
    %266 = tpu.dynamic_rotate %265 by %c32_i32_108 dim 1 : vector<8x128xf32>, i32 -> vector<8x128xf32>
    %c96_i32_109 = arith.constant 96 : i32
    %267 = tpu.dynamic_rotate %265 by %c96_i32_109 dim 1 : vector<8x128xf32>, i32 -> vector<8x128xf32>
    %268 = arith.mulf %266, %267 : vector<8x128xf32>
    %269 = arith.mulf %265, %250 : vector<8x128xf32>
    %270 = arith.addf %269, %268 : vector<8x128xf32>
    %c64_i32_110 = arith.constant 64 : i32
    %271 = tpu.dynamic_rotate %265 by %c64_i32_110 dim 1 : vector<8x128xf32>, i32 -> vector<8x128xf32>
    %272 = math.tanh %270 : vector<8x128xf32>
    %273 = arith.mulf %271, %272 : vector<8x128xf32>
    %274 = arith.index_cast %c12_i32 : i32 to index
    %c0_111 = arith.constant 0 : index
    %c0_112 = arith.constant 0 : index
    %275 = vector.load %arg8[%274, %c0_111, %c0_112] : memref<32x8x128xf32, #tpu.memory_space<vmem>>, vector<1x8x128xf32>
    %276 = vector.shape_cast %275 : vector<1x8x128xf32> to vector<8x128xf32>
    %277 = vector.shape_cast %273 : vector<8x128xf32> to vector<1x8x128xf32>
    tpu.vector_store %arg8[%274, %c0_111, %c0_112], %277 {strides = array<i32>} : memref<32x8x128xf32, #tpu.memory_space<vmem>>, vector<1x8x128xf32>,
    %c13_i32 = arith.constant 13 : i32
    %278 = arith.index_cast %c13_i32 : i32 to index
    %c0_113 = arith.constant 0 : index
    %c0_114 = arith.constant 0 : index
    %279 = vector.load %arg2[%278, %c0_113, %c0_114] : memref<32x8x128xf32, #tpu.memory_space<vmem>>, vector<1x8x128xf32>
    %280 = vector.shape_cast %279 : vector<1x8x128xf32> to vector<8x128xf32>
    %cst_115 = arith.constant dense<0.000000e+00> : vector<8x128xf32>
    %281 = tpu.matmul %273, %15, %cst_115 {dimension_numbers = #tpu.dot_dimension_numbers<[1], [0], [0], [1], [0, 0, 1, 1], [], []>} : vector<8x128xf32>, vector<128x128xf32>, vector<8x128xf32> -> vector<8x128xf32>
    %282 = arith.addf %280, %281 : vector<8x128xf32>
    %283 = math.tanh %282 : vector<8x128xf32>
    %284 = arith.mulf %11, %283 : vector<8x128xf32>
    %285 = arith.addf %284, %14 : vector<8x128xf32>
    %c32_i32_116 = arith.constant 32 : i32
    %286 = tpu.dynamic_rotate %285 by %c32_i32_116 dim 1 : vector<8x128xf32>, i32 -> vector<8x128xf32>
    %c96_i32_117 = arith.constant 96 : i32
    %287 = tpu.dynamic_rotate %285 by %c96_i32_117 dim 1 : vector<8x128xf32>, i32 -> vector<8x128xf32>
    %288 = arith.mulf %286, %287 : vector<8x128xf32>
    %289 = arith.mulf %285, %270 : vector<8x128xf32>
    %290 = arith.addf %289, %288 : vector<8x128xf32>
    %c64_i32_118 = arith.constant 64 : i32
    %291 = tpu.dynamic_rotate %285 by %c64_i32_118 dim 1 : vector<8x128xf32>, i32 -> vector<8x128xf32>
    %292 = math.tanh %290 : vector<8x128xf32>
    %293 = arith.mulf %291, %292 : vector<8x128xf32>
    %294 = arith.index_cast %c13_i32 : i32 to index
    %c0_119 = arith.constant 0 : index
    %c0_120 = arith.constant 0 : index
    %295 = vector.load %arg8[%294, %c0_119, %c0_120] : memref<32x8x128xf32, #tpu.memory_space<vmem>>, vector<1x8x128xf32>
    %296 = vector.shape_cast %295 : vector<1x8x128xf32> to vector<8x128xf32>
    %297 = vector.shape_cast %293 : vector<8x128xf32> to vector<1x8x128xf32>
    tpu.vector_store %arg8[%294, %c0_119, %c0_120], %297 {strides = array<i32>} : memref<32x8x128xf32, #tpu.memory_space<vmem>>, vector<1x8x128xf32>,
    %c14_i32 = arith.constant 14 : i32
    %298 = arith.index_cast %c14_i32 : i32 to index
    %c0_121 = arith.constant 0 : index
    %c0_122 = arith.constant 0 : index
    %299 = vector.load %arg2[%298, %c0_121, %c0_122] : memref<32x8x128xf32, #tpu.memory_space<vmem>>, vector<1x8x128xf32>
    %300 = vector.shape_cast %299 : vector<1x8x128xf32> to vector<8x128xf32>
    %cst_123 = arith.constant dense<0.000000e+00> : vector<8x128xf32>
    %301 = tpu.matmul %293, %15, %cst_123 {dimension_numbers = #tpu.dot_dimension_numbers<[1], [0], [0], [1], [0, 0, 1, 1], [], []>} : vector<8x128xf32>, vector<128x128xf32>, vector<8x128xf32> -> vector<8x128xf32>
    %302 = arith.addf %300, %301 : vector<8x128xf32>
    %303 = math.tanh %302 : vector<8x128xf32>
    %304 = arith.mulf %11, %303 : vector<8x128xf32>
    %305 = arith.addf %304, %14 : vector<8x128xf32>
    %c32_i32_124 = arith.constant 32 : i32
    %306 = tpu.dynamic_rotate %305 by %c32_i32_124 dim 1 : vector<8x128xf32>, i32 -> vector<8x128xf32>
    %c96_i32_125 = arith.constant 96 : i32
    %307 = tpu.dynamic_rotate %305 by %c96_i32_125 dim 1 : vector<8x128xf32>, i32 -> vector<8x128xf32>
    %308 = arith.mulf %306, %307 : vector<8x128xf32>
    %309 = arith.mulf %305, %290 : vector<8x128xf32>
    %310 = arith.addf %309, %308 : vector<8x128xf32>
    %c64_i32_126 = arith.constant 64 : i32
    %311 = tpu.dynamic_rotate %305 by %c64_i32_126 dim 1 : vector<8x128xf32>, i32 -> vector<8x128xf32>
    %312 = math.tanh %310 : vector<8x128xf32>
    %313 = arith.mulf %311, %312 : vector<8x128xf32>
    %314 = arith.index_cast %c14_i32 : i32 to index
    %c0_127 = arith.constant 0 : index
    %c0_128 = arith.constant 0 : index
    %315 = vector.load %arg8[%314, %c0_127, %c0_128] : memref<32x8x128xf32, #tpu.memory_space<vmem>>, vector<1x8x128xf32>
    %316 = vector.shape_cast %315 : vector<1x8x128xf32> to vector<8x128xf32>
    %317 = vector.shape_cast %313 : vector<8x128xf32> to vector<1x8x128xf32>
    tpu.vector_store %arg8[%314, %c0_127, %c0_128], %317 {strides = array<i32>} : memref<32x8x128xf32, #tpu.memory_space<vmem>>, vector<1x8x128xf32>,
    %c15_i32 = arith.constant 15 : i32
    %318 = arith.index_cast %c15_i32 : i32 to index
    %c0_129 = arith.constant 0 : index
    %c0_130 = arith.constant 0 : index
    %319 = vector.load %arg2[%318, %c0_129, %c0_130] : memref<32x8x128xf32, #tpu.memory_space<vmem>>, vector<1x8x128xf32>
    %320 = vector.shape_cast %319 : vector<1x8x128xf32> to vector<8x128xf32>
    %cst_131 = arith.constant dense<0.000000e+00> : vector<8x128xf32>
    %321 = tpu.matmul %313, %15, %cst_131 {dimension_numbers = #tpu.dot_dimension_numbers<[1], [0], [0], [1], [0, 0, 1, 1], [], []>} : vector<8x128xf32>, vector<128x128xf32>, vector<8x128xf32> -> vector<8x128xf32>
    %322 = arith.addf %320, %321 : vector<8x128xf32>
    %323 = math.tanh %322 : vector<8x128xf32>
    %324 = arith.mulf %11, %323 : vector<8x128xf32>
    %325 = arith.addf %324, %14 : vector<8x128xf32>
    %c32_i32_132 = arith.constant 32 : i32
    %326 = tpu.dynamic_rotate %325 by %c32_i32_132 dim 1 : vector<8x128xf32>, i32 -> vector<8x128xf32>
    %c96_i32_133 = arith.constant 96 : i32
    %327 = tpu.dynamic_rotate %325 by %c96_i32_133 dim 1 : vector<8x128xf32>, i32 -> vector<8x128xf32>
    %328 = arith.mulf %326, %327 : vector<8x128xf32>
    %329 = arith.mulf %325, %310 : vector<8x128xf32>
    %330 = arith.addf %329, %328 : vector<8x128xf32>
    %c64_i32_134 = arith.constant 64 : i32
    %331 = tpu.dynamic_rotate %325 by %c64_i32_134 dim 1 : vector<8x128xf32>, i32 -> vector<8x128xf32>
    %332 = math.tanh %330 : vector<8x128xf32>
    %333 = arith.mulf %331, %332 : vector<8x128xf32>
    %334 = arith.index_cast %c15_i32 : i32 to index
    %c0_135 = arith.constant 0 : index
    %c0_136 = arith.constant 0 : index
    %335 = vector.load %arg8[%334, %c0_135, %c0_136] : memref<32x8x128xf32, #tpu.memory_space<vmem>>, vector<1x8x128xf32>
    %336 = vector.shape_cast %335 : vector<1x8x128xf32> to vector<8x128xf32>
    %337 = vector.shape_cast %333 : vector<8x128xf32> to vector<1x8x128xf32>
    tpu.vector_store %arg8[%334, %c0_135, %c0_136], %337 {strides = array<i32>} : memref<32x8x128xf32, #tpu.memory_space<vmem>>, vector<1x8x128xf32>,
    %c16_i32 = arith.constant 16 : i32
    %338 = arith.index_cast %c16_i32 : i32 to index
    %c0_137 = arith.constant 0 : index
    %c0_138 = arith.constant 0 : index
    %339 = vector.load %arg2[%338, %c0_137, %c0_138] : memref<32x8x128xf32, #tpu.memory_space<vmem>>, vector<1x8x128xf32>
    %340 = vector.shape_cast %339 : vector<1x8x128xf32> to vector<8x128xf32>
    %cst_139 = arith.constant dense<0.000000e+00> : vector<8x128xf32>
    %341 = tpu.matmul %333, %15, %cst_139 {dimension_numbers = #tpu.dot_dimension_numbers<[1], [0], [0], [1], [0, 0, 1, 1], [], []>} : vector<8x128xf32>, vector<128x128xf32>, vector<8x128xf32> -> vector<8x128xf32>
    %342 = arith.addf %340, %341 : vector<8x128xf32>
    %343 = math.tanh %342 : vector<8x128xf32>
    %344 = arith.mulf %11, %343 : vector<8x128xf32>
    %345 = arith.addf %344, %14 : vector<8x128xf32>
    %c32_i32_140 = arith.constant 32 : i32
    %346 = tpu.dynamic_rotate %345 by %c32_i32_140 dim 1 : vector<8x128xf32>, i32 -> vector<8x128xf32>
    %c96_i32_141 = arith.constant 96 : i32
    %347 = tpu.dynamic_rotate %345 by %c96_i32_141 dim 1 : vector<8x128xf32>, i32 -> vector<8x128xf32>
    %348 = arith.mulf %346, %347 : vector<8x128xf32>
    %349 = arith.mulf %345, %330 : vector<8x128xf32>
    %350 = arith.addf %349, %348 : vector<8x128xf32>
    %c64_i32_142 = arith.constant 64 : i32
    %351 = tpu.dynamic_rotate %345 by %c64_i32_142 dim 1 : vector<8x128xf32>, i32 -> vector<8x128xf32>
    %352 = math.tanh %350 : vector<8x128xf32>
    %353 = arith.mulf %351, %352 : vector<8x128xf32>
    %354 = arith.index_cast %c16_i32 : i32 to index
    %c0_143 = arith.constant 0 : index
    %c0_144 = arith.constant 0 : index
    %355 = vector.load %arg8[%354, %c0_143, %c0_144] : memref<32x8x128xf32, #tpu.memory_space<vmem>>, vector<1x8x128xf32>
    %356 = vector.shape_cast %355 : vector<1x8x128xf32> to vector<8x128xf32>
    %357 = vector.shape_cast %353 : vector<8x128xf32> to vector<1x8x128xf32>
    tpu.vector_store %arg8[%354, %c0_143, %c0_144], %357 {strides = array<i32>} : memref<32x8x128xf32, #tpu.memory_space<vmem>>, vector<1x8x128xf32>,
    %c17_i32 = arith.constant 17 : i32
    %358 = arith.index_cast %c17_i32 : i32 to index
    %c0_145 = arith.constant 0 : index
    %c0_146 = arith.constant 0 : index
    %359 = vector.load %arg2[%358, %c0_145, %c0_146] : memref<32x8x128xf32, #tpu.memory_space<vmem>>, vector<1x8x128xf32>
    %360 = vector.shape_cast %359 : vector<1x8x128xf32> to vector<8x128xf32>
    %cst_147 = arith.constant dense<0.000000e+00> : vector<8x128xf32>
    %361 = tpu.matmul %353, %15, %cst_147 {dimension_numbers = #tpu.dot_dimension_numbers<[1], [0], [0], [1], [0, 0, 1, 1], [], []>} : vector<8x128xf32>, vector<128x128xf32>, vector<8x128xf32> -> vector<8x128xf32>
    %362 = arith.addf %360, %361 : vector<8x128xf32>
    %363 = math.tanh %362 : vector<8x128xf32>
    %364 = arith.mulf %11, %363 : vector<8x128xf32>
    %365 = arith.addf %364, %14 : vector<8x128xf32>
    %c32_i32_148 = arith.constant 32 : i32
    %366 = tpu.dynamic_rotate %365 by %c32_i32_148 dim 1 : vector<8x128xf32>, i32 -> vector<8x128xf32>
    %c96_i32_149 = arith.constant 96 : i32
    %367 = tpu.dynamic_rotate %365 by %c96_i32_149 dim 1 : vector<8x128xf32>, i32 -> vector<8x128xf32>
    %368 = arith.mulf %366, %367 : vector<8x128xf32>
    %369 = arith.mulf %365, %350 : vector<8x128xf32>
    %370 = arith.addf %369, %368 : vector<8x128xf32>
    %c64_i32_150 = arith.constant 64 : i32
    %371 = tpu.dynamic_rotate %365 by %c64_i32_150 dim 1 : vector<8x128xf32>, i32 -> vector<8x128xf32>
    %372 = math.tanh %370 : vector<8x128xf32>
    %373 = arith.mulf %371, %372 : vector<8x128xf32>
    %374 = arith.index_cast %c17_i32 : i32 to index
    %c0_151 = arith.constant 0 : index
    %c0_152 = arith.constant 0 : index
    %375 = vector.load %arg8[%374, %c0_151, %c0_152] : memref<32x8x128xf32, #tpu.memory_space<vmem>>, vector<1x8x128xf32>
    %376 = vector.shape_cast %375 : vector<1x8x128xf32> to vector<8x128xf32>
    %377 = vector.shape_cast %373 : vector<8x128xf32> to vector<1x8x128xf32>
    tpu.vector_store %arg8[%374, %c0_151, %c0_152], %377 {strides = array<i32>} : memref<32x8x128xf32, #tpu.memory_space<vmem>>, vector<1x8x128xf32>,
    %c18_i32 = arith.constant 18 : i32
    %378 = arith.index_cast %c18_i32 : i32 to index
    %c0_153 = arith.constant 0 : index
    %c0_154 = arith.constant 0 : index
    %379 = vector.load %arg2[%378, %c0_153, %c0_154] : memref<32x8x128xf32, #tpu.memory_space<vmem>>, vector<1x8x128xf32>
    %380 = vector.shape_cast %379 : vector<1x8x128xf32> to vector<8x128xf32>
    %cst_155 = arith.constant dense<0.000000e+00> : vector<8x128xf32>
    %381 = tpu.matmul %373, %15, %cst_155 {dimension_numbers = #tpu.dot_dimension_numbers<[1], [0], [0], [1], [0, 0, 1, 1], [], []>} : vector<8x128xf32>, vector<128x128xf32>, vector<8x128xf32> -> vector<8x128xf32>
    %382 = arith.addf %380, %381 : vector<8x128xf32>
    %383 = math.tanh %382 : vector<8x128xf32>
    %384 = arith.mulf %11, %383 : vector<8x128xf32>
    %385 = arith.addf %384, %14 : vector<8x128xf32>
    %c32_i32_156 = arith.constant 32 : i32
    %386 = tpu.dynamic_rotate %385 by %c32_i32_156 dim 1 : vector<8x128xf32>, i32 -> vector<8x128xf32>
    %c96_i32_157 = arith.constant 96 : i32
    %387 = tpu.dynamic_rotate %385 by %c96_i32_157 dim 1 : vector<8x128xf32>, i32 -> vector<8x128xf32>
    %388 = arith.mulf %386, %387 : vector<8x128xf32>
    %389 = arith.mulf %385, %370 : vector<8x128xf32>
    %390 = arith.addf %389, %388 : vector<8x128xf32>
    %c64_i32_158 = arith.constant 64 : i32
    %391 = tpu.dynamic_rotate %385 by %c64_i32_158 dim 1 : vector<8x128xf32>, i32 -> vector<8x128xf32>
    %392 = math.tanh %390 : vector<8x128xf32>
    %393 = arith.mulf %391, %392 : vector<8x128xf32>
    %394 = arith.index_cast %c18_i32 : i32 to index
    %c0_159 = arith.constant 0 : index
    %c0_160 = arith.constant 0 : index
    %395 = vector.load %arg8[%394, %c0_159, %c0_160] : memref<32x8x128xf32, #tpu.memory_space<vmem>>, vector<1x8x128xf32>
    %396 = vector.shape_cast %395 : vector<1x8x128xf32> to vector<8x128xf32>
    %397 = vector.shape_cast %393 : vector<8x128xf32> to vector<1x8x128xf32>
    tpu.vector_store %arg8[%394, %c0_159, %c0_160], %397 {strides = array<i32>} : memref<32x8x128xf32, #tpu.memory_space<vmem>>, vector<1x8x128xf32>,
    %c19_i32 = arith.constant 19 : i32
    %398 = arith.index_cast %c19_i32 : i32 to index
    %c0_161 = arith.constant 0 : index
    %c0_162 = arith.constant 0 : index
    %399 = vector.load %arg2[%398, %c0_161, %c0_162] : memref<32x8x128xf32, #tpu.memory_space<vmem>>, vector<1x8x128xf32>
    %400 = vector.shape_cast %399 : vector<1x8x128xf32> to vector<8x128xf32>
    %cst_163 = arith.constant dense<0.000000e+00> : vector<8x128xf32>
    %401 = tpu.matmul %393, %15, %cst_163 {dimension_numbers = #tpu.dot_dimension_numbers<[1], [0], [0], [1], [0, 0, 1, 1], [], []>} : vector<8x128xf32>, vector<128x128xf32>, vector<8x128xf32> -> vector<8x128xf32>
    %402 = arith.addf %400, %401 : vector<8x128xf32>
    %403 = math.tanh %402 : vector<8x128xf32>
    %404 = arith.mulf %11, %403 : vector<8x128xf32>
    %405 = arith.addf %404, %14 : vector<8x128xf32>
    %c32_i32_164 = arith.constant 32 : i32
    %406 = tpu.dynamic_rotate %405 by %c32_i32_164 dim 1 : vector<8x128xf32>, i32 -> vector<8x128xf32>
    %c96_i32_165 = arith.constant 96 : i32
    %407 = tpu.dynamic_rotate %405 by %c96_i32_165 dim 1 : vector<8x128xf32>, i32 -> vector<8x128xf32>
    %408 = arith.mulf %406, %407 : vector<8x128xf32>
    %409 = arith.mulf %405, %390 : vector<8x128xf32>
    %410 = arith.addf %409, %408 : vector<8x128xf32>
    %c64_i32_166 = arith.constant 64 : i32
    %411 = tpu.dynamic_rotate %405 by %c64_i32_166 dim 1 : vector<8x128xf32>, i32 -> vector<8x128xf32>
    %412 = math.tanh %410 : vector<8x128xf32>
    %413 = arith.mulf %411, %412 : vector<8x128xf32>
    %414 = arith.index_cast %c19_i32 : i32 to index
    %c0_167 = arith.constant 0 : index
    %c0_168 = arith.constant 0 : index
    %415 = vector.load %arg8[%414, %c0_167, %c0_168] : memref<32x8x128xf32, #tpu.memory_space<vmem>>, vector<1x8x128xf32>
    %416 = vector.shape_cast %415 : vector<1x8x128xf32> to vector<8x128xf32>
    %417 = vector.shape_cast %413 : vector<8x128xf32> to vector<1x8x128xf32>
    tpu.vector_store %arg8[%414, %c0_167, %c0_168], %417 {strides = array<i32>} : memref<32x8x128xf32, #tpu.memory_space<vmem>>, vector<1x8x128xf32>,
    %c20_i32 = arith.constant 20 : i32
    %418 = arith.index_cast %c20_i32 : i32 to index
    %c0_169 = arith.constant 0 : index
    %c0_170 = arith.constant 0 : index
    %419 = vector.load %arg2[%418, %c0_169, %c0_170] : memref<32x8x128xf32, #tpu.memory_space<vmem>>, vector<1x8x128xf32>
    %420 = vector.shape_cast %419 : vector<1x8x128xf32> to vector<8x128xf32>
    %cst_171 = arith.constant dense<0.000000e+00> : vector<8x128xf32>
    %421 = tpu.matmul %413, %15, %cst_171 {dimension_numbers = #tpu.dot_dimension_numbers<[1], [0], [0], [1], [0, 0, 1, 1], [], []>} : vector<8x128xf32>, vector<128x128xf32>, vector<8x128xf32> -> vector<8x128xf32>
    %422 = arith.addf %420, %421 : vector<8x128xf32>
    %423 = math.tanh %422 : vector<8x128xf32>
    %424 = arith.mulf %11, %423 : vector<8x128xf32>
    %425 = arith.addf %424, %14 : vector<8x128xf32>
    %c32_i32_172 = arith.constant 32 : i32
    %426 = tpu.dynamic_rotate %425 by %c32_i32_172 dim 1 : vector<8x128xf32>, i32 -> vector<8x128xf32>
    %c96_i32_173 = arith.constant 96 : i32
    %427 = tpu.dynamic_rotate %425 by %c96_i32_173 dim 1 : vector<8x128xf32>, i32 -> vector<8x128xf32>
    %428 = arith.mulf %426, %427 : vector<8x128xf32>
    %429 = arith.mulf %425, %410 : vector<8x128xf32>
    %430 = arith.addf %429, %428 : vector<8x128xf32>
    %c64_i32_174 = arith.constant 64 : i32
    %431 = tpu.dynamic_rotate %425 by %c64_i32_174 dim 1 : vector<8x128xf32>, i32 -> vector<8x128xf32>
    %432 = math.tanh %430 : vector<8x128xf32>
    %433 = arith.mulf %431, %432 : vector<8x128xf32>
    %434 = arith.index_cast %c20_i32 : i32 to index
    %c0_175 = arith.constant 0 : index
    %c0_176 = arith.constant 0 : index
    %435 = vector.load %arg8[%434, %c0_175, %c0_176] : memref<32x8x128xf32, #tpu.memory_space<vmem>>, vector<1x8x128xf32>
    %436 = vector.shape_cast %435 : vector<1x8x128xf32> to vector<8x128xf32>
    %437 = vector.shape_cast %433 : vector<8x128xf32> to vector<1x8x128xf32>
    tpu.vector_store %arg8[%434, %c0_175, %c0_176], %437 {strides = array<i32>} : memref<32x8x128xf32, #tpu.memory_space<vmem>>, vector<1x8x128xf32>,
    %c21_i32 = arith.constant 21 : i32
    %438 = arith.index_cast %c21_i32 : i32 to index
    %c0_177 = arith.constant 0 : index
    %c0_178 = arith.constant 0 : index
    %439 = vector.load %arg2[%438, %c0_177, %c0_178] : memref<32x8x128xf32, #tpu.memory_space<vmem>>, vector<1x8x128xf32>
    %440 = vector.shape_cast %439 : vector<1x8x128xf32> to vector<8x128xf32>
    %cst_179 = arith.constant dense<0.000000e+00> : vector<8x128xf32>
    %441 = tpu.matmul %433, %15, %cst_179 {dimension_numbers = #tpu.dot_dimension_numbers<[1], [0], [0], [1], [0, 0, 1, 1], [], []>} : vector<8x128xf32>, vector<128x128xf32>, vector<8x128xf32> -> vector<8x128xf32>
    %442 = arith.addf %440, %441 : vector<8x128xf32>
    %443 = math.tanh %442 : vector<8x128xf32>
    %444 = arith.mulf %11, %443 : vector<8x128xf32>
    %445 = arith.addf %444, %14 : vector<8x128xf32>
    %c32_i32_180 = arith.constant 32 : i32
    %446 = tpu.dynamic_rotate %445 by %c32_i32_180 dim 1 : vector<8x128xf32>, i32 -> vector<8x128xf32>
    %c96_i32_181 = arith.constant 96 : i32
    %447 = tpu.dynamic_rotate %445 by %c96_i32_181 dim 1 : vector<8x128xf32>, i32 -> vector<8x128xf32>
    %448 = arith.mulf %446, %447 : vector<8x128xf32>
    %449 = arith.mulf %445, %430 : vector<8x128xf32>
    %450 = arith.addf %449, %448 : vector<8x128xf32>
    %c64_i32_182 = arith.constant 64 : i32
    %451 = tpu.dynamic_rotate %445 by %c64_i32_182 dim 1 : vector<8x128xf32>, i32 -> vector<8x128xf32>
    %452 = math.tanh %450 : vector<8x128xf32>
    %453 = arith.mulf %451, %452 : vector<8x128xf32>
    %454 = arith.index_cast %c21_i32 : i32 to index
    %c0_183 = arith.constant 0 : index
    %c0_184 = arith.constant 0 : index
    %455 = vector.load %arg8[%454, %c0_183, %c0_184] : memref<32x8x128xf32, #tpu.memory_space<vmem>>, vector<1x8x128xf32>
    %456 = vector.shape_cast %455 : vector<1x8x128xf32> to vector<8x128xf32>
    %457 = vector.shape_cast %453 : vector<8x128xf32> to vector<1x8x128xf32>
    tpu.vector_store %arg8[%454, %c0_183, %c0_184], %457 {strides = array<i32>} : memref<32x8x128xf32, #tpu.memory_space<vmem>>, vector<1x8x128xf32>,
    %c22_i32 = arith.constant 22 : i32
    %458 = arith.index_cast %c22_i32 : i32 to index
    %c0_185 = arith.constant 0 : index
    %c0_186 = arith.constant 0 : index
    %459 = vector.load %arg2[%458, %c0_185, %c0_186] : memref<32x8x128xf32, #tpu.memory_space<vmem>>, vector<1x8x128xf32>
    %460 = vector.shape_cast %459 : vector<1x8x128xf32> to vector<8x128xf32>
    %cst_187 = arith.constant dense<0.000000e+00> : vector<8x128xf32>
    %461 = tpu.matmul %453, %15, %cst_187 {dimension_numbers = #tpu.dot_dimension_numbers<[1], [0], [0], [1], [0, 0, 1, 1], [], []>} : vector<8x128xf32>, vector<128x128xf32>, vector<8x128xf32> -> vector<8x128xf32>
    %462 = arith.addf %460, %461 : vector<8x128xf32>
    %463 = math.tanh %462 : vector<8x128xf32>
    %464 = arith.mulf %11, %463 : vector<8x128xf32>
    %465 = arith.addf %464, %14 : vector<8x128xf32>
    %c32_i32_188 = arith.constant 32 : i32
    %466 = tpu.dynamic_rotate %465 by %c32_i32_188 dim 1 : vector<8x128xf32>, i32 -> vector<8x128xf32>
    %c96_i32_189 = arith.constant 96 : i32
    %467 = tpu.dynamic_rotate %465 by %c96_i32_189 dim 1 : vector<8x128xf32>, i32 -> vector<8x128xf32>
    %468 = arith.mulf %466, %467 : vector<8x128xf32>
    %469 = arith.mulf %465, %450 : vector<8x128xf32>
    %470 = arith.addf %469, %468 : vector<8x128xf32>
    %c64_i32_190 = arith.constant 64 : i32
    %471 = tpu.dynamic_rotate %465 by %c64_i32_190 dim 1 : vector<8x128xf32>, i32 -> vector<8x128xf32>
    %472 = math.tanh %470 : vector<8x128xf32>
    %473 = arith.mulf %471, %472 : vector<8x128xf32>
    %474 = arith.index_cast %c22_i32 : i32 to index
    %c0_191 = arith.constant 0 : index
    %c0_192 = arith.constant 0 : index
    %475 = vector.load %arg8[%474, %c0_191, %c0_192] : memref<32x8x128xf32, #tpu.memory_space<vmem>>, vector<1x8x128xf32>
    %476 = vector.shape_cast %475 : vector<1x8x128xf32> to vector<8x128xf32>
    %477 = vector.shape_cast %473 : vector<8x128xf32> to vector<1x8x128xf32>
    tpu.vector_store %arg8[%474, %c0_191, %c0_192], %477 {strides = array<i32>} : memref<32x8x128xf32, #tpu.memory_space<vmem>>, vector<1x8x128xf32>,
    %c23_i32 = arith.constant 23 : i32
    %478 = arith.index_cast %c23_i32 : i32 to index
    %c0_193 = arith.constant 0 : index
    %c0_194 = arith.constant 0 : index
    %479 = vector.load %arg2[%478, %c0_193, %c0_194] : memref<32x8x128xf32, #tpu.memory_space<vmem>>, vector<1x8x128xf32>
    %480 = vector.shape_cast %479 : vector<1x8x128xf32> to vector<8x128xf32>
    %cst_195 = arith.constant dense<0.000000e+00> : vector<8x128xf32>
    %481 = tpu.matmul %473, %15, %cst_195 {dimension_numbers = #tpu.dot_dimension_numbers<[1], [0], [0], [1], [0, 0, 1, 1], [], []>} : vector<8x128xf32>, vector<128x128xf32>, vector<8x128xf32> -> vector<8x128xf32>
    %482 = arith.addf %480, %481 : vector<8x128xf32>
    %483 = math.tanh %482 : vector<8x128xf32>
    %484 = arith.mulf %11, %483 : vector<8x128xf32>
    %485 = arith.addf %484, %14 : vector<8x128xf32>
    %c32_i32_196 = arith.constant 32 : i32
    %486 = tpu.dynamic_rotate %485 by %c32_i32_196 dim 1 : vector<8x128xf32>, i32 -> vector<8x128xf32>
    %c96_i32_197 = arith.constant 96 : i32
    %487 = tpu.dynamic_rotate %485 by %c96_i32_197 dim 1 : vector<8x128xf32>, i32 -> vector<8x128xf32>
    %488 = arith.mulf %486, %487 : vector<8x128xf32>
    %489 = arith.mulf %485, %470 : vector<8x128xf32>
    %490 = arith.addf %489, %488 : vector<8x128xf32>
    %c64_i32_198 = arith.constant 64 : i32
    %491 = tpu.dynamic_rotate %485 by %c64_i32_198 dim 1 : vector<8x128xf32>, i32 -> vector<8x128xf32>
    %492 = math.tanh %490 : vector<8x128xf32>
    %493 = arith.mulf %491, %492 : vector<8x128xf32>
    %494 = arith.index_cast %c23_i32 : i32 to index
    %c0_199 = arith.constant 0 : index
    %c0_200 = arith.constant 0 : index
    %495 = vector.load %arg8[%494, %c0_199, %c0_200] : memref<32x8x128xf32, #tpu.memory_space<vmem>>, vector<1x8x128xf32>
    %496 = vector.shape_cast %495 : vector<1x8x128xf32> to vector<8x128xf32>
    %497 = vector.shape_cast %493 : vector<8x128xf32> to vector<1x8x128xf32>
    tpu.vector_store %arg8[%494, %c0_199, %c0_200], %497 {strides = array<i32>} : memref<32x8x128xf32, #tpu.memory_space<vmem>>, vector<1x8x128xf32>,
    %c24_i32 = arith.constant 24 : i32
    %498 = arith.index_cast %c24_i32 : i32 to index
    %c0_201 = arith.constant 0 : index
    %c0_202 = arith.constant 0 : index
    %499 = vector.load %arg2[%498, %c0_201, %c0_202] : memref<32x8x128xf32, #tpu.memory_space<vmem>>, vector<1x8x128xf32>
    %500 = vector.shape_cast %499 : vector<1x8x128xf32> to vector<8x128xf32>
    %cst_203 = arith.constant dense<0.000000e+00> : vector<8x128xf32>
    %501 = tpu.matmul %493, %15, %cst_203 {dimension_numbers = #tpu.dot_dimension_numbers<[1], [0], [0], [1], [0, 0, 1, 1], [], []>} : vector<8x128xf32>, vector<128x128xf32>, vector<8x128xf32> -> vector<8x128xf32>
    %502 = arith.addf %500, %501 : vector<8x128xf32>
    %503 = math.tanh %502 : vector<8x128xf32>
    %504 = arith.mulf %11, %503 : vector<8x128xf32>
    %505 = arith.addf %504, %14 : vector<8x128xf32>
    %c32_i32_204 = arith.constant 32 : i32
    %506 = tpu.dynamic_rotate %505 by %c32_i32_204 dim 1 : vector<8x128xf32>, i32 -> vector<8x128xf32>
    %c96_i32_205 = arith.constant 96 : i32
    %507 = tpu.dynamic_rotate %505 by %c96_i32_205 dim 1 : vector<8x128xf32>, i32 -> vector<8x128xf32>
    %508 = arith.mulf %506, %507 : vector<8x128xf32>
    %509 = arith.mulf %505, %490 : vector<8x128xf32>
    %510 = arith.addf %509, %508 : vector<8x128xf32>
    %c64_i32_206 = arith.constant 64 : i32
    %511 = tpu.dynamic_rotate %505 by %c64_i32_206 dim 1 : vector<8x128xf32>, i32 -> vector<8x128xf32>
    %512 = math.tanh %510 : vector<8x128xf32>
    %513 = arith.mulf %511, %512 : vector<8x128xf32>
    %514 = arith.index_cast %c24_i32 : i32 to index
    %c0_207 = arith.constant 0 : index
    %c0_208 = arith.constant 0 : index
    %515 = vector.load %arg8[%514, %c0_207, %c0_208] : memref<32x8x128xf32, #tpu.memory_space<vmem>>, vector<1x8x128xf32>
    %516 = vector.shape_cast %515 : vector<1x8x128xf32> to vector<8x128xf32>
    %517 = vector.shape_cast %513 : vector<8x128xf32> to vector<1x8x128xf32>
    tpu.vector_store %arg8[%514, %c0_207, %c0_208], %517 {strides = array<i32>} : memref<32x8x128xf32, #tpu.memory_space<vmem>>, vector<1x8x128xf32>,
    %c25_i32 = arith.constant 25 : i32
    %518 = arith.index_cast %c25_i32 : i32 to index
    %c0_209 = arith.constant 0 : index
    %c0_210 = arith.constant 0 : index
    %519 = vector.load %arg2[%518, %c0_209, %c0_210] : memref<32x8x128xf32, #tpu.memory_space<vmem>>, vector<1x8x128xf32>
    %520 = vector.shape_cast %519 : vector<1x8x128xf32> to vector<8x128xf32>
    %cst_211 = arith.constant dense<0.000000e+00> : vector<8x128xf32>
    %521 = tpu.matmul %513, %15, %cst_211 {dimension_numbers = #tpu.dot_dimension_numbers<[1], [0], [0], [1], [0, 0, 1, 1], [], []>} : vector<8x128xf32>, vector<128x128xf32>, vector<8x128xf32> -> vector<8x128xf32>
    %522 = arith.addf %520, %521 : vector<8x128xf32>
    %523 = math.tanh %522 : vector<8x128xf32>
    %524 = arith.mulf %11, %523 : vector<8x128xf32>
    %525 = arith.addf %524, %14 : vector<8x128xf32>
    %c32_i32_212 = arith.constant 32 : i32
    %526 = tpu.dynamic_rotate %525 by %c32_i32_212 dim 1 : vector<8x128xf32>, i32 -> vector<8x128xf32>
    %c96_i32_213 = arith.constant 96 : i32
    %527 = tpu.dynamic_rotate %525 by %c96_i32_213 dim 1 : vector<8x128xf32>, i32 -> vector<8x128xf32>
    %528 = arith.mulf %526, %527 : vector<8x128xf32>
    %529 = arith.mulf %525, %510 : vector<8x128xf32>
    %530 = arith.addf %529, %528 : vector<8x128xf32>
    %c64_i32_214 = arith.constant 64 : i32
    %531 = tpu.dynamic_rotate %525 by %c64_i32_214 dim 1 : vector<8x128xf32>, i32 -> vector<8x128xf32>
    %532 = math.tanh %530 : vector<8x128xf32>
    %533 = arith.mulf %531, %532 : vector<8x128xf32>
    %534 = arith.index_cast %c25_i32 : i32 to index
    %c0_215 = arith.constant 0 : index
    %c0_216 = arith.constant 0 : index
    %535 = vector.load %arg8[%534, %c0_215, %c0_216] : memref<32x8x128xf32, #tpu.memory_space<vmem>>, vector<1x8x128xf32>
    %536 = vector.shape_cast %535 : vector<1x8x128xf32> to vector<8x128xf32>
    %537 = vector.shape_cast %533 : vector<8x128xf32> to vector<1x8x128xf32>
    tpu.vector_store %arg8[%534, %c0_215, %c0_216], %537 {strides = array<i32>} : memref<32x8x128xf32, #tpu.memory_space<vmem>>, vector<1x8x128xf32>,
    %c26_i32 = arith.constant 26 : i32
    %538 = arith.index_cast %c26_i32 : i32 to index
    %c0_217 = arith.constant 0 : index
    %c0_218 = arith.constant 0 : index
    %539 = vector.load %arg2[%538, %c0_217, %c0_218] : memref<32x8x128xf32, #tpu.memory_space<vmem>>, vector<1x8x128xf32>
    %540 = vector.shape_cast %539 : vector<1x8x128xf32> to vector<8x128xf32>
    %cst_219 = arith.constant dense<0.000000e+00> : vector<8x128xf32>
    %541 = tpu.matmul %533, %15, %cst_219 {dimension_numbers = #tpu.dot_dimension_numbers<[1], [0], [0], [1], [0, 0, 1, 1], [], []>} : vector<8x128xf32>, vector<128x128xf32>, vector<8x128xf32> -> vector<8x128xf32>
    %542 = arith.addf %540, %541 : vector<8x128xf32>
    %543 = math.tanh %542 : vector<8x128xf32>
    %544 = arith.mulf %11, %543 : vector<8x128xf32>
    %545 = arith.addf %544, %14 : vector<8x128xf32>
    %c32_i32_220 = arith.constant 32 : i32
    %546 = tpu.dynamic_rotate %545 by %c32_i32_220 dim 1 : vector<8x128xf32>, i32 -> vector<8x128xf32>
    %c96_i32_221 = arith.constant 96 : i32
    %547 = tpu.dynamic_rotate %545 by %c96_i32_221 dim 1 : vector<8x128xf32>, i32 -> vector<8x128xf32>
    %548 = arith.mulf %546, %547 : vector<8x128xf32>
    %549 = arith.mulf %545, %530 : vector<8x128xf32>
    %550 = arith.addf %549, %548 : vector<8x128xf32>
    %c64_i32_222 = arith.constant 64 : i32
    %551 = tpu.dynamic_rotate %545 by %c64_i32_222 dim 1 : vector<8x128xf32>, i32 -> vector<8x128xf32>
    %552 = math.tanh %550 : vector<8x128xf32>
    %553 = arith.mulf %551, %552 : vector<8x128xf32>
    %554 = arith.index_cast %c26_i32 : i32 to index
    %c0_223 = arith.constant 0 : index
    %c0_224 = arith.constant 0 : index
    %555 = vector.load %arg8[%554, %c0_223, %c0_224] : memref<32x8x128xf32, #tpu.memory_space<vmem>>, vector<1x8x128xf32>
    %556 = vector.shape_cast %555 : vector<1x8x128xf32> to vector<8x128xf32>
    %557 = vector.shape_cast %553 : vector<8x128xf32> to vector<1x8x128xf32>
    tpu.vector_store %arg8[%554, %c0_223, %c0_224], %557 {strides = array<i32>} : memref<32x8x128xf32, #tpu.memory_space<vmem>>, vector<1x8x128xf32>,
    %c27_i32 = arith.constant 27 : i32
    %558 = arith.index_cast %c27_i32 : i32 to index
    %c0_225 = arith.constant 0 : index
    %c0_226 = arith.constant 0 : index
    %559 = vector.load %arg2[%558, %c0_225, %c0_226] : memref<32x8x128xf32, #tpu.memory_space<vmem>>, vector<1x8x128xf32>
    %560 = vector.shape_cast %559 : vector<1x8x128xf32> to vector<8x128xf32>
    %cst_227 = arith.constant dense<0.000000e+00> : vector<8x128xf32>
    %561 = tpu.matmul %553, %15, %cst_227 {dimension_numbers = #tpu.dot_dimension_numbers<[1], [0], [0], [1], [0, 0, 1, 1], [], []>} : vector<8x128xf32>, vector<128x128xf32>, vector<8x128xf32> -> vector<8x128xf32>
    %562 = arith.addf %560, %561 : vector<8x128xf32>
    %563 = math.tanh %562 : vector<8x128xf32>
    %564 = arith.mulf %11, %563 : vector<8x128xf32>
    %565 = arith.addf %564, %14 : vector<8x128xf32>
    %c32_i32_228 = arith.constant 32 : i32
    %566 = tpu.dynamic_rotate %565 by %c32_i32_228 dim 1 : vector<8x128xf32>, i32 -> vector<8x128xf32>
    %c96_i32_229 = arith.constant 96 : i32
    %567 = tpu.dynamic_rotate %565 by %c96_i32_229 dim 1 : vector<8x128xf32>, i32 -> vector<8x128xf32>
    %568 = arith.mulf %566, %567 : vector<8x128xf32>
    %569 = arith.mulf %565, %550 : vector<8x128xf32>
    %570 = arith.addf %569, %568 : vector<8x128xf32>
    %c64_i32_230 = arith.constant 64 : i32
    %571 = tpu.dynamic_rotate %565 by %c64_i32_230 dim 1 : vector<8x128xf32>, i32 -> vector<8x128xf32>
    %572 = math.tanh %570 : vector<8x128xf32>
    %573 = arith.mulf %571, %572 : vector<8x128xf32>
    %574 = arith.index_cast %c27_i32 : i32 to index
    %c0_231 = arith.constant 0 : index
    %c0_232 = arith.constant 0 : index
    %575 = vector.load %arg8[%574, %c0_231, %c0_232] : memref<32x8x128xf32, #tpu.memory_space<vmem>>, vector<1x8x128xf32>
    %576 = vector.shape_cast %575 : vector<1x8x128xf32> to vector<8x128xf32>
    %577 = vector.shape_cast %573 : vector<8x128xf32> to vector<1x8x128xf32>
    tpu.vector_store %arg8[%574, %c0_231, %c0_232], %577 {strides = array<i32>} : memref<32x8x128xf32, #tpu.memory_space<vmem>>, vector<1x8x128xf32>,
    %c28_i32 = arith.constant 28 : i32
    %578 = arith.index_cast %c28_i32 : i32 to index
    %c0_233 = arith.constant 0 : index
    %c0_234 = arith.constant 0 : index
    %579 = vector.load %arg2[%578, %c0_233, %c0_234] : memref<32x8x128xf32, #tpu.memory_space<vmem>>, vector<1x8x128xf32>
    %580 = vector.shape_cast %579 : vector<1x8x128xf32> to vector<8x128xf32>
    %cst_235 = arith.constant dense<0.000000e+00> : vector<8x128xf32>
    %581 = tpu.matmul %573, %15, %cst_235 {dimension_numbers = #tpu.dot_dimension_numbers<[1], [0], [0], [1], [0, 0, 1, 1], [], []>} : vector<8x128xf32>, vector<128x128xf32>, vector<8x128xf32> -> vector<8x128xf32>
    %582 = arith.addf %580, %581 : vector<8x128xf32>
    %583 = math.tanh %582 : vector<8x128xf32>
    %584 = arith.mulf %11, %583 : vector<8x128xf32>
    %585 = arith.addf %584, %14 : vector<8x128xf32>
    %c32_i32_236 = arith.constant 32 : i32
    %586 = tpu.dynamic_rotate %585 by %c32_i32_236 dim 1 : vector<8x128xf32>, i32 -> vector<8x128xf32>
    %c96_i32_237 = arith.constant 96 : i32
    %587 = tpu.dynamic_rotate %585 by %c96_i32_237 dim 1 : vector<8x128xf32>, i32 -> vector<8x128xf32>
    %588 = arith.mulf %586, %587 : vector<8x128xf32>
    %589 = arith.mulf %585, %570 : vector<8x128xf32>
    %590 = arith.addf %589, %588 : vector<8x128xf32>
    %c64_i32_238 = arith.constant 64 : i32
    %591 = tpu.dynamic_rotate %585 by %c64_i32_238 dim 1 : vector<8x128xf32>, i32 -> vector<8x128xf32>
    %592 = math.tanh %590 : vector<8x128xf32>
    %593 = arith.mulf %591, %592 : vector<8x128xf32>
    %594 = arith.index_cast %c28_i32 : i32 to index
    %c0_239 = arith.constant 0 : index
    %c0_240 = arith.constant 0 : index
    %595 = vector.load %arg8[%594, %c0_239, %c0_240] : memref<32x8x128xf32, #tpu.memory_space<vmem>>, vector<1x8x128xf32>
    %596 = vector.shape_cast %595 : vector<1x8x128xf32> to vector<8x128xf32>
    %597 = vector.shape_cast %593 : vector<8x128xf32> to vector<1x8x128xf32>
    tpu.vector_store %arg8[%594, %c0_239, %c0_240], %597 {strides = array<i32>} : memref<32x8x128xf32, #tpu.memory_space<vmem>>, vector<1x8x128xf32>,
    %c29_i32 = arith.constant 29 : i32
    %598 = arith.index_cast %c29_i32 : i32 to index
    %c0_241 = arith.constant 0 : index
    %c0_242 = arith.constant 0 : index
    %599 = vector.load %arg2[%598, %c0_241, %c0_242] : memref<32x8x128xf32, #tpu.memory_space<vmem>>, vector<1x8x128xf32>
    %600 = vector.shape_cast %599 : vector<1x8x128xf32> to vector<8x128xf32>
    %cst_243 = arith.constant dense<0.000000e+00> : vector<8x128xf32>
    %601 = tpu.matmul %593, %15, %cst_243 {dimension_numbers = #tpu.dot_dimension_numbers<[1], [0], [0], [1], [0, 0, 1, 1], [], []>} : vector<8x128xf32>, vector<128x128xf32>, vector<8x128xf32> -> vector<8x128xf32>
    %602 = arith.addf %600, %601 : vector<8x128xf32>
    %603 = math.tanh %602 : vector<8x128xf32>
    %604 = arith.mulf %11, %603 : vector<8x128xf32>
    %605 = arith.addf %604, %14 : vector<8x128xf32>
    %c32_i32_244 = arith.constant 32 : i32
    %606 = tpu.dynamic_rotate %605 by %c32_i32_244 dim 1 : vector<8x128xf32>, i32 -> vector<8x128xf32>
    %c96_i32_245 = arith.constant 96 : i32
    %607 = tpu.dynamic_rotate %605 by %c96_i32_245 dim 1 : vector<8x128xf32>, i32 -> vector<8x128xf32>
    %608 = arith.mulf %606, %607 : vector<8x128xf32>
    %609 = arith.mulf %605, %590 : vector<8x128xf32>
    %610 = arith.addf %609, %608 : vector<8x128xf32>
    %c64_i32_246 = arith.constant 64 : i32
    %611 = tpu.dynamic_rotate %605 by %c64_i32_246 dim 1 : vector<8x128xf32>, i32 -> vector<8x128xf32>
    %612 = math.tanh %610 : vector<8x128xf32>
    %613 = arith.mulf %611, %612 : vector<8x128xf32>
    %614 = arith.index_cast %c29_i32 : i32 to index
    %c0_247 = arith.constant 0 : index
    %c0_248 = arith.constant 0 : index
    %615 = vector.load %arg8[%614, %c0_247, %c0_248] : memref<32x8x128xf32, #tpu.memory_space<vmem>>, vector<1x8x128xf32>
    %616 = vector.shape_cast %615 : vector<1x8x128xf32> to vector<8x128xf32>
    %617 = vector.shape_cast %613 : vector<8x128xf32> to vector<1x8x128xf32>
    tpu.vector_store %arg8[%614, %c0_247, %c0_248], %617 {strides = array<i32>} : memref<32x8x128xf32, #tpu.memory_space<vmem>>, vector<1x8x128xf32>,
    %c30_i32 = arith.constant 30 : i32
    %618 = arith.index_cast %c30_i32 : i32 to index
    %c0_249 = arith.constant 0 : index
    %c0_250 = arith.constant 0 : index
    %619 = vector.load %arg2[%618, %c0_249, %c0_250] : memref<32x8x128xf32, #tpu.memory_space<vmem>>, vector<1x8x128xf32>
    %620 = vector.shape_cast %619 : vector<1x8x128xf32> to vector<8x128xf32>
    %cst_251 = arith.constant dense<0.000000e+00> : vector<8x128xf32>
    %621 = tpu.matmul %613, %15, %cst_251 {dimension_numbers = #tpu.dot_dimension_numbers<[1], [0], [0], [1], [0, 0, 1, 1], [], []>} : vector<8x128xf32>, vector<128x128xf32>, vector<8x128xf32> -> vector<8x128xf32>
    %622 = arith.addf %620, %621 : vector<8x128xf32>
    %623 = math.tanh %622 : vector<8x128xf32>
    %624 = arith.mulf %11, %623 : vector<8x128xf32>
    %625 = arith.addf %624, %14 : vector<8x128xf32>
    %c32_i32_252 = arith.constant 32 : i32
    %626 = tpu.dynamic_rotate %625 by %c32_i32_252 dim 1 : vector<8x128xf32>, i32 -> vector<8x128xf32>
    %c96_i32_253 = arith.constant 96 : i32
    %627 = tpu.dynamic_rotate %625 by %c96_i32_253 dim 1 : vector<8x128xf32>, i32 -> vector<8x128xf32>
    %628 = arith.mulf %626, %627 : vector<8x128xf32>
    %629 = arith.mulf %625, %610 : vector<8x128xf32>
    %630 = arith.addf %629, %628 : vector<8x128xf32>
    %c64_i32_254 = arith.constant 64 : i32
    %631 = tpu.dynamic_rotate %625 by %c64_i32_254 dim 1 : vector<8x128xf32>, i32 -> vector<8x128xf32>
    %632 = math.tanh %630 : vector<8x128xf32>
    %633 = arith.mulf %631, %632 : vector<8x128xf32>
    %634 = arith.index_cast %c30_i32 : i32 to index
    %c0_255 = arith.constant 0 : index
    %c0_256 = arith.constant 0 : index
    %635 = vector.load %arg8[%634, %c0_255, %c0_256] : memref<32x8x128xf32, #tpu.memory_space<vmem>>, vector<1x8x128xf32>
    %636 = vector.shape_cast %635 : vector<1x8x128xf32> to vector<8x128xf32>
    %637 = vector.shape_cast %633 : vector<8x128xf32> to vector<1x8x128xf32>
    tpu.vector_store %arg8[%634, %c0_255, %c0_256], %637 {strides = array<i32>} : memref<32x8x128xf32, #tpu.memory_space<vmem>>, vector<1x8x128xf32>,
    %c31_i32 = arith.constant 31 : i32
    %638 = arith.index_cast %c31_i32 : i32 to index
    %c0_257 = arith.constant 0 : index
    %c0_258 = arith.constant 0 : index
    %639 = vector.load %arg2[%638, %c0_257, %c0_258] : memref<32x8x128xf32, #tpu.memory_space<vmem>>, vector<1x8x128xf32>
    %640 = vector.shape_cast %639 : vector<1x8x128xf32> to vector<8x128xf32>
    %cst_259 = arith.constant dense<0.000000e+00> : vector<8x128xf32>
    %641 = tpu.matmul %633, %15, %cst_259 {dimension_numbers = #tpu.dot_dimension_numbers<[1], [0], [0], [1], [0, 0, 1, 1], [], []>} : vector<8x128xf32>, vector<128x128xf32>, vector<8x128xf32> -> vector<8x128xf32>
    %642 = arith.addf %640, %641 : vector<8x128xf32>
    %643 = math.tanh %642 : vector<8x128xf32>
    %644 = arith.mulf %11, %643 : vector<8x128xf32>
    %645 = arith.addf %644, %14 : vector<8x128xf32>
    %c32_i32_260 = arith.constant 32 : i32
    %646 = tpu.dynamic_rotate %645 by %c32_i32_260 dim 1 : vector<8x128xf32>, i32 -> vector<8x128xf32>
    %c96_i32_261 = arith.constant 96 : i32
    %647 = tpu.dynamic_rotate %645 by %c96_i32_261 dim 1 : vector<8x128xf32>, i32 -> vector<8x128xf32>
    %648 = arith.mulf %646, %647 : vector<8x128xf32>
    %649 = arith.mulf %645, %630 : vector<8x128xf32>
    %650 = arith.addf %649, %648 : vector<8x128xf32>
    %c64_i32_262 = arith.constant 64 : i32
    %651 = tpu.dynamic_rotate %645 by %c64_i32_262 dim 1 : vector<8x128xf32>, i32 -> vector<8x128xf32>
    %652 = math.tanh %650 : vector<8x128xf32>
    %653 = arith.mulf %651, %652 : vector<8x128xf32>
    %654 = arith.index_cast %c31_i32 : i32 to index
    %c0_263 = arith.constant 0 : index
    %c0_264 = arith.constant 0 : index
    %655 = vector.load %arg8[%654, %c0_263, %c0_264] : memref<32x8x128xf32, #tpu.memory_space<vmem>>, vector<1x8x128xf32>
    %656 = vector.shape_cast %655 : vector<1x8x128xf32> to vector<8x128xf32>
    %657 = vector.shape_cast %653 : vector<8x128xf32> to vector<1x8x128xf32>
    tpu.vector_store %arg8[%654, %c0_263, %c0_264], %657 {strides = array<i32>} : memref<32x8x128xf32, #tpu.memory_space<vmem>>, vector<1x8x128xf32>,
    %c32_i32_265 = arith.constant 32 : i32
    %c0_266 = arith.constant 0 : index
    %c0_267 = arith.constant 0 : index
    %658 = vector.load %arg6[%c0_266, %c0_267] : memref<8x128xf32, #tpu.memory_space<vmem>>, vector<8x128xf32>
    tpu.vector_store %arg6[%c0_266, %c0_267], %653 {strides = array<i32>} : memref<8x128xf32, #tpu.memory_space<vmem>>, vector<8x128xf32>,
    %c0_268 = arith.constant 0 : index
    %c0_269 = arith.constant 0 : index
    %659 = vector.load %arg7[%c0_268, %c0_269] : memref<8x128xf32, #tpu.memory_space<vmem>>, vector<8x128xf32>
    tpu.vector_store %arg7[%c0_268, %c0_269], %650 {strides = array<i32>} : memref<8x128xf32, #tpu.memory_space<vmem>>, vector<8x128xf32>,
    %c0_270 = arith.constant 0 : index
    %c0_271 = arith.constant 0 : index
    %c0_272 = arith.constant 0 : index
    %660 = vector.load %arg8[%c0_270, %c0_271, %c0_272] : memref<32x8x128xf32, #tpu.memory_space<vmem>>, vector<32x8x128xf32>
    %c0_273 = arith.constant 0 : index
    %c0_274 = arith.constant 0 : index
    %c0_275 = arith.constant 0 : index
    %661 = vector.load %arg4[%c0_273, %c0_274, %c0_275] : memref<32x8x128xf32, #tpu.memory_space<vmem>>, vector<32x8x128xf32>
    tpu.vector_store %arg4[%c0_273, %c0_274, %c0_275], %660 {strides = array<i32>} : memref<32x8x128xf32, #tpu.memory_space<vmem>>, vector<32x8x128xf32>,
    %c0_i32_276 = arith.constant 0 : i32
    %662 = arith.cmpi eq, %arg1, %c0_i32_276 : i32
    %663 = arith.extui %662 : i1 to i32
    %c0_i32_277 = arith.constant 0 : i32
    %664 = arith.cmpi ne, %663, %c0_i32_277 : i32
    scf.if %664 {
      %c0_278 = arith.constant 0 : index
      %c0_279 = arith.constant 0 : index
      %665 = vector.load %arg5[%c0_278, %c0_279] : memref<8x128xf32, #tpu.memory_space<vmem>>, vector<8x128xf32>
      tpu.vector_store %arg5[%c0_278, %c0_279], %650 {strides = array<i32>} : memref<8x128xf32, #tpu.memory_space<vmem>>, vector<8x128xf32>,
    } else {
    }
    return
  }
  func.func @transform_0(%arg0: i32, %arg1: i32) -> (i32, i32, i32) {
    %c0_i32 = arith.constant 0 : i32
    %c0_i32_0 = arith.constant 0 : i32
    return %arg1, %arg0, %c0_i32 : i32, i32, i32
  }
  func.func @transform_1(%arg0: i32, %arg1: i32) -> (i32, i32) {
    %c0_i32 = arith.constant 0 : i32
    %c0_i32_0 = arith.constant 0 : i32
    %c0_i32_1 = arith.constant 0 : i32
    return %c0_i32, %c0_i32_0 : i32, i32
  }
  func.func @transform_2(%arg0: i32, %arg1: i32) -> (i32, i32, i32) {
    %c0_i32 = arith.constant 0 : i32
    %c0_i32_0 = arith.constant 0 : i32
    return %arg1, %arg0, %c0_i32 : i32, i32, i32
  }
  func.func @transform_3(%arg0: i32, %arg1: i32) -> (i32, i32) {
    %c0_i32 = arith.constant 0 : i32
    %c0_i32_0 = arith.constant 0 : i32
    return %arg0, %c0_i32 : i32, i32
  }
}

module attributes {stable_mosaic.version = 11 : i64} {
  func.func @_input_proj_kernel(%arg0: i32, %arg1: memref<256x64xf32, #tpu.memory_space<vmem>>, %arg2: memref<64x128xf32, #tpu.memory_space<vmem>>, %arg3: memref<256x128xf32, #tpu.memory_space<vmem>>) attributes {dimension_semantics = [#tpu.dimension_semantics<parallel>], iteration_bounds = array<i64: 1>, scalar_prefetch = 0 : i64, scratch_operands = 0 : i64, tpu.core_type = #tpu.core_type<tc>, window_params = [{transform_indices = @transform_0, window_bounds = array<i64: 256, 64>}, {pipeline_mode = #tpu.pipeline_mode<synchronous>, transform_indices = @transform_1, window_bounds = array<i64: 64, 128>}, {transform_indices = @transform_2, window_bounds = array<i64: 256, 128>}]} {
    %c0 = arith.constant 0 : index
    %c0_0 = arith.constant 0 : index
    %0 = vector.load %arg1[%c0, %c0_0] : memref<256x64xf32, #tpu.memory_space<vmem>>, vector<256x64xf32>
    %c0_1 = arith.constant 0 : index
    %c0_2 = arith.constant 0 : index
    %1 = vector.load %arg2[%c0_1, %c0_2] : memref<64x128xf32, #tpu.memory_space<vmem>>, vector<64x128xf32>
    %cst = arith.constant dense<0.000000e+00> : vector<256x128xf32>
    %2 = tpu.matmul %0, %1, %cst {dimension_numbers = #tpu.dot_dimension_numbers<[1], [0], [0], [1], [0, 0, 1, 1], [], []>} : vector<256x64xf32>, vector<64x128xf32>, vector<256x128xf32> -> vector<256x128xf32>
    %c0_3 = arith.constant 0 : index
    %c0_4 = arith.constant 0 : index
    %3 = vector.load %arg3[%c0_3, %c0_4] : memref<256x128xf32, #tpu.memory_space<vmem>>, vector<256x128xf32>
    tpu.vector_store %arg3[%c0_3, %c0_4], %2 {strides = array<i32>} : memref<256x128xf32, #tpu.memory_space<vmem>>, vector<256x128xf32>,
    return
  }
  func.func @transform_0(%arg0: i32) -> (i32, i32) {
    %c0_i32 = arith.constant 0 : i32
    %c0_i32_0 = arith.constant 0 : i32
    return %arg0, %c0_i32 : i32, i32
  }
  func.func @transform_1(%arg0: i32) -> (i32, i32) {
    %c0_i32 = arith.constant 0 : i32
    %c0_i32_0 = arith.constant 0 : i32
    %c0_i32_1 = arith.constant 0 : i32
    return %c0_i32, %c0_i32_0 : i32, i32
  }
  func.func @transform_2(%arg0: i32) -> (i32, i32) {
    %c0_i32 = arith.constant 0 : i32
    %c0_i32_0 = arith.constant 0 : i32
    return %arg0, %c0_i32 : i32, i32
  }
}

</mosaic_0001>

<llo_original>
// kernel: ttlstm_forward.2
$region0: #{ttlstm_forward.2}
  #allocation0 [shape = 'u32[]', space=smem, size = 0x4, offset = 0x4, fixed_abs, tag = 'smem constant byte address 0x4 - core index']
  #allocation1 [shape = 'u32[144,128]{1,0:T(1,128)}', space=vmem, size = 0x12000, scoped, tag = 'internal scratch']
  %s0 = inlined_call_operand.vmem [shape: f32[256,64], index: 0, kind: input, shape index: {}]
  %s1 = inlined_call_operand.vmem [shape: f32[64,128], index: 1, kind: input, shape index: {}]
  %s2 = inlined_call_operand.vmem [shape: f32[256,128], index: 2, kind: output, shape index: {}]
  %s3 = sld [smem:[#allocation0]]
  $region18: #{ttlstm_forward.2} parent=0
    _
  %s5 = ssub.s32 1, %s3
  %s6 = scalar_select 0, %s5, %s3
  // Predicated region
  $region2: #{ttlstm_forward.2} parent=0 // pred_check
    _
  $region3: #{ttlstm_forward.2} parent=0 // pred_check_branch
    %8 = sbr.rel (0) target = $region5
  $region4: #{ttlstm_forward.2} parent=0 // pred_region
    _
  $region5: #{ttlstm_forward.2} parent=0 // pred_fallthru
    _
  // Predicated region
  $region6: #{ttlstm_forward.2} parent=0 // pred_check
    _
  $region7: #{ttlstm_forward.2} parent=0 // pred_check_branch
    %10 = sbr.rel (0) target = $region9
  $region8: #{ttlstm_forward.2} parent=0 // pred_region
    _
  $region9: #{ttlstm_forward.2} parent=0 // pred_fallthru
    _
  %v11 = vld [vmem:[%s0] sm:$0xff]
  %v12 = vld [vmem:[%s0 + $0x8] sm:$0xff]
  %v13 = vld [vmem:[%s0 + $0x10] sm:$0xff]
  %v14 = vld [vmem:[%s0 + $0x18] sm:$0xff]
  %v15 = vld [vmem:[%s0 + $0x20] sm:$0xff]
  %v16 = vld [vmem:[%s0 + $0x28] sm:$0xff]
  %v17 = vld [vmem:[%s0 + $0x30] sm:$0xff]
  %v18 = vld [vmem:[%s0 + $0x38] sm:$0xff]
  %v19 = vld [vmem:[%s0 + $0x40] sm:$0xff]
  %v20 = vld [vmem:[%s0 + $0x48] sm:$0xff]
  %v21 = vld [vmem:[%s0 + $0x50] sm:$0xff]
  %v22 = vld [vmem:[%s0 + $0x58] sm:$0xff]
  %v23 = vld [vmem:[%s0 + $0x60] sm:$0xff]
  %v24 = vld [vmem:[%s0 + $0x68] sm:$0xff]
  %v25 = vld [vmem:[%s0 + $0x70] sm:$0xff]
  %v26 = vld [vmem:[%s0 + $0x78] sm:$0xff]
  %v27 = vld [vmem:[%s0 + $0x80] sm:$0xff]
  %v28 = vld [vmem:[%s0 + $0x88] sm:$0xff]
  %v29 = vld [vmem:[%s0 + $0x90] sm:$0xff]
  %v30 = vld [vmem:[%s0 + $0x98] sm:$0xff]
  %v31 = vld [vmem:[%s0 + $0xa0] sm:$0xff]
  %v32 = vld [vmem:[%s0 + $0xa8] sm:$0xff]
  %v33 = vld [vmem:[%s0 + $0xb0] sm:$0xff]
  %v34 = vld [vmem:[%s0 + $0xb8] sm:$0xff]
  %v35 = vld [vmem:[%s0 + $0xc0] sm:$0xff]
  %v36 = vld [vmem:[%s0 + $0xc8] sm:$0xff]
  %v37 = vld [vmem:[%s0 + $0xd0] sm:$0xff]
  %v38 = vld [vmem:[%s0 + $0xd8] sm:$0xff]
  %v39 = vld [vmem:[%s0 + $0xe0] sm:$0xff]
  %v40 = vld [vmem:[%s0 + $0xe8] sm:$0xff]
  %v41 = vld [vmem:[%s0 + $0xf0] sm:$0xff]
  %v42 = vld [vmem:[%s0 + $0xf8] sm:$0xff]
  %v43 = vld [vmem:[%s1] sm:$0xff]
  %v44 = vld [vmem:[%s1 + $0x8] sm:$0xff]
  %v45 = vld [vmem:[%s1 + $0x10] sm:$0xff]
  %v46 = vld [vmem:[%s1 + $0x18] sm:$0xff]
  %v47 = vld [vmem:[%s1 + $0x20] sm:$0xff]
  %v48 = vld [vmem:[%s1 + $0x28] sm:$0xff]
  %v49 = vld [vmem:[%s1 + $0x30] sm:$0xff]
  %v50 = vld [vmem:[%s1 + $0x38] sm:$0xff]
  %vm51 = vcmask 523264
  %v53 = vsel %vm51, %v11, 0
  %v56 = vsel %vm51, %v12, 0
  %v59 = vsel %vm51, %v13, 0
  %v62 = vsel %vm51, %v14, 0
  %v65 = vsel %vm51, %v15, 0
  %v68 = vsel %vm51, %v16, 0
  %v71 = vsel %vm51, %v17, 0
  %v74 = vsel %vm51, %v18, 0
  %v77 = vsel %vm51, %v19, 0
  %v80 = vsel %vm51, %v20, 0
  %v83 = vsel %vm51, %v21, 0
  %v86 = vsel %vm51, %v22, 0
  %v89 = vsel %vm51, %v23, 0
  %v92 = vsel %vm51, %v24, 0
  %v95 = vsel %vm51, %v25, 0
  %v98 = vsel %vm51, %v26, 0
  %v101 = vsel %vm51, %v27, 0
  %v104 = vsel %vm51, %v28, 0
  %v107 = vsel %vm51, %v29, 0
  %v110 = vsel %vm51, %v30, 0
  %v113 = vsel %vm51, %v31, 0
  %v116 = vsel %vm51, %v32, 0
  %v119 = vsel %vm51, %v33, 0
  %v122 = vsel %vm51, %v34, 0
  %v125 = vsel %vm51, %v35, 0
  %v128 = vsel %vm51, %v36, 0
  %v131 = vsel %vm51, %v37, 0
  %v134 = vsel %vm51, %v38, 0
  %v137 = vsel %vm51, %v39, 0
  %v140 = vsel %vm51, %v40, 0
  %v143 = vsel %vm51, %v41, 0
  %v146 = vsel %vm51, %v42, 0
  %148 = vmatprep.subr.mxu0 0.0
  %149 = vmatpush1.msra.mxu0 %v43
  %150 = vmatprep.subr.mxu0 0.0
  %151 = vmatpush1.msra.mxu0 %v44
  %152 = vmatprep.subr.mxu0 0.0
  %153 = vmatpush1.msra.mxu0 %v45
  %154 = vmatprep.subr.mxu0 0.0
  %155 = vmatpush1.msra.mxu0 %v46
  %156 = vmatprep.subr.mxu0 0.0
  %157 = vmatpush1.msra.mxu0 %v47
  %158 = vmatprep.subr.mxu0 0.0
  %159 = vmatpush1.msra.mxu0 %v48
  %160 = vmatprep.subr.mxu0 0.0
  %161 = vmatpush1.msra.mxu0 %v49
  %162 = vmatprep.subr.mxu0 0.0
  %163 = vmatpush1.msra.mxu0 %v50
  %164 = vmatprep.subr.mxu0 0.0
  %165 = vmatpush1.msra.mxu0 0.0
  %166 = vmatprep.subr.mxu0 0.0
  %167 = vmatpush1.msra.mxu0 0.0
  %168 = vmatprep.subr.mxu0 0.0
  %169 = vmatpush1.msra.mxu0 0.0
  %170 = vmatprep.subr.mxu0 0.0
  %171 = vmatpush1.msra.mxu0 0.0
  %172 = vmatprep.subr.mxu0 0.0
  %173 = vmatpush1.msra.mxu0 0.0
  %174 = vmatprep.subr.mxu0 0.0
  %175 = vmatpush1.msra.mxu0 0.0
  %176 = vmatprep.subr.mxu0 0.0
  %177 = vmatpush1.msra.mxu0 0.0
  %178 = vmatprep.subr.mxu0 0.0
  %179 = vmatpush1.msra.mxu0 0.0
  %180 = vmatprep.subr.mxu0 0.0
  %181 = vmatpush1.msra.mxu0 0.0
  %182 = vmatprep.subr.mxu0 0.0
  %183 = vmatpush1.msra.mxu0 0.0
  %184 = vmatprep.subr.mxu0 0.0
  %185 = vmatpush1.msra.mxu0 0.0
  %186 = vmatprep.subr.mxu0 0.0
  %187 = vmatpush1.msra.mxu0 0.0
  %188 = vmatprep.subr.mxu0 0.0
  %189 = vmatpush1.msra.mxu0 0.0
  %190 = vmatprep.subr.mxu0 0.0
  %191 = vmatpush1.msra.mxu0 0.0
  %192 = vmatprep.subr.mxu0 0.0
  %193 = vmatpush1.msra.mxu0 0.0
  %194 = vmatprep.subr.mxu0 0.0
  %195 = vmatpush1.msra.mxu0 0.0
  %196 = vmatprep.subr.mxu0 0.0
  %197 = vmatpush1.msra.mxu0 0.0
  %198 = vmatprep.subr.mxu0 0.0
  %199 = vmatpush1.msra.mxu0 0.0
  %200 = vmatprep.subr.mxu0 0.0
  %201 = vmatpush1.msra.mxu0 0.0
  %202 = vmatprep.subr.mxu0 0.0
  %203 = vmatpush1.msra.mxu0 0.0
  %204 = vmatprep.subr.mxu0 0.0
  %205 = vmatpush1.msra.mxu0 0.0
  %206 = vmatprep.subr.mxu0 0.0
  %207 = vmatpush1.msra.mxu0 0.0
  %208 = vmatprep.subr.mxu0 0.0
  %209 = vmatpush1.msra.mxu0 0.0
  %210 = vmatprep.subr.mxu0 0.0
  %211 = vmatpush1.msra.mxu0 0.0
  %212 = vmatprep.mubr.f32.mxu0 0.0
  %213 = vmatmul.mubr.f32.gmra.mrb[0].mxu0 %v53
  %v214 = vpop.f32.mrb[0].mxu0
  %v215 = vadd.f32 0.0, %v214
  %v216 = vpop.f32.mrb[0].mxu0
  %217 = vmatprep.mubr.f32.mxu0 0.0
  %218 = vmatmul.mubr.f32.gmra.mrb[0].mxu0 %v56
  %v219 = vpop.f32.mrb[0].mxu0
  %v220 = vadd.f32 0.0, %v219
  %v221 = vpop.f32.mrb[0].mxu0
  %222 = vmatprep.mubr.f32.mxu0 0.0
  %223 = vmatmul.mubr.f32.gmra.mrb[0].mxu0 %v59
  %v224 = vpop.f32.mrb[0].mxu0
  %v225 = vadd.f32 0.0, %v224
  %v226 = vpop.f32.mrb[0].mxu0
  %227 = vmatprep.mubr.f32.mxu0 0.0
  %228 = vmatmul.mubr.f32.gmra.mrb[0].mxu0 %v62
  %v229 = vpop.f32.mrb[0].mxu0
  %v230 = vadd.f32 0.0, %v229
  %v231 = vpop.f32.mrb[0].mxu0
  %232 = vmatprep.mubr.f32.mxu0 0.0
  %233 = vmatmul.mubr.f32.gmra.mrb[0].mxu0 %v65
  %v234 = vpop.f32.mrb[0].mxu0
  %v235 = vadd.f32 0.0, %v234
  %v236 = vpop.f32.mrb[0].mxu0
  %237 = vmatprep.mubr.f32.mxu0 0.0
  %238 = vmatmul.mubr.f32.gmra.mrb[0].mxu0 %v68
  %v239 = vpop.f32.mrb[0].mxu0
  %v240 = vadd.f32 0.0, %v239
  %v241 = vpop.f32.mrb[0].mxu0
  %242 = vmatprep.mubr.f32.mxu0 0.0
  %243 = vmatmul.mubr.f32.gmra.mrb[0].mxu0 %v71
  %v244 = vpop.f32.mrb[0].mxu0
  %v245 = vadd.f32 0.0, %v244
  %v246 = vpop.f32.mrb[0].mxu0
  %247 = vmatprep.mubr.f32.mxu0 0.0
  %248 = vmatmul.mubr.f32.gmra.mrb[0].mxu0 %v74
  %v249 = vpop.f32.mrb[0].mxu0
  %v250 = vadd.f32 0.0, %v249
  %v251 = vpop.f32.mrb[0].mxu0
  %252 = vmatprep.mubr.f32.mxu0 0.0
  %253 = vmatmul.mubr.f32.gmra.mrb[0].mxu0 %v77
  %v254 = vpop.f32.mrb[0].mxu0
  %v255 = vadd.f32 0.0, %v254
  %v256 = vpop.f32.mrb[0].mxu0
  %257 = vmatprep.mubr.f32.mxu0 0.0
  %258 = vmatmul.mubr.f32.gmra.mrb[0].mxu0 %v80
  %v259 = vpop.f32.mrb[0].mxu0
  %v260 = vadd.f32 0.0, %v259
  %v261 = vpop.f32.mrb[0].mxu0
  %262 = vmatprep.mubr.f32.mxu0 0.0
  %263 = vmatmul.mubr.f32.gmra.mrb[0].mxu0 %v83
  %v264 = vpop.f32.mrb[0].mxu0
  %v265 = vadd.f32 0.0, %v264
  %v266 = vpop.f32.mrb[0].mxu0
  %267 = vmatprep.mubr.f32.mxu0 0.0
  %268 = vmatmul.mubr.f32.gmra.mrb[0].mxu0 %v86
  %v269 = vpop.f32.mrb[0].mxu0
  %v270 = vadd.f32 0.0, %v269
  %v271 = vpop.f32.mrb[0].mxu0
  %272 = vmatprep.mubr.f32.mxu0 0.0
  %273 = vmatmul.mubr.f32.gmra.mrb[0].mxu0 %v89
  %v274 = vpop.f32.mrb[0].mxu0
  %v275 = vadd.f32 0.0, %v274
  %v276 = vpop.f32.mrb[0].mxu0
  %277 = vmatprep.mubr.f32.mxu0 0.0
  %278 = vmatmul.mubr.f32.gmra.mrb[0].mxu0 %v92
  %v279 = vpop.f32.mrb[0].mxu0
  %v280 = vadd.f32 0.0, %v279
  %v281 = vpop.f32.mrb[0].mxu0
  %282 = vmatprep.mubr.f32.mxu0 0.0
  %283 = vmatmul.mubr.f32.gmra.mrb[0].mxu0 %v95
  %v284 = vpop.f32.mrb[0].mxu0
  %v285 = vadd.f32 0.0, %v284
  %v286 = vpop.f32.mrb[0].mxu0
  %287 = vmatprep.mubr.f32.mxu0 0.0
  %288 = vmatmul.mubr.f32.gmra.mrb[0].mxu0 %v98
  %v289 = vpop.f32.mrb[0].mxu0
  %v290 = vadd.f32 0.0, %v289
  %v291 = vpop.f32.mrb[0].mxu0
  %292 = vmatprep.mubr.f32.mxu0 0.0
  %293 = vmatmul.mubr.f32.gmra.mrb[0].mxu0 %v101
  %v294 = vpop.f32.mrb[0].mxu0
  %v295 = vadd.f32 0.0, %v294
  %v296 = vpop.f32.mrb[0].mxu0
  %297 = vmatprep.mubr.f32.mxu0 0.0
  %298 = vmatmul.mubr.f32.gmra.mrb[0].mxu0 %v104
  %v299 = vpop.f32.mrb[0].mxu0
  %v300 = vadd.f32 0.0, %v299
  %v301 = vpop.f32.mrb[0].mxu0
  %302 = vmatprep.mubr.f32.mxu0 0.0
  %303 = vmatmul.mubr.f32.gmra.mrb[0].mxu0 %v107
  %v304 = vpop.f32.mrb[0].mxu0
  %v305 = vadd.f32 0.0, %v304
  %v306 = vpop.f32.mrb[0].mxu0
  %307 = vmatprep.mubr.f32.mxu0 0.0
  %308 = vmatmul.mubr.f32.gmra.mrb[0].mxu0 %v110
  %v309 = vpop.f32.mrb[0].mxu0
  %v310 = vadd.f32 0.0, %v309
  %v311 = vpop.f32.mrb[0].mxu0
  %312 = vmatprep.mubr.f32.mxu0 0.0
  %313 = vmatmul.mubr.f32.gmra.mrb[0].mxu0 %v113
  %v314 = vpop.f32.mrb[0].mxu0
  %v315 = vadd.f32 0.0, %v314
  %v316 = vpop.f32.mrb[0].mxu0
  %317 = vmatprep.mubr.f32.mxu0 0.0
  %318 = vmatmul.mubr.f32.gmra.mrb[0].mxu0 %v116
  %v319 = vpop.f32.mrb[0].mxu0
  %v320 = vadd.f32 0.0, %v319
  %v321 = vpop.f32.mrb[0].mxu0
  %322 = vmatprep.mubr.f32.mxu0 0.0
  %323 = vmatmul.mubr.f32.gmra.mrb[0].mxu0 %v119
  %v324 = vpop.f32.mrb[0].mxu0
  %v325 = vadd.f32 0.0, %v324
  %v326 = vpop.f32.mrb[0].mxu0
  %327 = vmatprep.mubr.f32.mxu0 0.0
  %328 = vmatmul.mubr.f32.gmra.mrb[0].mxu0 %v122
  %v329 = vpop.f32.mrb[0].mxu0
  %v330 = vadd.f32 0.0, %v329
  %v331 = vpop.f32.mrb[0].mxu0
  %332 = vmatprep.mubr.f32.mxu0 0.0
  %333 = vmatmul.mubr.f32.gmra.mrb[0].mxu0 %v125
  %v334 = vpop.f32.mrb[0].mxu0
  %v335 = vadd.f32 0.0, %v334
  %v336 = vpop.f32.mrb[0].mxu0
  %337 = vmatprep.mubr.f32.mxu0 0.0
  %338 = vmatmul.mubr.f32.gmra.mrb[0].mxu0 %v128
  %v339 = vpop.f32.mrb[0].mxu0
  %v340 = vadd.f32 0.0, %v339
  %v341 = vpop.f32.mrb[0].mxu0
  %342 = vmatprep.mubr.f32.mxu0 0.0
  %343 = vmatmul.mubr.f32.gmra.mrb[0].mxu0 %v131
  %v344 = vpop.f32.mrb[0].mxu0
  %v345 = vadd.f32 0.0, %v344
  %v346 = vpop.f32.mrb[0].mxu0
  %347 = vmatprep.mubr.f32.mxu0 0.0
  %348 = vmatmul.mubr.f32.gmra.mrb[0].mxu0 %v134
  %v349 = vpop.f32.mrb[0].mxu0
  %v350 = vadd.f32 0.0, %v349
  %v351 = vpop.f32.mrb[0].mxu0
  %352 = vmatprep.mubr.f32.mxu0 0.0
  %353 = vmatmul.mubr.f32.gmra.mrb[0].mxu0 %v137
  %v354 = vpop.f32.mrb[0].mxu0
  %v355 = vadd.f32 0.0, %v354
  %v356 = vpop.f32.mrb[0].mxu0
  %357 = vmatprep.mubr.f32.mxu0 0.0
  %358 = vmatmul.mubr.f32.gmra.mrb[0].mxu0 %v140
  %v359 = vpop.f32.mrb[0].mxu0
  %v360 = vadd.f32 0.0, %v359
  %v361 = vpop.f32.mrb[0].mxu0
  %362 = vmatprep.mubr.f32.mxu0 0.0
  %363 = vmatmul.mubr.f32.gmra.mrb[0].mxu0 %v143
  %v364 = vpop.f32.mrb[0].mxu0
  %v365 = vadd.f32 0.0, %v364
  %v366 = vpop.f32.mrb[0].mxu0
  %367 = vmatprep.mubr.f32.mxu0 0.0
  %368 = vmatmul.mubr.f32.gmra.mrb[0].mxu0 %v146
  %v369 = vpop.f32.mrb[0].mxu0
  %v370 = vadd.f32 0.0, %v369
  %v371 = vpop.f32.mrb[0].mxu0
  %372 = vdwg.mxu0
  %373 = vst [vmem:[%s2] sm:$0xff] %v215
  %374 = vst [vmem:[%s2 + $0x8] sm:$0xff] %v220
  %375 = vst [vmem:[%s2 + $0x10] sm:$0xff] %v225
  %376 = vst [vmem:[%s2 + $0x18] sm:$0xff] %v230
  %377 = vst [vmem:[%s2 + $0x20] sm:$0xff] %v235
  %378 = vst [vmem:[%s2 + $0x28] sm:$0xff] %v240
  %379 = vst [vmem:[%s2 + $0x30] sm:$0xff] %v245
  %380 = vst [vmem:[%s2 + $0x38] sm:$0xff] %v250
  %381 = vst [vmem:[%s2 + $0x40] sm:$0xff] %v255
  %382 = vst [vmem:[%s2 + $0x48] sm:$0xff] %v260
  %383 = vst [vmem:[%s2 + $0x50] sm:$0xff] %v265
  %384 = vst [vmem:[%s2 + $0x58] sm:$0xff] %v270
  %385 = vst [vmem:[%s2 + $0x60] sm:$0xff] %v275
  %386 = vst [vmem:[%s2 + $0x68] sm:$0xff] %v280
  %387 = vst [vmem:[%s2 + $0x70] sm:$0xff] %v285
  %388 = vst [vmem:[%s2 + $0x78] sm:$0xff] %v290
  %389 = vst [vmem:[%s2 + $0x80] sm:$0xff] %v295
  %390 = vst [vmem:[%s2 + $0x88] sm:$0xff] %v300
  %391 = vst [vmem:[%s2 + $0x90] sm:$0xff] %v305
  %392 = vst [vmem:[%s2 + $0x98] sm:$0xff] %v310
  %393 = vst [vmem:[%s2 + $0xa0] sm:$0xff] %v315
  %394 = vst [vmem:[%s2 + $0xa8] sm:$0xff] %v320
  %395 = vst [vmem:[%s2 + $0xb0] sm:$0xff] %v325
  %396 = vst [vmem:[%s2 + $0xb8] sm:$0xff] %v330
  %397 = vst [vmem:[%s2 + $0xc0] sm:$0xff] %v335
  %398 = vst [vmem:[%s2 + $0xc8] sm:$0xff] %v340
  %399 = vst [vmem:[%s2 + $0xd0] sm:$0xff] %v345
  %400 = vst [vmem:[%s2 + $0xd8] sm:$0xff] %v350
  %401 = vst [vmem:[%s2 + $0xe0] sm:$0xff] %v355
  %402 = vst [vmem:[%s2 + $0xe8] sm:$0xff] %v360
  %403 = vst [vmem:[%s2 + $0xf0] sm:$0xff] %v365
  %404 = vst [vmem:[%s2 + $0xf8] sm:$0xff] %v370
  // Predicated region
  $region10: #{ttlstm_forward.2} parent=0 // pred_check
    _
  $region11: #{ttlstm_forward.2} parent=0 // pred_check_branch
    %406 = sbr.rel (0) target = $region13
  $region12: #{ttlstm_forward.2} parent=0 // pred_region
    _
  $region13: #{ttlstm_forward.2} parent=0 // pred_fallthru
    _
  // Predicated region
  $region14: #{ttlstm_forward.2} parent=0 // pred_check
    _
  $region15: #{ttlstm_forward.2} parent=0 // pred_check_branch
    %408 = sbr.rel (0) target = $region17
  $region16: #{ttlstm_forward.2} parent=0 // pred_region
    _
  $region17: #{ttlstm_forward.2} parent=0 // pred_fallthru
    _

// kernel: ttlstm_forward.3
$region0: #{ttlstm_forward.3}
  #allocation0 [shape = 'u32[]', space=smem, size = 0x4, offset = 0x4, fixed_abs, tag = 'smem constant byte address 0x4 - core index']
  #allocation1 [shape = 'u32[144,128]{1,0:T(1,128)}', space=vmem, size = 0x12000, scoped, tag = 'internal scratch']
  #allocation2 [shape = 'f32[8,128]{1,0:T(8,128)}', space=vmem, size = 0x1000, scoped, tag = 'scratch operand']
  #allocation3 [shape = 'f32[8,128]{1,0:T(8,128)}', space=vmem, size = 0x1000, scoped, tag = 'scratch operand']
  #allocation4 [shape = 'f32[32,8,128]{2,1,0:T(8,128)}', space=vmem, size = 0x20000, scoped, tag = 'scratch operand']
  %s0 = inlined_call_operand.vmem [shape: f32[32,8,128], index: 0, kind: input, shape index: {}]
  %s1 = inlined_call_operand.vmem [shape: f32[128,128], index: 1, kind: input, shape index: {}]
  %s2 = inlined_call_operand.vmem [shape: f32[32,8,128], index: 2, kind: output, shape index: {0}]
  %s3 = inlined_call_operand.vmem [shape: f32[8,128], index: 3, kind: output, shape index: {1}]
  %4 = xla_tuple %s2, %s3
  %s5 = sld [smem:[#allocation0]]
  $region34: #{ttlstm_forward.3} parent=0
    _
  %s7 = ssub.s32 1, %s5
  %s8 = scalar_select 0, %s7, %s5
  // Predicated region
  $region2: #{ttlstm_forward.3} parent=0 // pred_check
    _
  $region3: #{ttlstm_forward.3} parent=0 // pred_check_branch
    %10 = sbr.rel (0) target = $region5
  $region4: #{ttlstm_forward.3} parent=0 // pred_region
    _
  $region5: #{ttlstm_forward.3} parent=0 // pred_fallthru
    _
  // Predicated region
  $region6: #{ttlstm_forward.3} parent=0 // pred_check
    _
  $region7: #{ttlstm_forward.3} parent=0 // pred_check_branch
    %12 = sbr.rel (0) target = $region9
  $region8: #{ttlstm_forward.3} parent=0 // pred_region
    _
  $region9: #{ttlstm_forward.3} parent=0 // pred_fallthru
    _
  %p13 = scmp.eq.s32.totalorder 0, 0
  // Predicated region
  $region10: #{ttlstm_forward.3} parent=0 // pred_check
    %p14 = pneg %p13
  $region11: #{ttlstm_forward.3} parent=0 // pred_check_branch
    %16 = sbr.rel (%p14) target = $region13
  $region12: #{ttlstm_forward.3} parent=0 // pred_region
    %17 = vst [vmem:[#allocation2] sm:$0xff] 0.0
    %18 = vst [vmem:[#allocation3] sm:$0xff] 0.0
  $region13: #{ttlstm_forward.3} parent=0 // pred_fallthru
    _
  %v19 = vlaneseq
  %v20 = vand.u32 %v19, 127
  %vm21 = vcmp.ge.s32.totalorder %v20, 64
  %vm22 = vcmp.lt.s32.totalorder %v20, 96
  %vm23 = vmand %vm21, %vm22
  %v24 = vsel %vm23, 1.0, 0.5
  %v25 = vsel %vm23, 0.0, 0.5
  %v26 = vld [vmem:[%s1] sm:$0xff]
  %v27 = vld [vmem:[%s1 + $0x8] sm:$0xff]
  %v28 = vld [vmem:[%s1 + $0x10] sm:$0xff]
  %v29 = vld [vmem:[%s1 + $0x18] sm:$0xff]
  %v30 = vld [vmem:[%s1 + $0x20] sm:$0xff]
  %v31 = vld [vmem:[%s1 + $0x28] sm:$0xff]
  %v32 = vld [vmem:[%s1 + $0x30] sm:$0xff]
  %v33 = vld [vmem:[%s1 + $0x38] sm:$0xff]
  %v34 = vld [vmem:[%s1 + $0x40] sm:$0xff]
  %v35 = vld [vmem:[%s1 + $0x48] sm:$0xff]
  %v36 = vld [vmem:[%s1 + $0x50] sm:$0xff]
  %v37 = vld [vmem:[%s1 + $0x58] sm:$0xff]
  %v38 = vld [vmem:[%s1 + $0x60] sm:$0xff]
  %v39 = vld [vmem:[%s1 + $0x68] sm:$0xff]
  %v40 = vld [vmem:[%s1 + $0x70] sm:$0xff]
  %v41 = vld [vmem:[%s1 + $0x78] sm:$0xff]
  %v42 = vld [vmem:[#allocation2] sm:$0xff]
  %v43 = vld [vmem:[#allocation3] sm:$0xff]
  %v44 = vld [vmem:[%s0] sm:$0xff]
  %45 = vmatprep.subr.mxu0 0.0
  %46 = vmatpush1.msra.mxu0 %v26
  %47 = vmatprep.subr.mxu0 0.0
  %48 = vmatpush1.msra.mxu0 %v27
  %49 = vmatprep.subr.mxu0 0.0
  %50 = vmatpush1.msra.mxu0 %v28
  %51 = vmatprep.subr.mxu0 0.0
  %52 = vmatpush1.msra.mxu0 %v29
  %53 = vmatprep.subr.mxu0 0.0
  %54 = vmatpush1.msra.mxu0 %v30
  %55 = vmatprep.subr.mxu0 0.0
  %56 = vmatpush1.msra.mxu0 %v31
  %57 = vmatprep.subr.mxu0 0.0
  %58 = vmatpush1.msra.mxu0 %v32
  %59 = vmatprep.subr.mxu0 0.0
  %60 = vmatpush1.msra.mxu0 %v33
  %61 = vmatprep.subr.mxu0 0.0
  %62 = vmatpush1.msra.mxu0 %v34
  %63 = vmatprep.subr.mxu0 0.0
  %64 = vmatpush1.msra.mxu0 %v35
  %65 = vmatprep.subr.mxu0 0.0
  %66 = vmatpush1.msra.mxu0 %v36
  %67 = vmatprep.subr.mxu0 0.0
  %68 = vmatpush1.msra.mxu0 %v37
  %69 = vmatprep.subr.mxu0 0.0
  %70 = vmatpush1.msra.mxu0 %v38
  %71 = vmatprep.subr.mxu0 0.0
  %72 = vmatpush1.msra.mxu0 %v39
  %73 = vmatprep.subr.mxu0 0.0
  %74 = vmatpush1.msra.mxu0 %v40
  %75 = vmatprep.subr.mxu0 0.0
  %76 = vmatpush1.msra.mxu0 %v41
  %77 = vmatprep.subr.mxu0 0.0
  %78 = vmatpush1.msra.mxu0 0.0
  %79 = vmatprep.subr.mxu0 0.0
  %80 = vmatpush1.msra.mxu0 0.0
  %81 = vmatprep.subr.mxu0 0.0
  %82 = vmatpush1.msra.mxu0 0.0
  %83 = vmatprep.subr.mxu0 0.0
  %84 = vmatpush1.msra.mxu0 0.0
  %85 = vmatprep.subr.mxu0 0.0
  %86 = vmatpush1.msra.mxu0 0.0
  %87 = vmatprep.subr.mxu0 0.0
  %88 = vmatpush1.msra.mxu0 0.0
  %89 = vmatprep.subr.mxu0 0.0
  %90 = vmatpush1.msra.mxu0 0.0
  %91 = vmatprep.subr.mxu0 0.0
  %92 = vmatpush1.msra.mxu0 0.0
  %93 = vmatprep.subr.mxu0 0.0
  %94 = vmatpush1.msra.mxu0 0.0
  %95 = vmatprep.subr.mxu0 0.0
  %96 = vmatpush1.msra.mxu0 0.0
  %97 = vmatprep.subr.mxu0 0.0
  %98 = vmatpush1.msra.mxu0 0.0
  %99 = vmatprep.subr.mxu0 0.0
  %100 = vmatpush1.msra.mxu0 0.0
  %101 = vmatprep.subr.mxu0 0.0
  %102 = vmatpush1.msra.mxu0 0.0
  %103 = vmatprep.subr.mxu0 0.0
  %104 = vmatpush1.msra.mxu0 0.0
  %105 = vmatprep.subr.mxu0 0.0
  %106 = vmatpush1.msra.mxu0 0.0
  %107 = vmatprep.subr.mxu0 0.0
  %108 = vmatpush1.msra.mxu0 0.0
  %109 = vmatprep.mubr.f32.mxu0 0.0
  %110 = vmatmul.mubr.f32.gmra.mrb[0].mxu0 %v42
  %v111 = vpop.f32.mrb[0].mxu0
  %v112 = vadd.f32 0.0, %v111
  %v113 = vpop.f32.mrb[0].mxu0
  %114 = vdwg.mxu0
  %v115 = vadd.f32 %v44, %v112
  %v116 = vtanh.pop %v115
  %v117 = vmul.f32 %v24, %v116
  %v118 = vadd.f32 %v117, %v25
  %119 = vrot.lane.b32.xlu0 %v118, 32
  %v120 = vpop.permute.xlu0 %119
  %121 = vrot.lane.b32.xlu0 %v118, 96
  %v122 = vpop.permute.xlu0 %121
  %v123 = vmul.f32 %v120, %v122
  %v124 = vmul.f32 %v118, %v43
  %v125 = vadd.f32 %v124, %v123
  %126 = vrot.lane.b32.xlu0 %v118, 64
  %v127 = vpop.permute.xlu0 %126
  %v128 = vtanh.pop %v125
  %v129 = vmul.f32 %v127, %v128
  %130 = vst [vmem:[#allocation4] sm:$0xff] %v129
  %s131 = scalar_lea.vmem %s0, 8
  %v132 = vld [vmem:[%s131] sm:$0xff]
  %133 = vmatprep.subr.mxu0 0.0
  %134 = vmatpush1.msra.mxu0 %v26
  %135 = vmatprep.subr.mxu0 0.0
  %136 = vmatpush1.msra.mxu0 %v27
  %137 = vmatprep.subr.mxu0 0.0
  %138 = vmatpush1.msra.mxu0 %v28
  %139 = vmatprep.subr.mxu0 0.0
  %140 = vmatpush1.msra.mxu0 %v29
  %141 = vmatprep.subr.mxu0 0.0
  %142 = vmatpush1.msra.mxu0 %v30
  %143 = vmatprep.subr.mxu0 0.0
  %144 = vmatpush1.msra.mxu0 %v31
  %145 = vmatprep.subr.mxu0 0.0
  %146 = vmatpush1.msra.mxu0 %v32
  %147 = vmatprep.subr.mxu0 0.0
  %148 = vmatpush1.msra.mxu0 %v33
  %149 = vmatprep.subr.mxu0 0.0
  %150 = vmatpush1.msra.mxu0 %v34
  %151 = vmatprep.subr.mxu0 0.0
  %152 = vmatpush1.msra.mxu0 %v35
  %153 = vmatprep.subr.mxu0 0.0
  %154 = vmatpush1.msra.mxu0 %v36
  %155 = vmatprep.subr.mxu0 0.0
  %156 = vmatpush1.msra.mxu0 %v37
  %157 = vmatprep.subr.mxu0 0.0
  %158 = vmatpush1.msra.mxu0 %v38
  %159 = vmatprep.subr.mxu0 0.0
  %160 = vmatpush1.msra.mxu0 %v39
  %161 = vmatprep.subr.mxu0 0.0
  %162 = vmatpush1.msra.mxu0 %v40
  %163 = vmatprep.subr.mxu0 0.0
  %164 = vmatpush1.msra.mxu0 %v41
  %165 = vmatprep.subr.mxu0 0.0
  %166 = vmatpush1.msra.mxu0 0.0
  %167 = vmatprep.subr.mxu0 0.0
  %168 = vmatpush1.msra.mxu0 0.0
  %169 = vmatprep.subr.mxu0 0.0
  %170 = vmatpush1.msra.mxu0 0.0
  %171 = vmatprep.subr.mxu0 0.0
  %172 = vmatpush1.msra.mxu0 0.0
  %173 = vmatprep.subr.mxu0 0.0
  %174 = vmatpush1.msra.mxu0 0.0
  %175 = vmatprep.subr.mxu0 0.0
  %176 = vmatpush1.msra.mxu0 0.0
  %177 = vmatprep.subr.mxu0 0.0
  %178 = vmatpush1.msra.mxu0 0.0
  %179 = vmatprep.subr.mxu0 0.0
  %180 = vmatpush1.msra.mxu0 0.0
  %181 = vmatprep.subr.mxu0 0.0
  %182 = vmatpush1.msra.mxu0 0.0
  %183 = vmatprep.subr.mxu0 0.0
  %184 = vmatpush1.msra.mxu0 0.0
  %185 = vmatprep.subr.mxu0 0.0
  %186 = vmatpush1.msra.mxu0 0.0
  %187 = vmatprep.subr.mxu0 0.0
  %188 = vmatpush1.msra.mxu0 0.0
  %189 = vmatprep.subr.mxu0 0.0
  %190 = vmatpush1.msra.mxu0 0.0
  %191 = vmatprep.subr.mxu0 0.0
  %192 = vmatpush1.msra.mxu0 0.0
  %193 = vmatprep.subr.mxu0 0.0
  %194 = vmatpush1.msra.mxu0 0.0
  %195 = vmatprep.subr.mxu0 0.0
  %196 = vmatpush1.msra.mxu0 0.0
  %197 = vmatprep.mubr.f32.mxu0 0.0
  %198 = vmatmul.mubr.f32.gmra.mrb[0].mxu0 %v129
  %v199 = vpop.f32.mrb[0].mxu0
  %v200 = vadd.f32 0.0, %v199
  %v201 = vpop.f32.mrb[0].mxu0
  %202 = vdwg.mxu0
  %v203 = vadd.f32 %v132, %v200
  %v204 = vtanh.pop %v203
  %v205 = vmul.f32 %v24, %v204
  %v206 = vadd.f32 %v205, %v25
  %207 = vrot.lane.b32.xlu0 %v206, 32
  %v208 = vpop.permute.xlu0 %207
  %209 = vrot.lane.b32.xlu0 %v206, 96
  %v210 = vpop.permute.xlu0 %209
  %v211 = vmul.f32 %v208, %v210
  %v212 = vmul.f32 %v206, %v125
  %v213 = vadd.f32 %v212, %v211
  %214 = vrot.lane.b32.xlu0 %v206, 64
  %v215 = vpop.permute.xlu0 %214
  %v216 = vtanh.pop %v213
  %v217 = vmul.f32 %v215, %v216
  %s218 = scalar_lea.vmem [#allocation4], 8
  %219 = vst [vmem:[%s218] sm:$0xff] %v217
  %s220 = scalar_lea.vmem %s0, 16
  %v221 = vld [vmem:[%s220] sm:$0xff]
  %222 = vmatprep.subr.mxu0 0.0
  %223 = vmatpush1.msra.mxu0 %v26
  %224 = vmatprep.subr.mxu0 0.0
  %225 = vmatpush1.msra.mxu0 %v27
  %226 = vmatprep.subr.mxu0 0.0
  %227 = vmatpush1.msra.mxu0 %v28
  %228 = vmatprep.subr.mxu0 0.0
  %229 = vmatpush1.msra.mxu0 %v29
  %230 = vmatprep.subr.mxu0 0.0
  %231 = vmatpush1.msra.mxu0 %v30
  %232 = vmatprep.subr.mxu0 0.0
  %233 = vmatpush1.msra.mxu0 %v31
  %234 = vmatprep.subr.mxu0 0.0
  %235 = vmatpush1.msra.mxu0 %v32
  %236 = vmatprep.subr.mxu0 0.0
  %237 = vmatpush1.msra.mxu0 %v33
  %238 = vmatprep.subr.mxu0 0.0
  %239 = vmatpush1.msra.mxu0 %v34
  %240 = vmatprep.subr.mxu0 0.0
  %241 = vmatpush1.msra.mxu0 %v35
  %242 = vmatprep.subr.mxu0 0.0
  %243 = vmatpush1.msra.mxu0 %v36
  %244 = vmatprep.subr.mxu0 0.0
  %245 = vmatpush1.msra.mxu0 %v37
  %246 = vmatprep.subr.mxu0 0.0
  %247 = vmatpush1.msra.mxu0 %v38
  %248 = vmatprep.subr.mxu0 0.0
  %249 = vmatpush1.msra.mxu0 %v39
  %250 = vmatprep.subr.mxu0 0.0
  %251 = vmatpush1.msra.mxu0 %v40
  %252 = vmatprep.subr.mxu0 0.0
  %253 = vmatpush1.msra.mxu0 %v41
  %254 = vmatprep.subr.mxu0 0.0
  %255 = vmatpush1.msra.mxu0 0.0
  %256 = vmatprep.subr.mxu0 0.0
  %257 = vmatpush1.msra.mxu0 0.0
  %258 = vmatprep.subr.mxu0 0.0
  %259 = vmatpush1.msra.mxu0 0.0
  %260 = vmatprep.subr.mxu0 0.0
  %261 = vmatpush1.msra.mxu0 0.0
  %262 = vmatprep.subr.mxu0 0.0
  %263 = vmatpush1.msra.mxu0 0.0
  %264 = vmatprep.subr.mxu0 0.0
  %265 = vmatpush1.msra.mxu0 0.0
  %266 = vmatprep.subr.mxu0 0.0
  %267 = vmatpush1.msra.mxu0 0.0
  %268 = vmatprep.subr.mxu0 0.0
  %269 = vmatpush1.msra.mxu0 0.0
  %270 = vmatprep.subr.mxu0 0.0
  %271 = vmatpush1.msra.mxu0 0.0
  %272 = vmatprep.subr.mxu0 0.0
  %273 = vmatpush1.msra.mxu0 0.0
  %274 = vmatprep.subr.mxu0 0.0
  %275 = vmatpush1.msra.mxu0 0.0
  %276 = vmatprep.subr.mxu0 0.0
  %277 = vmatpush1.msra.mxu0 0.0
  %278 = vmatprep.subr.mxu0 0.0
  %279 = vmatpush1.msra.mxu0 0.0
  %280 = vmatprep.subr.mxu0 0.0
  %281 = vmatpush1.msra.mxu0 0.0
  %282 = vmatprep.subr.mxu0 0.0
  %283 = vmatpush1.msra.mxu0 0.0
  %284 = vmatprep.subr.mxu0 0.0
  %285 = vmatpush1.msra.mxu0 0.0
  %286 = vmatprep.mubr.f32.mxu0 0.0
  %287 = vmatmul.mubr.f32.gmra.mrb[0].mxu0 %v217
  %v288 = vpop.f32.mrb[0].mxu0
  %v289 = vadd.f32 0.0, %v288
  %v290 = vpop.f32.mrb[0].mxu0
  %291 = vdwg.mxu0
  %v292 = vadd.f32 %v221, %v289
  %v293 = vtanh.pop %v292
  %v294 = vmul.f32 %v24, %v293
  %v295 = vadd.f32 %v294, %v25
  %296 = vrot.lane.b32.xlu0 %v295, 32
  %v297 = vpop.permute.xlu0 %296
  %298 = vrot.lane.b32.xlu0 %v295, 96
  %v299 = vpop.permute.xlu0 %298
  %v300 = vmul.f32 %v297, %v299
  %v301 = vmul.f32 %v295, %v213
  %v302 = vadd.f32 %v301, %v300
  %303 = vrot.lane.b32.xlu0 %v295, 64
  %v304 = vpop.permute.xlu0 %303
  %v305 = vtanh.pop %v302
  %v306 = vmul.f32 %v304, %v305
  %s307 = scalar_lea.vmem [#allocation4], 16
  %308 = vst [vmem:[%s307] sm:$0xff] %v306
  %s309 = scalar_lea.vmem %s0, 24
  %v310 = vld [vmem:[%s309] sm:$0xff]
  %311 = vmatprep.subr.mxu0 0.0
  %312 = vmatpush1.msra.mxu0 %v26
  %313 = vmatprep.subr.mxu0 0.0
  %314 = vmatpush1.msra.mxu0 %v27
  %315 = vmatprep.subr.mxu0 0.0
  %316 = vmatpush1.msra.mxu0 %v28
  %317 = vmatprep.subr.mxu0 0.0
  %318 = vmatpush1.msra.mxu0 %v29
  %319 = vmatprep.subr.mxu0 0.0
  %320 = vmatpush1.msra.mxu0 %v30
  %321 = vmatprep.subr.mxu0 0.0
  %322 = vmatpush1.msra.mxu0 %v31
  %323 = vmatprep.subr.mxu0 0.0
  %324 = vmatpush1.msra.mxu0 %v32
  %325 = vmatprep.subr.mxu0 0.0
  %326 = vmatpush1.msra.mxu0 %v33
  %327 = vmatprep.subr.mxu0 0.0
  %328 = vmatpush1.msra.mxu0 %v34
  %329 = vmatprep.subr.mxu0 0.0
  %330 = vmatpush1.msra.mxu0 %v35
  %331 = vmatprep.subr.mxu0 0.0
  %332 = vmatpush1.msra.mxu0 %v36
  %333 = vmatprep.subr.mxu0 0.0
  %334 = vmatpush1.msra.mxu0 %v37
  %335 = vmatprep.subr.mxu0 0.0
  %336 = vmatpush1.msra.mxu0 %v38
  %337 = vmatprep.subr.mxu0 0.0
  %338 = vmatpush1.msra.mxu0 %v39
  %339 = vmatprep.subr.mxu0 0.0
  %340 = vmatpush1.msra.mxu0 %v40
  %341 = vmatprep.subr.mxu0 0.0
  %342 = vmatpush1.msra.mxu0 %v41
  %343 = vmatprep.subr.mxu0 0.0
  %344 = vmatpush1.msra.mxu0 0.0
  %345 = vmatprep.subr.mxu0 0.0
  %346 = vmatpush1.msra.mxu0 0.0
  %347 = vmatprep.subr.mxu0 0.0
  %348 = vmatpush1.msra.mxu0 0.0
  %349 = vmatprep.subr.mxu0 0.0
  %350 = vmatpush1.msra.mxu0 0.0
  %351 = vmatprep.subr.mxu0 0.0
  %352 = vmatpush1.msra.mxu0 0.0
  %353 = vmatprep.subr.mxu0 0.0
  %354 = vmatpush1.msra.mxu0 0.0
  %355 = vmatprep.subr.mxu0 0.0
  %356 = vmatpush1.msra.mxu0 0.0
  %357 = vmatprep.subr.mxu0 0.0
  %358 = vmatpush1.msra.mxu0 0.0
  %359 = vmatprep.subr.mxu0 0.0
  %360 = vmatpush1.msra.mxu0 0.0
  %361 = vmatprep.subr.mxu0 0.0
  %362 = vmatpush1.msra.mxu0 0.0
  %363 = vmatprep.subr.mxu0 0.0
  %364 = vmatpush1.msra.mxu0 0.0
  %365 = vmatprep.subr.mxu0 0.0
  %366 = vmatpush1.msra.mxu0 0.0
  %367 = vmatprep.subr.mxu0 0.0
  %368 = vmatpush1.msra.mxu0 0.0
  %369 = vmatprep.subr.mxu0 0.0
  %370 = vmatpush1.msra.mxu0 0.0
  %371 = vmatprep.subr.mxu0 0.0
  %372 = vmatpush1.msra.mxu0 0.0
  %373 = vmatprep.subr.mxu0 0.0
  %374 = vmatpush1.msra.mxu0 0.0
  %375 = vmatprep.mubr.f32.mxu0 0.0
  %376 = vmatmul.mubr.f32.gmra.mrb[0].mxu0 %v306
  %v377 = vpop.f32.mrb[0].mxu0
  %v378 = vadd.f32 0.0, %v377
  %v379 = vpop.f32.mrb[0].mxu0
  %380 = vdwg.mxu0
  %v381 = vadd.f32 %v310, %v378
  %v382 = vtanh.pop %v381
  %v383 = vmul.f32 %v24, %v382
  %v384 = vadd.f32 %v383, %v25
  %385 = vrot.lane.b32.xlu0 %v384, 32
  %v386 = vpop.permute.xlu0 %385
  %387 = vrot.lane.b32.xlu0 %v384, 96
  %v388 = vpop.permute.xlu0 %387
  %v389 = vmul.f32 %v386, %v388
  %v390 = vmul.f32 %v384, %v302
  %v391 = vadd.f32 %v390, %v389
  %392 = vrot.lane.b32.xlu0 %v384, 64
  %v393 = vpop.permute.xlu0 %392
  %v394 = vtanh.pop %v391
  %v395 = vmul.f32 %v393, %v394
  %s396 = scalar_lea.vmem [#allocation4], 24
  %397 = vst [vmem:[%s396] sm:$0xff] %v395
  %s398 = scalar_lea.vmem %s0, 32
  %v399 = vld [vmem:[%s398] sm:$0xff]
  %400 = vmatprep.subr.mxu0 0.0
  %401 = vmatpush1.msra.mxu0 %v26
  %402 = vmatprep.subr.mxu0 0.0
  %403 = vmatpush1.msra.mxu0 %v27
  %404 = vmatprep.subr.mxu0 0.0
  %405 = vmatpush1.msra.mxu0 %v28
  %406 = vmatprep.subr.mxu0 0.0
  %407 = vmatpush1.msra.mxu0 %v29
  %408 = vmatprep.subr.mxu0 0.0
  %409 = vmatpush1.msra.mxu0 %v30
  %410 = vmatprep.subr.mxu0 0.0
  %411 = vmatpush1.msra.mxu0 %v31
  %412 = vmatprep.subr.mxu0 0.0
  %413 = vmatpush1.msra.mxu0 %v32
  %414 = vmatprep.subr.mxu0 0.0
  %415 = vmatpush1.msra.mxu0 %v33
  %416 = vmatprep.subr.mxu0 0.0
  %417 = vmatpush1.msra.mxu0 %v34
  %418 = vmatprep.subr.mxu0 0.0
  %419 = vmatpush1.msra.mxu0 %v35
  %420 = vmatprep.subr.mxu0 0.0
  %421 = vmatpush1.msra.mxu0 %v36
  %422 = vmatprep.subr.mxu0 0.0
  %423 = vmatpush1.msra.mxu0 %v37
  %424 = vmatprep.subr.mxu0 0.0
  %425 = vmatpush1.msra.mxu0 %v38
  %426 = vmatprep.subr.mxu0 0.0
  %427 = vmatpush1.msra.mxu0 %v39
  %428 = vmatprep.subr.mxu0 0.0
  %429 = vmatpush1.msra.mxu0 %v40
  %430 = vmatprep.subr.mxu0 0.0
  %431 = vmatpush1.msra.mxu0 %v41
  %432 = vmatprep.subr.mxu0 0.0
  %433 = vmatpush1.msra.mxu0 0.0
  %434 = vmatprep.subr.mxu0 0.0
  %435 = vmatpush1.msra.mxu0 0.0
  %436 = vmatprep.subr.mxu0 0.0
  %437 = vmatpush1.msra.mxu0 0.0
  %438 = vmatprep.subr.mxu0 0.0
  %439 = vmatpush1.msra.mxu0 0.0
  %440 = vmatprep.subr.mxu0 0.0
  %441 = vmatpush1.msra.mxu0 0.0
  %442 = vmatprep.subr.mxu0 0.0
  %443 = vmatpush1.msra.mxu0 0.0
  %444 = vmatprep.subr.mxu0 0.0
  %445 = vmatpush1.msra.mxu0 0.0
  %446 = vmatprep.subr.mxu0 0.0
  %447 = vmatpush1.msra.mxu0 0.0
  %448 = vmatprep.subr.mxu0 0.0
  %449 = vmatpush1.msra.mxu0 0.0
  %450 = vmatprep.subr.mxu0 0.0
  %451 = vmatpush1.msra.mxu0 0.0
  %452 = vmatprep.subr.mxu0 0.0
  %453 = vmatpush1.msra.mxu0 0.0
  %454 = vmatprep.subr.mxu0 0.0
  %455 = vmatpush1.msra.mxu0 0.0
  %456 = vmatprep.subr.mxu0 0.0
  %457 = vmatpush1.msra.mxu0 0.0
  %458 = vmatprep.subr.mxu0 0.0
  %459 = vmatpush1.msra.mxu0 0.0
  %460 = vmatprep.subr.mxu0 0.0
  %461 = vmatpush1.msra.mxu0 0.0
  %462 = vmatprep.subr.mxu0 0.0
  %463 = vmatpush1.msra.mxu0 0.0
  %464 = vmatprep.mubr.f32.mxu0 0.0
  %465 = vmatmul.mubr.f32.gmra.mrb[0].mxu0 %v395
  %v466 = vpop.f32.mrb[0].mxu0
  %v467 = vadd.f32 0.0, %v466
  %v468 = vpop.f32.mrb[0].mxu0
  %469 = vdwg.mxu0
  %v470 = vadd.f32 %v399, %v467
  %v471 = vtanh.pop %v470
  %v472 = vmul.f32 %v24, %v471
  %v473 = vadd.f32 %v472, %v25
  %474 = vrot.lane.b32.xlu0 %v473, 32
  %v475 = vpop.permute.xlu0 %474
  %476 = vrot.lane.b32.xlu0 %v473, 96
  %v477 = vpop.permute.xlu0 %476
  %v478 = vmul.f32 %v475, %v477
  %v479 = vmul.f32 %v473, %v391
  %v480 = vadd.f32 %v479, %v478
  %481 = vrot.lane.b32.xlu0 %v473, 64
  %v482 = vpop.permute.xlu0 %481
  %v483 = vtanh.pop %v480
  %v484 = vmul.f32 %v482, %v483
  %s485 = scalar_lea.vmem [#allocation4], 32
  %486 = vst [vmem:[%s485] sm:$0xff] %v484
  %s487 = scalar_lea.vmem %s0, 40
  %v488 = vld [vmem:[%s487] sm:$0xff]
  %489 = vmatprep.subr.mxu0 0.0
  %490 = vmatpush1.msra.mxu0 %v26
  %491 = vmatprep.subr.mxu0 0.0
  %492 = vmatpush1.msra.mxu0 %v27
  %493 = vmatprep.subr.mxu0 0.0
  %494 = vmatpush1.msra.mxu0 %v28
  %495 = vmatprep.subr.mxu0 0.0
  %496 = vmatpush1.msra.mxu0 %v29
  %497 = vmatprep.subr.mxu0 0.0
  %498 = vmatpush1.msra.mxu0 %v30
  %499 = vmatprep.subr.mxu0 0.0
  %500 = vmatpush1.msra.mxu0 %v31
  %501 = vmatprep.subr.mxu0 0.0
  %502 = vmatpush1.msra.mxu0 %v32
  %503 = vmatprep.subr.mxu0 0.0
  %504 = vmatpush1.msra.mxu0 %v33
  %505 = vmatprep.subr.mxu0 0.0
  %506 = vmatpush1.msra.mxu0 %v34
  %507 = vmatprep.subr.mxu0 0.0
  %508 = vmatpush1.msra.mxu0 %v35
  %509 = vmatprep.subr.mxu0 0.0
  %510 = vmatpush1.msra.mxu0 %v36
  %511 = vmatprep.subr.mxu0 0.0
  %512 = vmatpush1.msra.mxu0 %v37
  %513 = vmatprep.subr.mxu0 0.0
  %514 = vmatpush1.msra.mxu0 %v38
  %515 = vmatprep.subr.mxu0 0.0
  %516 = vmatpush1.msra.mxu0 %v39
  %517 = vmatprep.subr.mxu0 0.0
  %518 = vmatpush1.msra.mxu0 %v40
  %519 = vmatprep.subr.mxu0 0.0
  %520 = vmatpush1.msra.mxu0 %v41
  %521 = vmatprep.subr.mxu0 0.0
  %522 = vmatpush1.msra.mxu0 0.0
  %523 = vmatprep.subr.mxu0 0.0
  %524 = vmatpush1.msra.mxu0 0.0
  %525 = vmatprep.subr.mxu0 0.0
  %526 = vmatpush1.msra.mxu0 0.0
  %527 = vmatprep.subr.mxu0 0.0
  %528 = vmatpush1.msra.mxu0 0.0
  %529 = vmatprep.subr.mxu0 0.0
  %530 = vmatpush1.msra.mxu0 0.0
  %531 = vmatprep.subr.mxu0 0.0
  %532 = vmatpush1.msra.mxu0 0.0
  %533 = vmatprep.subr.mxu0 0.0
  %534 = vmatpush1.msra.mxu0 0.0
  %535 = vmatprep.subr.mxu0 0.0
  %536 = vmatpush1.msra.mxu0 0.0
  %537 = vmatprep.subr.mxu0 0.0
  %538 = vmatpush1.msra.mxu0 0.0
  %539 = vmatprep.subr.mxu0 0.0
  %540 = vmatpush1.msra.mxu0 0.0
  %541 = vmatprep.subr.mxu0 0.0
  %542 = vmatpush1.msra.mxu0 0.0
  %543 = vmatprep.subr.mxu0 0.0
  %544 = vmatpush1.msra.mxu0 0.0
  %545 = vmatprep.subr.mxu0 0.0
  %546 = vmatpush1.msra.mxu0 0.0
  %547 = vmatprep.subr.mxu0 0.0
  %548 = vmatpush1.msra.mxu0 0.0
  %549 = vmatprep.subr.mxu0 0.0
  %550 = vmatpush1.msra.mxu0 0.0
  %551 = vmatprep.subr.mxu0 0.0
  %552 = vmatpush1.msra.mxu0 0.0
  %553 = vmatprep.mubr.f32.mxu0 0.0
  %554 = vmatmul.mubr.f32.gmra.mrb[0].mxu0 %v484
  %v555 = vpop.f32.mrb[0].mxu0
  %v556 = vadd.f32 0.0, %v555
  %v557 = vpop.f32.mrb[0].mxu0
  %558 = vdwg.mxu0
  %v559 = vadd.f32 %v488, %v556
  %v560 = vtanh.pop %v559
  %v561 = vmul.f32 %v24, %v560
  %v562 = vadd.f32 %v561, %v25
  %563 = vrot.lane.b32.xlu0 %v562, 32
  %v564 = vpop.permute.xlu0 %563
  %565 = vrot.lane.b32.xlu0 %v562, 96
  %v566 = vpop.permute.xlu0 %565
  %v567 = vmul.f32 %v564, %v566
  %v568 = vmul.f32 %v562, %v480
  %v569 = vadd.f32 %v568, %v567
  %570 = vrot.lane.b32.xlu0 %v562, 64
  %v571 = vpop.permute.xlu0 %570
  %v572 = vtanh.pop %v569
  %v573 = vmul.f32 %v571, %v572
  %s574 = scalar_lea.vmem [#allocation4], 40
  %575 = vst [vmem:[%s574] sm:$0xff] %v573
  %s576 = scalar_lea.vmem %s0, 48
  %v577 = vld [vmem:[%s576] sm:$0xff]
  %578 = vmatprep.subr.mxu0 0.0
  %579 = vmatpush1.msra.mxu0 %v26
  %580 = vmatprep.subr.mxu0 0.0
  %581 = vmatpush1.msra.mxu0 %v27
  %582 = vmatprep.subr.mxu0 0.0
  %583 = vmatpush1.msra.mxu0 %v28
  %584 = vmatprep.subr.mxu0 0.0
  %585 = vmatpush1.msra.mxu0 %v29
  %586 = vmatprep.subr.mxu0 0.0
  %587 = vmatpush1.msra.mxu0 %v30
  %588 = vmatprep.subr.mxu0 0.0
  %589 = vmatpush1.msra.mxu0 %v31
  %590 = vmatprep.subr.mxu0 0.0
  %591 = vmatpush1.msra.mxu0 %v32
  %592 = vmatprep.subr.mxu0 0.0
  %593 = vmatpush1.msra.mxu0 %v33
  %594 = vmatprep.subr.mxu0 0.0
  %595 = vmatpush1.msra.mxu0 %v34
  %596 = vmatprep.subr.mxu0 0.0
  %597 = vmatpush1.msra.mxu0 %v35
  %598 = vmatprep.subr.mxu0 0.0
  %599 = vmatpush1.msra.mxu0 %v36
  %600 = vmatprep.subr.mxu0 0.0
  %601 = vmatpush1.msra.mxu0 %v37
  %602 = vmatprep.subr.mxu0 0.0
  %603 = vmatpush1.msra.mxu0 %v38
  %604 = vmatprep.subr.mxu0 0.0
  %605 = vmatpush1.msra.mxu0 %v39
  %606 = vmatprep.subr.mxu0 0.0
  %607 = vmatpush1.msra.mxu0 %v40
  %608 = vmatprep.subr.mxu0 0.0
  %609 = vmatpush1.msra.mxu0 %v41
  %610 = vmatprep.subr.mxu0 0.0
  %611 = vmatpush1.msra.mxu0 0.0
  %612 = vmatprep.subr.mxu0 0.0
  %613 = vmatpush1.msra.mxu0 0.0
  %614 = vmatprep.subr.mxu0 0.0
  %615 = vmatpush1.msra.mxu0 0.0
  %616 = vmatprep.subr.mxu0 0.0
  %617 = vmatpush1.msra.mxu0 0.0
  %618 = vmatprep.subr.mxu0 0.0
  %619 = vmatpush1.msra.mxu0 0.0
  %620 = vmatprep.subr.mxu0 0.0
  %621 = vmatpush1.msra.mxu0 0.0
  %622 = vmatprep.subr.mxu0 0.0
  %623 = vmatpush1.msra.mxu0 0.0
  %624 = vmatprep.subr.mxu0 0.0
  %625 = vmatpush1.msra.mxu0 0.0
  %626 = vmatprep.subr.mxu0 0.0
  %627 = vmatpush1.msra.mxu0 0.0
  %628 = vmatprep.subr.mxu0 0.0
  %629 = vmatpush1.msra.mxu0 0.0
  %630 = vmatprep.subr.mxu0 0.0
  %631 = vmatpush1.msra.mxu0 0.0
  %632 = vmatprep.subr.mxu0 0.0
  %633 = vmatpush1.msra.mxu0 0.0
  %634 = vmatprep.subr.mxu0 0.0
  %635 = vmatpush1.msra.mxu0 0.0
  %636 = vmatprep.subr.mxu0 0.0
  %637 = vmatpush1.msra.mxu0 0.0
  %638 = vmatprep.subr.mxu0 0.0
  %639 = vmatpush1.msra.mxu0 0.0
  %640 = vmatprep.subr.mxu0 0.0
  %641 = vmatpush1.msra.mxu0 0.0
  %642 = vmatprep.mubr.f32.mxu0 0.0
  %643 = vmatmul.mubr.f32.gmra.mrb[0].mxu0 %v573
  %v644 = vpop.f32.mrb[0].mxu0
  %v645 = vadd.f32 0.0, %v644
  %v646 = vpop.f32.mrb[0].mxu0
  %647 = vdwg.mxu0
  %v648 = vadd.f32 %v577, %v645
  %v649 = vtanh.pop %v648
  %v650 = vmul.f32 %v24, %v649
  %v651 = vadd.f32 %v650, %v25
  %652 = vrot.lane.b32.xlu0 %v651, 32
  %v653 = vpop.permute.xlu0 %652
  %654 = vrot.lane.b32.xlu0 %v651, 96
  %v655 = vpop.permute.xlu0 %654
  %v656 = vmul.f32 %v653, %v655
  %v657 = vmul.f32 %v651, %v569
  %v658 = vadd.f32 %v657, %v656
  %659 = vrot.lane.b32.xlu0 %v651, 64
  %v660 = vpop.permute.xlu0 %659
  %v661 = vtanh.pop %v658
  %v662 = vmul.f32 %v660, %v661
  %s663 = scalar_lea.vmem [#allocation4], 48
  %664 = vst [vmem:[%s663] sm:$0xff] %v662
  %s665 = scalar_lea.vmem %s0, 56
  %v666 = vld [vmem:[%s665] sm:$0xff]
  %667 = vmatprep.subr.mxu0 0.0
  %668 = vmatpush1.msra.mxu0 %v26
  %669 = vmatprep.subr.mxu0 0.0
  %670 = vmatpush1.msra.mxu0 %v27
  %671 = vmatprep.subr.mxu0 0.0
  %672 = vmatpush1.msra.mxu0 %v28
  %673 = vmatprep.subr.mxu0 0.0
  %674 = vmatpush1.msra.mxu0 %v29
  %675 = vmatprep.subr.mxu0 0.0
  %676 = vmatpush1.msra.mxu0 %v30
  %677 = vmatprep.subr.mxu0 0.0
  %678 = vmatpush1.msra.mxu0 %v31
  %679 = vmatprep.subr.mxu0 0.0
  %680 = vmatpush1.msra.mxu0 %v32
  %681 = vmatprep.subr.mxu0 0.0
  %682 = vmatpush1.msra.mxu0 %v33
  %683 = vmatprep.subr.mxu0 0.0
  %684 = vmatpush1.msra.mxu0 %v34
  %685 = vmatprep.subr.mxu0 0.0
  %686 = vmatpush1.msra.mxu0 %v35
  %687 = vmatprep.subr.mxu0 0.0
  %688 = vmatpush1.msra.mxu0 %v36
  %689 = vmatprep.subr.mxu0 0.0
  %690 = vmatpush1.msra.mxu0 %v37
  %691 = vmatprep.subr.mxu0 0.0
  %692 = vmatpush1.msra.mxu0 %v38
  %693 = vmatprep.subr.mxu0 0.0
  %694 = vmatpush1.msra.mxu0 %v39
  %695 = vmatprep.subr.mxu0 0.0
  %696 = vmatpush1.msra.mxu0 %v40
  %697 = vmatprep.subr.mxu0 0.0
  %698 = vmatpush1.msra.mxu0 %v41
  %699 = vmatprep.subr.mxu0 0.0
  %700 = vmatpush1.msra.mxu0 0.0
  %701 = vmatprep.subr.mxu0 0.0
  %702 = vmatpush1.msra.mxu0 0.0
  %703 = vmatprep.subr.mxu0 0.0
  %704 = vmatpush1.msra.mxu0 0.0
  %705 = vmatprep.subr.mxu0 0.0
  %706 = vmatpush1.msra.mxu0 0.0
  %707 = vmatprep.subr.mxu0 0.0
  %708 = vmatpush1.msra.mxu0 0.0
  %709 = vmatprep.subr.mxu0 0.0
  %710 = vmatpush1.msra.mxu0 0.0
  %711 = vmatprep.subr.mxu0 0.0
  %712 = vmatpush1.msra.mxu0 0.0
  %713 = vmatprep.subr.mxu0 0.0
  %714 = vmatpush1.msra.mxu0 0.0
  %715 = vmatprep.subr.mxu0 0.0
  %716 = vmatpush1.msra.mxu0 0.0
  %717 = vmatprep.subr.mxu0 0.0
  %718 = vmatpush1.msra.mxu0 0.0
  %719 = vmatprep.subr.mxu0 0.0
  %720 = vmatpush1.msra.mxu0 0.0
  %721 = vmatprep.subr.mxu0 0.0
  %722 = vmatpush1.msra.mxu0 0.0
  %723 = vmatprep.subr.mxu0 0.0
  %724 = vmatpush1.msra.mxu0 0.0
  %725 = vmatprep.subr.mxu0 0.0
  %726 = vmatpush1.msra.mxu0 0.0
  %727 = vmatprep.subr.mxu0 0.0
  %728 = vmatpush1.msra.mxu0 0.0
  %729 = vmatprep.subr.mxu0 0.0
  %730 = vmatpush1.msra.mxu0 0.0
  %731 = vmatprep.mubr.f32.mxu0 0.0
  %732 = vmatmul.mubr.f32.gmra.mrb[0].mxu0 %v662
  %v733 = vpop.f32.mrb[0].mxu0
  %v734 = vadd.f32 0.0, %v733
  %v735 = vpop.f32.mrb[0].mxu0
  %736 = vdwg.mxu0
  %v737 = vadd.f32 %v666, %v734
  %v738 = vtanh.pop %v737
  %v739 = vmul.f32 %v24, %v738
  %v740 = vadd.f32 %v739, %v25
  %741 = vrot.lane.b32.xlu0 %v740, 32
  %v742 = vpop.permute.xlu0 %741
  %743 = vrot.lane.b32.xlu0 %v740, 96
  %v744 = vpop.permute.xlu0 %743
  %v745 = vmul.f32 %v742, %v744
  %v746 = vmul.f32 %v740, %v658
  %v747 = vadd.f32 %v746, %v745
  %748 = vrot.lane.b32.xlu0 %v740, 64
  %v749 = vpop.permute.xlu0 %748
  %v750 = vtanh.pop %v747
  %v751 = vmul.f32 %v749, %v750
  %s752 = scalar_lea.vmem [#allocation4], 56
  %753 = vst [vmem:[%s752] sm:$0xff] %v751
  %s754 = scalar_lea.vmem %s0, 64
  %v755 = vld [vmem:[%s754] sm:$0xff]
  %756 = vmatprep.subr.mxu0 0.0
  %757 = vmatpush1.msra.mxu0 %v26
  %758 = vmatprep.subr.mxu0 0.0
  %759 = vmatpush1.msra.mxu0 %v27
  %760 = vmatprep.subr.mxu0 0.0
  %761 = vmatpush1.msra.mxu0 %v28
  %762 = vmatprep.subr.mxu0 0.0
  %763 = vmatpush1.msra.mxu0 %v29
  %764 = vmatprep.subr.mxu0 0.0
  %765 = vmatpush1.msra.mxu0 %v30
  %766 = vmatprep.subr.mxu0 0.0
  %767 = vmatpush1.msra.mxu0 %v31
  %768 = vmatprep.subr.mxu0 0.0
  %769 = vmatpush1.msra.mxu0 %v32
  %770 = vmatprep.subr.mxu0 0.0
  %771 = vmatpush1.msra.mxu0 %v33
  %772 = vmatprep.subr.mxu0 0.0
  %773 = vmatpush1.msra.mxu0 %v34
  %774 = vmatprep.subr.mxu0 0.0
  %775 = vmatpush1.msra.mxu0 %v35
  %776 = vmatprep.subr.mxu0 0.0
  %777 = vmatpush1.msra.mxu0 %v36
  %778 = vmatprep.subr.mxu0 0.0
  %779 = vmatpush1.msra.mxu0 %v37
  %780 = vmatprep.subr.mxu0 0.0
  %781 = vmatpush1.msra.mxu0 %v38
  %782 = vmatprep.subr.mxu0 0.0
  %783 = vmatpush1.msra.mxu0 %v39
  %784 = vmatprep.subr.mxu0 0.0
  %785 = vmatpush1.msra.mxu0 %v40
  %786 = vmatprep.subr.mxu0 0.0
  %787 = vmatpush1.msra.mxu0 %v41
  %788 = vmatprep.subr.mxu0 0.0
  %789 = vmatpush1.msra.mxu0 0.0
  %790 = vmatprep.subr.mxu0 0.0
  %791 = vmatpush1.msra.mxu0 0.0
  %792 = vmatprep.subr.mxu0 0.0
  %793 = vmatpush1.msra.mxu0 0.0
  %794 = vmatprep.subr.mxu0 0.0
  %795 = vmatpush1.msra.mxu0 0.0
  %796 = vmatprep.subr.mxu0 0.0
  %797 = vmatpush1.msra.mxu0 0.0
  %798 = vmatprep.subr.mxu0 0.0
  %799 = vmatpush1.msra.mxu0 0.0
  %800 = vmatprep.subr.mxu0 0.0
  %801 = vmatpush1.msra.mxu0 0.0
  %802 = vmatprep.subr.mxu0 0.0
  %803 = vmatpush1.msra.mxu0 0.0
  %804 = vmatprep.subr.mxu0 0.0
  %805 = vmatpush1.msra.mxu0 0.0
  %806 = vmatprep.subr.mxu0 0.0
  %807 = vmatpush1.msra.mxu0 0.0
  %808 = vmatprep.subr.mxu0 0.0
  %809 = vmatpush1.msra.mxu0 0.0
  %810 = vmatprep.subr.mxu0 0.0
  %811 = vmatpush1.msra.mxu0 0.0
  %812 = vmatprep.subr.mxu0 0.0
  %813 = vmatpush1.msra.mxu0 0.0
  %814 = vmatprep.subr.mxu0 0.0
  %815 = vmatpush1.msra.mxu0 0.0
  %816 = vmatprep.subr.mxu0 0.0
  %817 = vmatpush1.msra.mxu0 0.0
  %818 = vmatprep.subr.mxu0 0.0
  %819 = vmatpush1.msra.mxu0 0.0
  %820 = vmatprep.mubr.f32.mxu0 0.0
  %821 = vmatmul.mubr.f32.gmra.mrb[0].mxu0 %v751
  %v822 = vpop.f32.mrb[0].mxu0
  %v823 = vadd.f32 0.0, %v822
  %v824 = vpop.f32.mrb[0].mxu0
  %825 = vdwg.mxu0
  %v826 = vadd.f32 %v755, %v823
  %v827 = vtanh.pop %v826
  %v828 = vmul.f32 %v24, %v827
  %v829 = vadd.f32 %v828, %v25
  %830 = vrot.lane.b32.xlu0 %v829, 32
  %v831 = vpop.permute.xlu0 %830
  %832 = vrot.lane.b32.xlu0 %v829, 96
  %v833 = vpop.permute.xlu0 %832
  %v834 = vmul.f32 %v831, %v833
  %v835 = vmul.f32 %v829, %v747
  %v836 = vadd.f32 %v835, %v834
  %837 = vrot.lane.b32.xlu0 %v829, 64
  %v838 = vpop.permute.xlu0 %837
  %v839 = vtanh.pop %v836
  %v840 = vmul.f32 %v838, %v839
  %s841 = scalar_lea.vmem [#allocation4], 64
  %842 = vst [vmem:[%s841] sm:$0xff] %v840
  %s843 = scalar_lea.vmem %s0, 72
  %v844 = vld [vmem:[%s843] sm:$0xff]
  %845 = vmatprep.subr.mxu0 0.0
  %846 = vmatpush1.msra.mxu0 %v26
  %847 = vmatprep.subr.mxu0 0.0
  %848 = vmatpush1.msra.mxu0 %v27
  %849 = vmatprep.subr.mxu0 0.0
  %850 = vmatpush1.msra.mxu0 %v28
  %851 = vmatprep.subr.mxu0 0.0
  %852 = vmatpush1.msra.mxu0 %v29
  %853 = vmatprep.subr.mxu0 0.0
  %854 = vmatpush1.msra.mxu0 %v30
  %855 = vmatprep.subr.mxu0 0.0
  %856 = vmatpush1.msra.mxu0 %v31
  %857 = vmatprep.subr.mxu0 0.0
  %858 = vmatpush1.msra.mxu0 %v32
  %859 = vmatprep.subr.mxu0 0.0
  %860 = vmatpush1.msra.mxu0 %v33
  %861 = vmatprep.subr.mxu0 0.0
  %862 = vmatpush1.msra.mxu0 %v34
  %863 = vmatprep.subr.mxu0 0.0
  %864 = vmatpush1.msra.mxu0 %v35
  %865 = vmatprep.subr.mxu0 0.0
  %866 = vmatpush1.msra.mxu0 %v36
  %867 = vmatprep.subr.mxu0 0.0
  %868 = vmatpush1.msra.mxu0 %v37
  %869 = vmatprep.subr.mxu0 0.0
  %870 = vmatpush1.msra.mxu0 %v38
  %871 = vmatprep.subr.mxu0 0.0
  %872 = vmatpush1.msra.mxu0 %v39
  %873 = vmatprep.subr.mxu0 0.0
  %874 = vmatpush1.msra.mxu0 %v40
  %875 = vmatprep.subr.mxu0 0.0
  %876 = vmatpush1.msra.mxu0 %v41
  %877 = vmatprep.subr.mxu0 0.0
  %878 = vmatpush1.msra.mxu0 0.0
  %879 = vmatprep.subr.mxu0 0.0
  %880 = vmatpush1.msra.mxu0 0.0
  %881 = vmatprep.subr.mxu0 0.0
  %882 = vmatpush1.msra.mxu0 0.0
  %883 = vmatprep.subr.mxu0 0.0
  %884 = vmatpush1.msra.mxu0 0.0
  %885 = vmatprep.subr.mxu0 0.0
  %886 = vmatpush1.msra.mxu0 0.0
  %887 = vmatprep.subr.mxu0 0.0
  %888 = vmatpush1.msra.mxu0 0.0
  %889 = vmatprep.subr.mxu0 0.0
  %890 = vmatpush1.msra.mxu0 0.0
  %891 = vmatprep.subr.mxu0 0.0
  %892 = vmatpush1.msra.mxu0 0.0
  %893 = vmatprep.subr.mxu0 0.0
  %894 = vmatpush1.msra.mxu0 0.0
  %895 = vmatprep.subr.mxu0 0.0
  %896 = vmatpush1.msra.mxu0 0.0
  %897 = vmatprep.subr.mxu0 0.0
  %898 = vmatpush1.msra.mxu0 0.0
  %899 = vmatprep.subr.mxu0 0.0
  %900 = vmatpush1.msra.mxu0 0.0
  %901 = vmatprep.subr.mxu0 0.0
  %902 = vmatpush1.msra.mxu0 0.0
  %903 = vmatprep.subr.mxu0 0.0
  %904 = vmatpush1.msra.mxu0 0.0
  %905 = vmatprep.subr.mxu0 0.0
  %906 = vmatpush1.msra.mxu0 0.0
  %907 = vmatprep.subr.mxu0 0.0
  %908 = vmatpush1.msra.mxu0 0.0
  %909 = vmatprep.mubr.f32.mxu0 0.0
  %910 = vmatmul.mubr.f32.gmra.mrb[0].mxu0 %v840
  %v911 = vpop.f32.mrb[0].mxu0
  %v912 = vadd.f32 0.0, %v911
  %v913 = vpop.f32.mrb[0].mxu0
  %914 = vdwg.mxu0
  %v915 = vadd.f32 %v844, %v912
  %v916 = vtanh.pop %v915
  %v917 = vmul.f32 %v24, %v916
  %v918 = vadd.f32 %v917, %v25
  %919 = vrot.lane.b32.xlu0 %v918, 32
  %v920 = vpop.permute.xlu0 %919
  %921 = vrot.lane.b32.xlu0 %v918, 96
  %v922 = vpop.permute.xlu0 %921
  %v923 = vmul.f32 %v920, %v922
  %v924 = vmul.f32 %v918, %v836
  %v925 = vadd.f32 %v924, %v923
  %926 = vrot.lane.b32.xlu0 %v918, 64
  %v927 = vpop.permute.xlu0 %926
  %v928 = vtanh.pop %v925
  %v929 = vmul.f32 %v927, %v928
  %s930 = scalar_lea.vmem [#allocation4], 72
  %931 = vst [vmem:[%s930] sm:$0xff] %v929
  %s932 = scalar_lea.vmem %s0, 80
  %v933 = vld [vmem:[%s932] sm:$0xff]
  %934 = vmatprep.subr.mxu0 0.0
  %935 = vmatpush1.msra.mxu0 %v26
  %936 = vmatprep.subr.mxu0 0.0
  %937 = vmatpush1.msra.mxu0 %v27
  %938 = vmatprep.subr.mxu0 0.0
  %939 = vmatpush1.msra.mxu0 %v28
  %940 = vmatprep.subr.mxu0 0.0
  %941 = vmatpush1.msra.mxu0 %v29
  %942 = vmatprep.subr.mxu0 0.0
  %943 = vmatpush1.msra.mxu0 %v30
  %944 = vmatprep.subr.mxu0 0.0
  %945 = vmatpush1.msra.mxu0 %v31
  %946 = vmatprep.subr.mxu0 0.0
  %947 = vmatpush1.msra.mxu0 %v32
  %948 = vmatprep.subr.mxu0 0.0
  %949 = vmatpush1.msra.mxu0 %v33
  %950 = vmatprep.subr.mxu0 0.0
  %951 = vmatpush1.msra.mxu0 %v34
  %952 = vmatprep.subr.mxu0 0.0
  %953 = vmatpush1.msra.mxu0 %v35
  %954 = vmatprep.subr.mxu0 0.0
  %955 = vmatpush1.msra.mxu0 %v36
  %956 = vmatprep.subr.mxu0 0.0
  %957 = vmatpush1.msra.mxu0 %v37
  %958 = vmatprep.subr.mxu0 0.0
  %959 = vmatpush1.msra.mxu0 %v38
  %960 = vmatprep.subr.mxu0 0.0
  %961 = vmatpush1.msra.mxu0 %v39
  %962 = vmatprep.subr.mxu0 0.0
  %963 = vmatpush1.msra.mxu0 %v40
  %964 = vmatprep.subr.mxu0 0.0
  %965 = vmatpush1.msra.mxu0 %v41
  %966 = vmatprep.subr.mxu0 0.0
  %967 = vmatpush1.msra.mxu0 0.0
  %968 = vmatprep.subr.mxu0 0.0
  %969 = vmatpush1.msra.mxu0 0.0
  %970 = vmatprep.subr.mxu0 0.0
  %971 = vmatpush1.msra.mxu0 0.0
  %972 = vmatprep.subr.mxu0 0.0
  %973 = vmatpush1.msra.mxu0 0.0
  %974 = vmatprep.subr.mxu0 0.0
  %975 = vmatpush1.msra.mxu0 0.0
  %976 = vmatprep.subr.mxu0 0.0
  %977 = vmatpush1.msra.mxu0 0.0
  %978 = vmatprep.subr.mxu0 0.0
  %979 = vmatpush1.msra.mxu0 0.0
  %980 = vmatprep.subr.mxu0 0.0
  %981 = vmatpush1.msra.mxu0 0.0
  %982 = vmatprep.subr.mxu0 0.0
  %983 = vmatpush1.msra.mxu0 0.0
  %984 = vmatprep.subr.mxu0 0.0
  %985 = vmatpush1.msra.mxu0 0.0
  %986 = vmatprep.subr.mxu0 0.0
  %987 = vmatpush1.msra.mxu0 0.0
  %988 = vmatprep.subr.mxu0 0.0
  %989 = vmatpush1.msra.mxu0 0.0
  %990 = vmatprep.subr.mxu0 0.0
  %991 = vmatpush1.msra.mxu0 0.0
  %992 = vmatprep.subr.mxu0 0.0
  %993 = vmatpush1.msra.mxu0 0.0
  %994 = vmatprep.subr.mxu0 0.0
  %995 = vmatpush1.msra.mxu0 0.0
  %996 = vmatprep.subr.mxu0 0.0
  %997 = vmatpush1.msra.mxu0 0.0
  %998 = vmatprep.mubr.f32.mxu0 0.0
  %999 = vmatmul.mubr.f32.gmra.mrb[0].mxu0 %v929
  %v1000 = vpop.f32.mrb[0].mxu0
  %v1001 = vadd.f32 0.0, %v1000
  %v1002 = vpop.f32.mrb[0].mxu0
  %1003 = vdwg.mxu0
  %v1004 = vadd.f32 %v933, %v1001
  %v1005 = vtanh.pop %v1004
  %v1006 = vmul.f32 %v24, %v1005
  %v1007 = vadd.f32 %v1006, %v25
  %1008 = vrot.lane.b32.xlu0 %v1007, 32
  %v1009 = vpop.permute.xlu0 %1008
  %1010 = vrot.lane.b32.xlu0 %v1007, 96
  %v1011 = vpop.permute.xlu0 %1010
  %v1012 = vmul.f32 %v1009, %v1011
  %v1013 = vmul.f32 %v1007, %v925
  %v1014 = vadd.f32 %v1013, %v1012
  %1015 = vrot.lane.b32.xlu0 %v1007, 64
  %v1016 = vpop.permute.xlu0 %1015
  %v1017 = vtanh.pop %v1014
  %v1018 = vmul.f32 %v1016, %v1017
  %s1019 = scalar_lea.vmem [#allocation4], 80
  %1020 = vst [vmem:[%s1019] sm:$0xff] %v1018
  %s1021 = scalar_lea.vmem %s0, 88
  %v1022 = vld [vmem:[%s1021] sm:$0xff]
  %1023 = vmatprep.subr.mxu0 0.0
  %1024 = vmatpush1.msra.mxu0 %v26
  %1025 = vmatprep.subr.mxu0 0.0
  %1026 = vmatpush1.msra.mxu0 %v27
  %1027 = vmatprep.subr.mxu0 0.0
  %1028 = vmatpush1.msra.mxu0 %v28
  %1029 = vmatprep.subr.mxu0 0.0
  %1030 = vmatpush1.msra.mxu0 %v29
  %1031 = vmatprep.subr.mxu0 0.0
  %1032 = vmatpush1.msra.mxu0 %v30
  %1033 = vmatprep.subr.mxu0 0.0
  %1034 = vmatpush1.msra.mxu0 %v31
  %1035 = vmatprep.subr.mxu0 0.0
  %1036 = vmatpush1.msra.mxu0 %v32
  %1037 = vmatprep.subr.mxu0 0.0
  %1038 = vmatpush1.msra.mxu0 %v33
  %1039 = vmatprep.subr.mxu0 0.0
  %1040 = vmatpush1.msra.mxu0 %v34
  %1041 = vmatprep.subr.mxu0 0.0
  %1042 = vmatpush1.msra.mxu0 %v35
  %1043 = vmatprep.subr.mxu0 0.0
  %1044 = vmatpush1.msra.mxu0 %v36
  %1045 = vmatprep.subr.mxu0 0.0
  %1046 = vmatpush1.msra.mxu0 %v37
  %1047 = vmatprep.subr.mxu0 0.0
  %1048 = vmatpush1.msra.mxu0 %v38
  %1049 = vmatprep.subr.mxu0 0.0
  %1050 = vmatpush1.msra.mxu0 %v39
  %1051 = vmatprep.subr.mxu0 0.0
  %1052 = vmatpush1.msra.mxu0 %v40
  %1053 = vmatprep.subr.mxu0 0.0
  %1054 = vmatpush1.msra.mxu0 %v41
  %1055 = vmatprep.subr.mxu0 0.0
  %1056 = vmatpush1.msra.mxu0 0.0
  %1057 = vmatprep.subr.mxu0 0.0
  %1058 = vmatpush1.msra.mxu0 0.0
  %1059 = vmatprep.subr.mxu0 0.0
  %1060 = vmatpush1.msra.mxu0 0.0
  %1061 = vmatprep.subr.mxu0 0.0
  %1062 = vmatpush1.msra.mxu0 0.0
  %1063 = vmatprep.subr.mxu0 0.0
  %1064 = vmatpush1.msra.mxu0 0.0
  %1065 = vmatprep.subr.mxu0 0.0
  %1066 = vmatpush1.msra.mxu0 0.0
  %1067 = vmatprep.subr.mxu0 0.0
  %1068 = vmatpush1.msra.mxu0 0.0
  %1069 = vmatprep.subr.mxu0 0.0
  %1070 = vmatpush1.msra.mxu0 0.0
  %1071 = vmatprep.subr.mxu0 0.0
  %1072 = vmatpush1.msra.mxu0 0.0
  %1073 = vmatprep.subr.mxu0 0.0
  %1074 = vmatpush1.msra.mxu0 0.0
  %1075 = vmatprep.subr.mxu0 0.0
  %1076 = vmatpush1.msra.mxu0 0.0
  %1077 = vmatprep.subr.mxu0 0.0
  %1078 = vmatpush1.msra.mxu0 0.0
  %1079 = vmatprep.subr.mxu0 0.0
  %1080 = vmatpush1.msra.mxu0 0.0
  %1081 = vmatprep.subr.mxu0 0.0
  %1082 = vmatpush1.msra.mxu0 0.0
  %1083 = vmatprep.subr.mxu0 0.0
  %1084 = vmatpush1.msra.mxu0 0.0
  %1085 = vmatprep.subr.mxu0 0.0
  %1086 = vmatpush1.msra.mxu0 0.0
  %1087 = vmatprep.mubr.f32.mxu0 0.0
  %1088 = vmatmul.mubr.f32.gmra.mrb[0].mxu0 %v1018
  %v1089 = vpop.f32.mrb[0].mxu0
  %v1090 = vadd.f32 0.0, %v1089
  %v1091 = vpop.f32.mrb[0].mxu0
  %1092 = vdwg.mxu0
  %v1093 = vadd.f32 %v1022, %v1090
  %v1094 = vtanh.pop %v1093
  %v1095 = vmul.f32 %v24, %v1094
  %v1096 = vadd.f32 %v1095, %v25
  %1097 = vrot.lane.b32.xlu0 %v1096, 32
  %v1098 = vpop.permute.xlu0 %1097
  %1099 = vrot.lane.b32.xlu0 %v1096, 96
  %v1100 = vpop.permute.xlu0 %1099
  %v1101 = vmul.f32 %v1098, %v1100
  %v1102 = vmul.f32 %v1096, %v1014
  %v1103 = vadd.f32 %v1102, %v1101
  %1104 = vrot.lane.b32.xlu0 %v1096, 64
  %v1105 = vpop.permute.xlu0 %1104
  %v1106 = vtanh.pop %v1103
  %v1107 = vmul.f32 %v1105, %v1106
  %s1108 = scalar_lea.vmem [#allocation4], 88
  %1109 = vst [vmem:[%s1108] sm:$0xff] %v1107
  %s1110 = scalar_lea.vmem %s0, 96
  %v1111 = vld [vmem:[%s1110] sm:$0xff]
  %1112 = vmatprep.subr.mxu0 0.0
  %1113 = vmatpush1.msra.mxu0 %v26
  %1114 = vmatprep.subr.mxu0 0.0
  %1115 = vmatpush1.msra.mxu0 %v27
  %1116 = vmatprep.subr.mxu0 0.0
  %1117 = vmatpush1.msra.mxu0 %v28
  %1118 = vmatprep.subr.mxu0 0.0
  %1119 = vmatpush1.msra.mxu0 %v29
  %1120 = vmatprep.subr.mxu0 0.0
  %1121 = vmatpush1.msra.mxu0 %v30
  %1122 = vmatprep.subr.mxu0 0.0
  %1123 = vmatpush1.msra.mxu0 %v31
  %1124 = vmatprep.subr.mxu0 0.0
  %1125 = vmatpush1.msra.mxu0 %v32
  %1126 = vmatprep.subr.mxu0 0.0
  %1127 = vmatpush1.msra.mxu0 %v33
  %1128 = vmatprep.subr.mxu0 0.0
  %1129 = vmatpush1.msra.mxu0 %v34
  %1130 = vmatprep.subr.mxu0 0.0
  %1131 = vmatpush1.msra.mxu0 %v35
  %1132 = vmatprep.subr.mxu0 0.0
  %1133 = vmatpush1.msra.mxu0 %v36
  %1134 = vmatprep.subr.mxu0 0.0
  %1135 = vmatpush1.msra.mxu0 %v37
  %1136 = vmatprep.subr.mxu0 0.0
  %1137 = vmatpush1.msra.mxu0 %v38
  %1138 = vmatprep.subr.mxu0 0.0
  %1139 = vmatpush1.msra.mxu0 %v39
  %1140 = vmatprep.subr.mxu0 0.0
  %1141 = vmatpush1.msra.mxu0 %v40
  %1142 = vmatprep.subr.mxu0 0.0
  %1143 = vmatpush1.msra.mxu0 %v41
  %1144 = vmatprep.subr.mxu0 0.0
  %1145 = vmatpush1.msra.mxu0 0.0
  %1146 = vmatprep.subr.mxu0 0.0
  %1147 = vmatpush1.msra.mxu0 0.0
  %1148 = vmatprep.subr.mxu0 0.0
  %1149 = vmatpush1.msra.mxu0 0.0
  %1150 = vmatprep.subr.mxu0 0.0
  %1151 = vmatpush1.msra.mxu0 0.0
  %1152 = vmatprep.subr.mxu0 0.0
  %1153 = vmatpush1.msra.mxu0 0.0
  %1154 = vmatprep.subr.mxu0 0.0
  %1155 = vmatpush1.msra.mxu0 0.0
  %1156 = vmatprep.subr.mxu0 0.0
  %1157 = vmatpush1.msra.mxu0 0.0
  %1158 = vmatprep.subr.mxu0 0.0
  %1159 = vmatpush1.msra.mxu0 0.0
  %1160 = vmatprep.subr.mxu0 0.0
  %1161 = vmatpush1.msra.mxu0 0.0
  %1162 = vmatprep.subr.mxu0 0.0
  %1163 = vmatpush1.msra.mxu0 0.0
  %1164 = vmatprep.subr.mxu0 0.0
  %1165 = vmatpush1.msra.mxu0 0.0
  %1166 = vmatprep.subr.mxu0 0.0
  %1167 = vmatpush1.msra.mxu0 0.0
  %1168 = vmatprep.subr.mxu0 0.0
  %1169 = vmatpush1.msra.mxu0 0.0
  %1170 = vmatprep.subr.mxu0 0.0
  %1171 = vmatpush1.msra.mxu0 0.0
  %1172 = vmatprep.subr.mxu0 0.0
  %1173 = vmatpush1.msra.mxu0 0.0
  %1174 = vmatprep.subr.mxu0 0.0
  %1175 = vmatpush1.msra.mxu0 0.0
  %1176 = vmatprep.mubr.f32.mxu0 0.0
  %1177 = vmatmul.mubr.f32.gmra.mrb[0].mxu0 %v1107
  %v1178 = vpop.f32.mrb[0].mxu0
  %v1179 = vadd.f32 0.0, %v1178
  %v1180 = vpop.f32.mrb[0].mxu0
  %1181 = vdwg.mxu0
  %v1182 = vadd.f32 %v1111, %v1179
  %v1183 = vtanh.pop %v1182
  %v1184 = vmul.f32 %v24, %v1183
  %v1185 = vadd.f32 %v1184, %v25
  %1186 = vrot.lane.b32.xlu0 %v1185, 32
  %v1187 = vpop.permute.xlu0 %1186
  %1188 = vrot.lane.b32.xlu0 %v1185, 96
  %v1189 = vpop.permute.xlu0 %1188
  %v1190 = vmul.f32 %v1187, %v1189
  %v1191 = vmul.f32 %v1185, %v1103
  %v1192 = vadd.f32 %v1191, %v1190
  %1193 = vrot.lane.b32.xlu0 %v1185, 64
  %v1194 = vpop.permute.xlu0 %1193
  %v1195 = vtanh.pop %v1192
  %v1196 = vmul.f32 %v1194, %v1195
  %s1197 = scalar_lea.vmem [#allocation4], 96
  %1198 = vst [vmem:[%s1197] sm:$0xff] %v1196
  %s1199 = scalar_lea.vmem %s0, 104
  %v1200 = vld [vmem:[%s1199] sm:$0xff]
  %1201 = vmatprep.subr.mxu0 0.0
  %1202 = vmatpush1.msra.mxu0 %v26
  %1203 = vmatprep.subr.mxu0 0.0
  %1204 = vmatpush1.msra.mxu0 %v27
  %1205 = vmatprep.subr.mxu0 0.0
  %1206 = vmatpush1.msra.mxu0 %v28
  %1207 = vmatprep.subr.mxu0 0.0
  %1208 = vmatpush1.msra.mxu0 %v29
  %1209 = vmatprep.subr.mxu0 0.0
  %1210 = vmatpush1.msra.mxu0 %v30
  %1211 = vmatprep.subr.mxu0 0.0
  %1212 = vmatpush1.msra.mxu0 %v31
  %1213 = vmatprep.subr.mxu0 0.0
  %1214 = vmatpush1.msra.mxu0 %v32
  %1215 = vmatprep.subr.mxu0 0.0
  %1216 = vmatpush1.msra.mxu0 %v33
  %1217 = vmatprep.subr.mxu0 0.0
  %1218 = vmatpush1.msra.mxu0 %v34
  %1219 = vmatprep.subr.mxu0 0.0
  %1220 = vmatpush1.msra.mxu0 %v35
  %1221 = vmatprep.subr.mxu0 0.0
  %1222 = vmatpush1.msra.mxu0 %v36
  %1223 = vmatprep.subr.mxu0 0.0
  %1224 = vmatpush1.msra.mxu0 %v37
  %1225 = vmatprep.subr.mxu0 0.0
  %1226 = vmatpush1.msra.mxu0 %v38
  %1227 = vmatprep.subr.mxu0 0.0
  %1228 = vmatpush1.msra.mxu0 %v39
  %1229 = vmatprep.subr.mxu0 0.0
  %1230 = vmatpush1.msra.mxu0 %v40
  %1231 = vmatprep.subr.mxu0 0.0
  %1232 = vmatpush1.msra.mxu0 %v41
  %1233 = vmatprep.subr.mxu0 0.0
  %1234 = vmatpush1.msra.mxu0 0.0
  %1235 = vmatprep.subr.mxu0 0.0
  %1236 = vmatpush1.msra.mxu0 0.0
  %1237 = vmatprep.subr.mxu0 0.0
  %1238 = vmatpush1.msra.mxu0 0.0
  %1239 = vmatprep.subr.mxu0 0.0
  %1240 = vmatpush1.msra.mxu0 0.0
  %1241 = vmatprep.subr.mxu0 0.0
  %1242 = vmatpush1.msra.mxu0 0.0
  %1243 = vmatprep.subr.mxu0 0.0
  %1244 = vmatpush1.msra.mxu0 0.0
  %1245 = vmatprep.subr.mxu0 0.0
  %1246 = vmatpush1.msra.mxu0 0.0
  %1247 = vmatprep.subr.mxu0 0.0
  %1248 = vmatpush1.msra.mxu0 0.0
  %1249 = vmatprep.subr.mxu0 0.0
  %1250 = vmatpush1.msra.mxu0 0.0
  %1251 = vmatprep.subr.mxu0 0.0
  %1252 = vmatpush1.msra.mxu0 0.0
  %1253 = vmatprep.subr.mxu0 0.0
  %1254 = vmatpush1.msra.mxu0 0.0
  %1255 = vmatprep.subr.mxu0 0.0
  %1256 = vmatpush1.msra.mxu0 0.0
  %1257 = vmatprep.subr.mxu0 0.0
  %1258 = vmatpush1.msra.mxu0 0.0
  %1259 = vmatprep.subr.mxu0 0.0
  %1260 = vmatpush1.msra.mxu0 0.0
  %1261 = vmatprep.subr.mxu0 0.0
  %1262 = vmatpush1.msra.mxu0 0.0
  %1263 = vmatprep.subr.mxu0 0.0
  %1264 = vmatpush1.msra.mxu0 0.0
  %1265 = vmatprep.mubr.f32.mxu0 0.0
  %1266 = vmatmul.mubr.f32.gmra.mrb[0].mxu0 %v1196
  %v1267 = vpop.f32.mrb[0].mxu0
  %v1268 = vadd.f32 0.0, %v1267
  %v1269 = vpop.f32.mrb[0].mxu0
  %1270 = vdwg.mxu0
  %v1271 = vadd.f32 %v1200, %v1268
  %v1272 = vtanh.pop %v1271
  %v1273 = vmul.f32 %v24, %v1272
  %v1274 = vadd.f32 %v1273, %v25
  %1275 = vrot.lane.b32.xlu0 %v1274, 32
  %v1276 = vpop.permute.xlu0 %1275
  %1277 = vrot.lane.b32.xlu0 %v1274, 96
  %v1278 = vpop.permute.xlu0 %1277
  %v1279 = vmul.f32 %v1276, %v1278
  %v1280 = vmul.f32 %v1274, %v1192
  %v1281 = vadd.f32 %v1280, %v1279
  %1282 = vrot.lane.b32.xlu0 %v1274, 64
  %v1283 = vpop.permute.xlu0 %1282
  %v1284 = vtanh.pop %v1281
  %v1285 = vmul.f32 %v1283, %v1284
  %s1286 = scalar_lea.vmem [#allocation4], 104
  %1287 = vst [vmem:[%s1286] sm:$0xff] %v1285
  %s1288 = scalar_lea.vmem %s0, 112
  %v1289 = vld [vmem:[%s1288] sm:$0xff]
  %1290 = vmatprep.subr.mxu0 0.0
  %1291 = vmatpush1.msra.mxu0 %v26
  %1292 = vmatprep.subr.mxu0 0.0
  %1293 = vmatpush1.msra.mxu0 %v27
  %1294 = vmatprep.subr.mxu0 0.0
  %1295 = vmatpush1.msra.mxu0 %v28
  %1296 = vmatprep.subr.mxu0 0.0
  %1297 = vmatpush1.msra.mxu0 %v29
  %1298 = vmatprep.subr.mxu0 0.0
  %1299 = vmatpush1.msra.mxu0 %v30
  %1300 = vmatprep.subr.mxu0 0.0
  %1301 = vmatpush1.msra.mxu0 %v31
  %1302 = vmatprep.subr.mxu0 0.0
  %1303 = vmatpush1.msra.mxu0 %v32
  %1304 = vmatprep.subr.mxu0 0.0
  %1305 = vmatpush1.msra.mxu0 %v33
  %1306 = vmatprep.subr.mxu0 0.0
  %1307 = vmatpush1.msra.mxu0 %v34
  %1308 = vmatprep.subr.mxu0 0.0
  %1309 = vmatpush1.msra.mxu0 %v35
  %1310 = vmatprep.subr.mxu0 0.0
  %1311 = vmatpush1.msra.mxu0 %v36
  %1312 = vmatprep.subr.mxu0 0.0
  %1313 = vmatpush1.msra.mxu0 %v37
  %1314 = vmatprep.subr.mxu0 0.0
  %1315 = vmatpush1.msra.mxu0 %v38
  %1316 = vmatprep.subr.mxu0 0.0
  %1317 = vmatpush1.msra.mxu0 %v39
  %1318 = vmatprep.subr.mxu0 0.0
  %1319 = vmatpush1.msra.mxu0 %v40
  %1320 = vmatprep.subr.mxu0 0.0
  %1321 = vmatpush1.msra.mxu0 %v41
  %1322 = vmatprep.subr.mxu0 0.0
  %1323 = vmatpush1.msra.mxu0 0.0
  %1324 = vmatprep.subr.mxu0 0.0
  %1325 = vmatpush1.msra.mxu0 0.0
  %1326 = vmatprep.subr.mxu0 0.0
  %1327 = vmatpush1.msra.mxu0 0.0
  %1328 = vmatprep.subr.mxu0 0.0
  %1329 = vmatpush1.msra.mxu0 0.0
  %1330 = vmatprep.subr.mxu0 0.0
  %1331 = vmatpush1.msra.mxu0 0.0
  %1332 = vmatprep.subr.mxu0 0.0
  %1333 = vmatpush1.msra.mxu0 0.0
  %1334 = vmatprep.subr.mxu0 0.0
  %1335 = vmatpush1.msra.mxu0 0.0
  %1336 = vmatprep.subr.mxu0 0.0
  %1337 = vmatpush1.msra.mxu0 0.0
  %1338 = vmatprep.subr.mxu0 0.0
  %1339 = vmatpush1.msra.mxu0 0.0
  %1340 = vmatprep.subr.mxu0 0.0
  %1341 = vmatpush1.msra.mxu0 0.0
  %1342 = vmatprep.subr.mxu0 0.0
  %1343 = vmatpush1.msra.mxu0 0.0
  %1344 = vmatprep.subr.mxu0 0.0
  %1345 = vmatpush1.msra.mxu0 0.0
  %1346 = vmatprep.subr.mxu0 0.0
  %1347 = vmatpush1.msra.mxu0 0.0
  %1348 = vmatprep.subr.mxu0 0.0
  %1349 = vmatpush1.msra.mxu0 0.0
  %1350 = vmatprep.subr.mxu0 0.0
  %1351 = vmatpush1.msra.mxu0 0.0
  %1352 = vmatprep.subr.mxu0 0.0
  %1353 = vmatpush1.msra.mxu0 0.0
  %1354 = vmatprep.mubr.f32.mxu0 0.0
  %1355 = vmatmul.mubr.f32.gmra.mrb[0].mxu0 %v1285
  %v1356 = vpop.f32.mrb[0].mxu0
  %v1357 = vadd.f32 0.0, %v1356
  %v1358 = vpop.f32.mrb[0].mxu0
  %1359 = vdwg.mxu0
  %v1360 = vadd.f32 %v1289, %v1357
  %v1361 = vtanh.pop %v1360
  %v1362 = vmul.f32 %v24, %v1361
  %v1363 = vadd.f32 %v1362, %v25
  %1364 = vrot.lane.b32.xlu0 %v1363, 32
  %v1365 = vpop.permute.xlu0 %1364
  %1366 = vrot.lane.b32.xlu0 %v1363, 96
  %v1367 = vpop.permute.xlu0 %1366
  %v1368 = vmul.f32 %v1365, %v1367
  %v1369 = vmul.f32 %v1363, %v1281
  %v1370 = vadd.f32 %v1369, %v1368
  %1371 = vrot.lane.b32.xlu0 %v1363, 64
  %v1372 = vpop.permute.xlu0 %1371
  %v1373 = vtanh.pop %v1370
  %v1374 = vmul.f32 %v1372, %v1373
  %s1375 = scalar_lea.vmem [#allocation4], 112
  %1376 = vst [vmem:[%s1375] sm:$0xff] %v1374
  %s1377 = scalar_lea.vmem %s0, 120
  %v1378 = vld [vmem:[%s1377] sm:$0xff]
  %1379 = vmatprep.subr.mxu0 0.0
  %1380 = vmatpush1.msra.mxu0 %v26
  %1381 = vmatprep.subr.mxu0 0.0
  %1382 = vmatpush1.msra.mxu0 %v27
  %1383 = vmatprep.subr.mxu0 0.0
  %1384 = vmatpush1.msra.mxu0 %v28
  %1385 = vmatprep.subr.mxu0 0.0
  %1386 = vmatpush1.msra.mxu0 %v29
  %1387 = vmatprep.subr.mxu0 0.0
  %1388 = vmatpush1.msra.mxu0 %v30
  %1389 = vmatprep.subr.mxu0 0.0
  %1390 = vmatpush1.msra.mxu0 %v31
  %1391 = vmatprep.subr.mxu0 0.0
  %1392 = vmatpush1.msra.mxu0 %v32
  %1393 = vmatprep.subr.mxu0 0.0
  %1394 = vmatpush1.msra.mxu0 %v33
  %1395 = vmatprep.subr.mxu0 0.0
  %1396 = vmatpush1.msra.mxu0 %v34
  %1397 = vmatprep.subr.mxu0 0.0
  %1398 = vmatpush1.msra.mxu0 %v35
  %1399 = vmatprep.subr.mxu0 0.0
  %1400 = vmatpush1.msra.mxu0 %v36
  %1401 = vmatprep.subr.mxu0 0.0
  %1402 = vmatpush1.msra.mxu0 %v37
  %1403 = vmatprep.subr.mxu0 0.0
  %1404 = vmatpush1.msra.mxu0 %v38
  %1405 = vmatprep.subr.mxu0 0.0
  %1406 = vmatpush1.msra.mxu0 %v39
  %1407 = vmatprep.subr.mxu0 0.0
  %1408 = vmatpush1.msra.mxu0 %v40
  %1409 = vmatprep.subr.mxu0 0.0
  %1410 = vmatpush1.msra.mxu0 %v41
  %1411 = vmatprep.subr.mxu0 0.0
  %1412 = vmatpush1.msra.mxu0 0.0
  %1413 = vmatprep.subr.mxu0 0.0
  %1414 = vmatpush1.msra.mxu0 0.0
  %1415 = vmatprep.subr.mxu0 0.0
  %1416 = vmatpush1.msra.mxu0 0.0
  %1417 = vmatprep.subr.mxu0 0.0
  %1418 = vmatpush1.msra.mxu0 0.0
  %1419 = vmatprep.subr.mxu0 0.0
  %1420 = vmatpush1.msra.mxu0 0.0
  %1421 = vmatprep.subr.mxu0 0.0
  %1422 = vmatpush1.msra.mxu0 0.0
  %1423 = vmatprep.subr.mxu0 0.0
  %1424 = vmatpush1.msra.mxu0 0.0
  %1425 = vmatprep.subr.mxu0 0.0
  %1426 = vmatpush1.msra.mxu0 0.0
  %1427 = vmatprep.subr.mxu0 0.0
  %1428 = vmatpush1.msra.mxu0 0.0
  %1429 = vmatprep.subr.mxu0 0.0
  %1430 = vmatpush1.msra.mxu0 0.0
  %1431 = vmatprep.subr.mxu0 0.0
  %1432 = vmatpush1.msra.mxu0 0.0
  %1433 = vmatprep.subr.mxu0 0.0
  %1434 = vmatpush1.msra.mxu0 0.0
  %1435 = vmatprep.subr.mxu0 0.0
  %1436 = vmatpush1.msra.mxu0 0.0
  %1437 = vmatprep.subr.mxu0 0.0
  %1438 = vmatpush1.msra.mxu0 0.0
  %1439 = vmatprep.subr.mxu0 0.0
  %1440 = vmatpush1.msra.mxu0 0.0
  %1441 = vmatprep.subr.mxu0 0.0
  %1442 = vmatpush1.msra.mxu0 0.0
  %1443 = vmatprep.mubr.f32.mxu0 0.0
  %1444 = vmatmul.mubr.f32.gmra.mrb[0].mxu0 %v1374
  %v1445 = vpop.f32.mrb[0].mxu0
  %v1446 = vadd.f32 0.0, %v1445
  %v1447 = vpop.f32.mrb[0].mxu0
  %1448 = vdwg.mxu0
  %v1449 = vadd.f32 %v1378, %v1446
  %v1450 = vtanh.pop %v1449
  %v1451 = vmul.f32 %v24, %v1450
  %v1452 = vadd.f32 %v1451, %v25
  %1453 = vrot.lane.b32.xlu0 %v1452, 32
  %v1454 = vpop.permute.xlu0 %1453
  %1455 = vrot.lane.b32.xlu0 %v1452, 96
  %v1456 = vpop.permute.xlu0 %1455
  %v1457 = vmul.f32 %v1454, %v1456
  %v1458 = vmul.f32 %v1452, %v1370
  %v1459 = vadd.f32 %v1458, %v1457
  %1460 = vrot.lane.b32.xlu0 %v1452, 64
  %v1461 = vpop.permute.xlu0 %1460
  %v1462 = vtanh.pop %v1459
  %v1463 = vmul.f32 %v1461, %v1462
  %s1464 = scalar_lea.vmem [#allocation4], 120
  %1465 = vst [vmem:[%s1464] sm:$0xff] %v1463
  %s1466 = scalar_lea.vmem %s0, 128
  %v1467 = vld [vmem:[%s1466] sm:$0xff]
  %1468 = vmatprep.subr.mxu0 0.0
  %1469 = vmatpush1.msra.mxu0 %v26
  %1470 = vmatprep.subr.mxu0 0.0
  %1471 = vmatpush1.msra.mxu0 %v27
  %1472 = vmatprep.subr.mxu0 0.0
  %1473 = vmatpush1.msra.mxu0 %v28
  %1474 = vmatprep.subr.mxu0 0.0
  %1475 = vmatpush1.msra.mxu0 %v29
  %1476 = vmatprep.subr.mxu0 0.0
  %1477 = vmatpush1.msra.mxu0 %v30
  %1478 = vmatprep.subr.mxu0 0.0
  %1479 = vmatpush1.msra.mxu0 %v31
  %1480 = vmatprep.subr.mxu0 0.0
  %1481 = vmatpush1.msra.mxu0 %v32
  %1482 = vmatprep.subr.mxu0 0.0
  %1483 = vmatpush1.msra.mxu0 %v33
  %1484 = vmatprep.subr.mxu0 0.0
  %1485 = vmatpush1.msra.mxu0 %v34
  %1486 = vmatprep.subr.mxu0 0.0
  %1487 = vmatpush1.msra.mxu0 %v35
  %1488 = vmatprep.subr.mxu0 0.0
  %1489 = vmatpush1.msra.mxu0 %v36
  %1490 = vmatprep.subr.mxu0 0.0
  %1491 = vmatpush1.msra.mxu0 %v37
  %1492 = vmatprep.subr.mxu0 0.0
  %1493 = vmatpush1.msra.mxu0 %v38
  %1494 = vmatprep.subr.mxu0 0.0
  %1495 = vmatpush1.msra.mxu0 %v39
  %1496 = vmatprep.subr.mxu0 0.0
  %1497 = vmatpush1.msra.mxu0 %v40
  %1498 = vmatprep.subr.mxu0 0.0
  %1499 = vmatpush1.msra.mxu0 %v41
  %1500 = vmatprep.subr.mxu0 0.0
  %1501 = vmatpush1.msra.mxu0 0.0
  %1502 = vmatprep.subr.mxu0 0.0
  %1503 = vmatpush1.msra.mxu0 0.0
  %1504 = vmatprep.subr.mxu0 0.0
  %1505 = vmatpush1.msra.mxu0 0.0
  %1506 = vmatprep.subr.mxu0 0.0
  %1507 = vmatpush1.msra.mxu0 0.0
  %1508 = vmatprep.subr.mxu0 0.0
  %1509 = vmatpush1.msra.mxu0 0.0
  %1510 = vmatprep.subr.mxu0 0.0
  %1511 = vmatpush1.msra.mxu0 0.0
  %1512 = vmatprep.subr.mxu0 0.0
  %1513 = vmatpush1.msra.mxu0 0.0
  %1514 = vmatprep.subr.mxu0 0.0
  %1515 = vmatpush1.msra.mxu0 0.0
  %1516 = vmatprep.subr.mxu0 0.0
  %1517 = vmatpush1.msra.mxu0 0.0
  %1518 = vmatprep.subr.mxu0 0.0
  %1519 = vmatpush1.msra.mxu0 0.0
  %1520 = vmatprep.subr.mxu0 0.0
  %1521 = vmatpush1.msra.mxu0 0.0
  %1522 = vmatprep.subr.mxu0 0.0
  %1523 = vmatpush1.msra.mxu0 0.0
  %1524 = vmatprep.subr.mxu0 0.0
  %1525 = vmatpush1.msra.mxu0 0.0
  %1526 = vmatprep.subr.mxu0 0.0
  %1527 = vmatpush1.msra.mxu0 0.0
  %1528 = vmatprep.subr.mxu0 0.0
  %1529 = vmatpush1.msra.mxu0 0.0
  %1530 = vmatprep.subr.mxu0 0.0
  %1531 = vmatpush1.msra.mxu0 0.0
  %1532 = vmatprep.mubr.f32.mxu0 0.0
  %1533 = vmatmul.mubr.f32.gmra.mrb[0].mxu0 %v1463
  %v1534 = vpop.f32.mrb[0].mxu0
  %v1535 = vadd.f32 0.0, %v1534
  %v1536 = vpop.f32.mrb[0].mxu0
  %1537 = vdwg.mxu0
  %v1538 = vadd.f32 %v1467, %v1535
  %v1539 = vtanh.pop %v1538
  %v1540 = vmul.f32 %v24, %v1539
  %v1541 = vadd.f32 %v1540, %v25
  %1542 = vrot.lane.b32.xlu0 %v1541, 32
  %v1543 = vpop.permute.xlu0 %1542
  %1544 = vrot.lane.b32.xlu0 %v1541, 96
  %v1545 = vpop.permute.xlu0 %1544
  %v1546 = vmul.f32 %v1543, %v1545
  %v1547 = vmul.f32 %v1541, %v1459
  %v1548 = vadd.f32 %v1547, %v1546
  %1549 = vrot.lane.b32.xlu0 %v1541, 64
  %v1550 = vpop.permute.xlu0 %1549
  %v1551 = vtanh.pop %v1548
  %v1552 = vmul.f32 %v1550, %v1551
  %s1553 = scalar_lea.vmem [#allocation4], 128
  %1554 = vst [vmem:[%s1553] sm:$0xff] %v1552
  %s1555 = scalar_lea.vmem %s0, 136
  %v1556 = vld [vmem:[%s1555] sm:$0xff]
  %1557 = vmatprep.subr.mxu0 0.0
  %1558 = vmatpush1.msra.mxu0 %v26
  %1559 = vmatprep.subr.mxu0 0.0
  %1560 = vmatpush1.msra.mxu0 %v27
  %1561 = vmatprep.subr.mxu0 0.0
  %1562 = vmatpush1.msra.mxu0 %v28
  %1563 = vmatprep.subr.mxu0 0.0
  %1564 = vmatpush1.msra.mxu0 %v29
  %1565 = vmatprep.subr.mxu0 0.0
  %1566 = vmatpush1.msra.mxu0 %v30
  %1567 = vmatprep.subr.mxu0 0.0
  %1568 = vmatpush1.msra.mxu0 %v31
  %1569 = vmatprep.subr.mxu0 0.0
  %1570 = vmatpush1.msra.mxu0 %v32
  %1571 = vmatprep.subr.mxu0 0.0
  %1572 = vmatpush1.msra.mxu0 %v33
  %1573 = vmatprep.subr.mxu0 0.0
  %1574 = vmatpush1.msra.mxu0 %v34
  %1575 = vmatprep.subr.mxu0 0.0
  %1576 = vmatpush1.msra.mxu0 %v35
  %1577 = vmatprep.subr.mxu0 0.0
  %1578 = vmatpush1.msra.mxu0 %v36
  %1579 = vmatprep.subr.mxu0 0.0
  %1580 = vmatpush1.msra.mxu0 %v37
  %1581 = vmatprep.subr.mxu0 0.0
  %1582 = vmatpush1.msra.mxu0 %v38
  %1583 = vmatprep.subr.mxu0 0.0
  %1584 = vmatpush1.msra.mxu0 %v39
  %1585 = vmatprep.subr.mxu0 0.0
  %1586 = vmatpush1.msra.mxu0 %v40
  %1587 = vmatprep.subr.mxu0 0.0
  %1588 = vmatpush1.msra.mxu0 %v41
  %1589 = vmatprep.subr.mxu0 0.0
  %1590 = vmatpush1.msra.mxu0 0.0
  %1591 = vmatprep.subr.mxu0 0.0
  %1592 = vmatpush1.msra.mxu0 0.0
  %1593 = vmatprep.subr.mxu0 0.0
  %1594 = vmatpush1.msra.mxu0 0.0
  %1595 = vmatprep.subr.mxu0 0.0
  %1596 = vmatpush1.msra.mxu0 0.0
  %1597 = vmatprep.subr.mxu0 0.0
  %1598 = vmatpush1.msra.mxu0 0.0
  %1599 = vmatprep.subr.mxu0 0.0
  %1600 = vmatpush1.msra.mxu0 0.0
  %1601 = vmatprep.subr.mxu0 0.0
  %1602 = vmatpush1.msra.mxu0 0.0
  %1603 = vmatprep.subr.mxu0 0.0
  %1604 = vmatpush1.msra.mxu0 0.0
  %1605 = vmatprep.subr.mxu0 0.0
  %1606 = vmatpush1.msra.mxu0 0.0
  %1607 = vmatprep.subr.mxu0 0.0
  %1608 = vmatpush1.msra.mxu0 0.0
  %1609 = vmatprep.subr.mxu0 0.0
  %1610 = vmatpush1.msra.mxu0 0.0
  %1611 = vmatprep.subr.mxu0 0.0
  %1612 = vmatpush1.msra.mxu0 0.0
  %1613 = vmatprep.subr.mxu0 0.0
  %1614 = vmatpush1.msra.mxu0 0.0
  %1615 = vmatprep.subr.mxu0 0.0
  %1616 = vmatpush1.msra.mxu0 0.0
  %1617 = vmatprep.subr.mxu0 0.0
  %1618 = vmatpush1.msra.mxu0 0.0
  %1619 = vmatprep.subr.mxu0 0.0
  %1620 = vmatpush1.msra.mxu0 0.0
  %1621 = vmatprep.mubr.f32.mxu0 0.0
  %1622 = vmatmul.mubr.f32.gmra.mrb[0].mxu0 %v1552
  %v1623 = vpop.f32.mrb[0].mxu0
  %v1624 = vadd.f32 0.0, %v1623
  %v1625 = vpop.f32.mrb[0].mxu0
  %1626 = vdwg.mxu0
  %v1627 = vadd.f32 %v1556, %v1624
  %v1628 = vtanh.pop %v1627
  %v1629 = vmul.f32 %v24, %v1628
  %v1630 = vadd.f32 %v1629, %v25
  %1631 = vrot.lane.b32.xlu0 %v1630, 32
  %v1632 = vpop.permute.xlu0 %1631
  %1633 = vrot.lane.b32.xlu0 %v1630, 96
  %v1634 = vpop.permute.xlu0 %1633
  %v1635 = vmul.f32 %v1632, %v1634
  %v1636 = vmul.f32 %v1630, %v1548
  %v1637 = vadd.f32 %v1636, %v1635
  %1638 = vrot.lane.b32.xlu0 %v1630, 64
  %v1639 = vpop.permute.xlu0 %1638
  %v1640 = vtanh.pop %v1637
  %v1641 = vmul.f32 %v1639, %v1640
  %s1642 = scalar_lea.vmem [#allocation4], 136
  %1643 = vst [vmem:[%s1642] sm:$0xff] %v1641
  %s1644 = scalar_lea.vmem %s0, 144
  %v1645 = vld [vmem:[%s1644] sm:$0xff]
  %1646 = vmatprep.subr.mxu0 0.0
  %1647 = vmatpush1.msra.mxu0 %v26
  %1648 = vmatprep.subr.mxu0 0.0
  %1649 = vmatpush1.msra.mxu0 %v27
  %1650 = vmatprep.subr.mxu0 0.0
  %1651 = vmatpush1.msra.mxu0 %v28
  %1652 = vmatprep.subr.mxu0 0.0
  %1653 = vmatpush1.msra.mxu0 %v29
  %1654 = vmatprep.subr.mxu0 0.0
  %1655 = vmatpush1.msra.mxu0 %v30
  %1656 = vmatprep.subr.mxu0 0.0
  %1657 = vmatpush1.msra.mxu0 %v31
  %1658 = vmatprep.subr.mxu0 0.0
  %1659 = vmatpush1.msra.mxu0 %v32
  %1660 = vmatprep.subr.mxu0 0.0
  %1661 = vmatpush1.msra.mxu0 %v33
  %1662 = vmatprep.subr.mxu0 0.0
  %1663 = vmatpush1.msra.mxu0 %v34
  %1664 = vmatprep.subr.mxu0 0.0
  %1665 = vmatpush1.msra.mxu0 %v35
  %1666 = vmatprep.subr.mxu0 0.0
  %1667 = vmatpush1.msra.mxu0 %v36
  %1668 = vmatprep.subr.mxu0 0.0
  %1669 = vmatpush1.msra.mxu0 %v37
  %1670 = vmatprep.subr.mxu0 0.0
  %1671 = vmatpush1.msra.mxu0 %v38
  %1672 = vmatprep.subr.mxu0 0.0
  %1673 = vmatpush1.msra.mxu0 %v39
  %1674 = vmatprep.subr.mxu0 0.0
  %1675 = vmatpush1.msra.mxu0 %v40
  %1676 = vmatprep.subr.mxu0 0.0
  %1677 = vmatpush1.msra.mxu0 %v41
  %1678 = vmatprep.subr.mxu0 0.0
  %1679 = vmatpush1.msra.mxu0 0.0
  %1680 = vmatprep.subr.mxu0 0.0
  %1681 = vmatpush1.msra.mxu0 0.0
  %1682 = vmatprep.subr.mxu0 0.0
  %1683 = vmatpush1.msra.mxu0 0.0
  %1684 = vmatprep.subr.mxu0 0.0
  %1685 = vmatpush1.msra.mxu0 0.0
  %1686 = vmatprep.subr.mxu0 0.0
  %1687 = vmatpush1.msra.mxu0 0.0
  %1688 = vmatprep.subr.mxu0 0.0
  %1689 = vmatpush1.msra.mxu0 0.0
  %1690 = vmatprep.subr.mxu0 0.0
  %1691 = vmatpush1.msra.mxu0 0.0
  %1692 = vmatprep.subr.mxu0 0.0
  %1693 = vmatpush1.msra.mxu0 0.0
  %1694 = vmatprep.subr.mxu0 0.0
  %1695 = vmatpush1.msra.mxu0 0.0
  %1696 = vmatprep.subr.mxu0 0.0
  %1697 = vmatpush1.msra.mxu0 0.0
  %1698 = vmatprep.subr.mxu0 0.0
  %1699 = vmatpush1.msra.mxu0 0.0
  %1700 = vmatprep.subr.mxu0 0.0
  %1701 = vmatpush1.msra.mxu0 0.0
  %1702 = vmatprep.subr.mxu0 0.0
  %1703 = vmatpush1.msra.mxu0 0.0
  %1704 = vmatprep.subr.mxu0 0.0
  %1705 = vmatpush1.msra.mxu0 0.0
  %1706 = vmatprep.subr.mxu0 0.0
  %1707 = vmatpush1.msra.mxu0 0.0
  %1708 = vmatprep.subr.mxu0 0.0
  %1709 = vmatpush1.msra.mxu0 0.0
  %1710 = vmatprep.mubr.f32.mxu0 0.0
  %1711 = vmatmul.mubr.f32.gmra.mrb[0].mxu0 %v1641
  %v1712 = vpop.f32.mrb[0].mxu0
  %v1713 = vadd.f32 0.0, %v1712
  %v1714 = vpop.f32.mrb[0].mxu0
  %1715 = vdwg.mxu0
  %v1716 = vadd.f32 %v1645, %v1713
  %v1717 = vtanh.pop %v1716
  %v1718 = vmul.f32 %v24, %v1717
  %v1719 = vadd.f32 %v1718, %v25
  %1720 = vrot.lane.b32.xlu0 %v1719, 32
  %v1721 = vpop.permute.xlu0 %1720
  %1722 = vrot.lane.b32.xlu0 %v1719, 96
  %v1723 = vpop.permute.xlu0 %1722
  %v1724 = vmul.f32 %v1721, %v1723
  %v1725 = vmul.f32 %v1719, %v1637
  %v1726 = vadd.f32 %v1725, %v1724
  %1727 = vrot.lane.b32.xlu0 %v1719, 64
  %v1728 = vpop.permute.xlu0 %1727
  %v1729 = vtanh.pop %v1726
  %v1730 = vmul.f32 %v1728, %v1729
  %s1731 = scalar_lea.vmem [#allocation4], 144
  %1732 = vst [vmem:[%s1731] sm:$0xff] %v1730
  %s1733 = scalar_lea.vmem %s0, 152
  %v1734 = vld [vmem:[%s1733] sm:$0xff]
  %1735 = vmatprep.subr.mxu0 0.0
  %1736 = vmatpush1.msra.mxu0 %v26
  %1737 = vmatprep.subr.mxu0 0.0
  %1738 = vmatpush1.msra.mxu0 %v27
  %1739 = vmatprep.subr.mxu0 0.0
  %1740 = vmatpush1.msra.mxu0 %v28
  %1741 = vmatprep.subr.mxu0 0.0
  %1742 = vmatpush1.msra.mxu0 %v29
  %1743 = vmatprep.subr.mxu0 0.0
  %1744 = vmatpush1.msra.mxu0 %v30
  %1745 = vmatprep.subr.mxu0 0.0
  %1746 = vmatpush1.msra.mxu0 %v31
  %1747 = vmatprep.subr.mxu0 0.0
  %1748 = vmatpush1.msra.mxu0 %v32
  %1749 = vmatprep.subr.mxu0 0.0
  %1750 = vmatpush1.msra.mxu0 %v33
  %1751 = vmatprep.subr.mxu0 0.0
  %1752 = vmatpush1.msra.mxu0 %v34
  %1753 = vmatprep.subr.mxu0 0.0
  %1754 = vmatpush1.msra.mxu0 %v35
  %1755 = vmatprep.subr.mxu0 0.0
  %1756 = vmatpush1.msra.mxu0 %v36
  %1757 = vmatprep.subr.mxu0 0.0
  %1758 = vmatpush1.msra.mxu0 %v37
  %1759 = vmatprep.subr.mxu0 0.0
  %1760 = vmatpush1.msra.mxu0 %v38
  %1761 = vmatprep.subr.mxu0 0.0
  %1762 = vmatpush1.msra.mxu0 %v39
  %1763 = vmatprep.subr.mxu0 0.0
  %1764 = vmatpush1.msra.mxu0 %v40
  %1765 = vmatprep.subr.mxu0 0.0
  %1766 = vmatpush1.msra.mxu0 %v41
  %1767 = vmatprep.subr.mxu0 0.0
  %1768 = vmatpush1.msra.mxu0 0.0
  %1769 = vmatprep.subr.mxu0 0.0
  %1770 = vmatpush1.msra.mxu0 0.0
  %1771 = vmatprep.subr.mxu0 0.0
  %1772 = vmatpush1.msra.mxu0 0.0
  %1773 = vmatprep.subr.mxu0 0.0
  %1774 = vmatpush1.msra.mxu0 0.0
  %1775 = vmatprep.subr.mxu0 0.0
  %1776 = vmatpush1.msra.mxu0 0.0
  %1777 = vmatprep.subr.mxu0 0.0
  %1778 = vmatpush1.msra.mxu0 0.0
  %1779 = vmatprep.subr.mxu0 0.0
  %1780 = vmatpush1.msra.mxu0 0.0
  %1781 = vmatprep.subr.mxu0 0.0
  %1782 = vmatpush1.msra.mxu0 0.0
  %1783 = vmatprep.subr.mxu0 0.0
  %1784 = vmatpush1.msra.mxu0 0.0
  %1785 = vmatprep.subr.mxu0 0.0
  %1786 = vmatpush1.msra.mxu0 0.0
  %1787 = vmatprep.subr.mxu0 0.0
  %1788 = vmatpush1.msra.mxu0 0.0
  %1789 = vmatprep.subr.mxu0 0.0
  %1790 = vmatpush1.msra.mxu0 0.0
  %1791 = vmatprep.subr.mxu0 0.0
  %1792 = vmatpush1.msra.mxu0 0.0
  %1793 = vmatprep.subr.mxu0 0.0
  %1794 = vmatpush1.msra.mxu0 0.0
  %1795 = vmatprep.subr.mxu0 0.0
  %1796 = vmatpush1.msra.mxu0 0.0
  %1797 = vmatprep.subr.mxu0 0.0
  %1798 = vmatpush1.msra.mxu0 0.0
  %1799 = vmatprep.mubr.f32.mxu0 0.0
  %1800 = vmatmul.mubr.f32.gmra.mrb[0].mxu0 %v1730
  %v1801 = vpop.f32.mrb[0].mxu0
  %v1802 = vadd.f32 0.0, %v1801
  %v1803 = vpop.f32.mrb[0].mxu0
  %1804 = vdwg.mxu0
  %v1805 = vadd.f32 %v1734, %v1802
  %v1806 = vtanh.pop %v1805
  %v1807 = vmul.f32 %v24, %v1806
  %v1808 = vadd.f32 %v1807, %v25
  %1809 = vrot.lane.b32.xlu0 %v1808, 32
  %v1810 = vpop.permute.xlu0 %1809
  %1811 = vrot.lane.b32.xlu0 %v1808, 96
  %v1812 = vpop.permute.xlu0 %1811
  %v1813 = vmul.f32 %v1810, %v1812
  %v1814 = vmul.f32 %v1808, %v1726
  %v1815 = vadd.f32 %v1814, %v1813
  %1816 = vrot.lane.b32.xlu0 %v1808, 64
  %v1817 = vpop.permute.xlu0 %1816
  %v1818 = vtanh.pop %v1815
  %v1819 = vmul.f32 %v1817, %v1818
  %s1820 = scalar_lea.vmem [#allocation4], 152
  %1821 = vst [vmem:[%s1820] sm:$0xff] %v1819
  %s1822 = scalar_lea.vmem %s0, 160
  %v1823 = vld [vmem:[%s1822] sm:$0xff]
  %1824 = vmatprep.subr.mxu0 0.0
  %1825 = vmatpush1.msra.mxu0 %v26
  %1826 = vmatprep.subr.mxu0 0.0
  %1827 = vmatpush1.msra.mxu0 %v27
  %1828 = vmatprep.subr.mxu0 0.0
  %1829 = vmatpush1.msra.mxu0 %v28
  %1830 = vmatprep.subr.mxu0 0.0
  %1831 = vmatpush1.msra.mxu0 %v29
  %1832 = vmatprep.subr.mxu0 0.0
  %1833 = vmatpush1.msra.mxu0 %v30
  %1834 = vmatprep.subr.mxu0 0.0
  %1835 = vmatpush1.msra.mxu0 %v31
  %1836 = vmatprep.subr.mxu0 0.0
  %1837 = vmatpush1.msra.mxu0 %v32
  %1838 = vmatprep.subr.mxu0 0.0
  %1839 = vmatpush1.msra.mxu0 %v33
  %1840 = vmatprep.subr.mxu0 0.0
  %1841 = vmatpush1.msra.mxu0 %v34
  %1842 = vmatprep.subr.mxu0 0.0
  %1843 = vmatpush1.msra.mxu0 %v35
  %1844 = vmatprep.subr.mxu0 0.0
  %1845 = vmatpush1.msra.mxu0 %v36
  %1846 = vmatprep.subr.mxu0 0.0
  %1847 = vmatpush1.msra.mxu0 %v37
  %1848 = vmatprep.subr.mxu0 0.0
  %1849 = vmatpush1.msra.mxu0 %v38
  %1850 = vmatprep.subr.mxu0 0.0
  %1851 = vmatpush1.msra.mxu0 %v39
  %1852 = vmatprep.subr.mxu0 0.0
  %1853 = vmatpush1.msra.mxu0 %v40
  %1854 = vmatprep.subr.mxu0 0.0
  %1855 = vmatpush1.msra.mxu0 %v41
  %1856 = vmatprep.subr.mxu0 0.0
  %1857 = vmatpush1.msra.mxu0 0.0
  %1858 = vmatprep.subr.mxu0 0.0
  %1859 = vmatpush1.msra.mxu0 0.0
  %1860 = vmatprep.subr.mxu0 0.0
  %1861 = vmatpush1.msra.mxu0 0.0
  %1862 = vmatprep.subr.mxu0 0.0
  %1863 = vmatpush1.msra.mxu0 0.0
  %1864 = vmatprep.subr.mxu0 0.0
  %1865 = vmatpush1.msra.mxu0 0.0
  %1866 = vmatprep.subr.mxu0 0.0
  %1867 = vmatpush1.msra.mxu0 0.0
  %1868 = vmatprep.subr.mxu0 0.0
  %1869 = vmatpush1.msra.mxu0 0.0
  %1870 = vmatprep.subr.mxu0 0.0
  %1871 = vmatpush1.msra.mxu0 0.0
  %1872 = vmatprep.subr.mxu0 0.0
  %1873 = vmatpush1.msra.mxu0 0.0
  %1874 = vmatprep.subr.mxu0 0.0
  %1875 = vmatpush1.msra.mxu0 0.0
  %1876 = vmatprep.subr.mxu0 0.0
  %1877 = vmatpush1.msra.mxu0 0.0
  %1878 = vmatprep.subr.mxu0 0.0
  %1879 = vmatpush1.msra.mxu0 0.0
  %1880 = vmatprep.subr.mxu0 0.0
  %1881 = vmatpush1.msra.mxu0 0.0
  %1882 = vmatprep.subr.mxu0 0.0
  %1883 = vmatpush1.msra.mxu0 0.0
  %1884 = vmatprep.subr.mxu0 0.0
  %1885 = vmatpush1.msra.mxu0 0.0
  %1886 = vmatprep.subr.mxu0 0.0
  %1887 = vmatpush1.msra.mxu0 0.0
  %1888 = vmatprep.mubr.f32.mxu0 0.0
  %1889 = vmatmul.mubr.f32.gmra.mrb[0].mxu0 %v1819
  %v1890 = vpop.f32.mrb[0].mxu0
  %v1891 = vadd.f32 0.0, %v1890
  %v1892 = vpop.f32.mrb[0].mxu0
  %1893 = vdwg.mxu0
  %v1894 = vadd.f32 %v1823, %v1891
  %v1895 = vtanh.pop %v1894
  %v1896 = vmul.f32 %v24, %v1895
  %v1897 = vadd.f32 %v1896, %v25
  %1898 = vrot.lane.b32.xlu0 %v1897, 32
  %v1899 = vpop.permute.xlu0 %1898
  %1900 = vrot.lane.b32.xlu0 %v1897, 96
  %v1901 = vpop.permute.xlu0 %1900
  %v1902 = vmul.f32 %v1899, %v1901
  %v1903 = vmul.f32 %v1897, %v1815
  %v1904 = vadd.f32 %v1903, %v1902
  %1905 = vrot.lane.b32.xlu0 %v1897, 64
  %v1906 = vpop.permute.xlu0 %1905
  %v1907 = vtanh.pop %v1904
  %v1908 = vmul.f32 %v1906, %v1907
  %s1909 = scalar_lea.vmem [#allocation4], 160
  %1910 = vst [vmem:[%s1909] sm:$0xff] %v1908
  %s1911 = scalar_lea.vmem %s0, 168
  %v1912 = vld [vmem:[%s1911] sm:$0xff]
  %1913 = vmatprep.subr.mxu0 0.0
  %1914 = vmatpush1.msra.mxu0 %v26
  %1915 = vmatprep.subr.mxu0 0.0
  %1916 = vmatpush1.msra.mxu0 %v27
  %1917 = vmatprep.subr.mxu0 0.0
  %1918 = vmatpush1.msra.mxu0 %v28
  %1919 = vmatprep.subr.mxu0 0.0
  %1920 = vmatpush1.msra.mxu0 %v29
  %1921 = vmatprep.subr.mxu0 0.0
  %1922 = vmatpush1.msra.mxu0 %v30
  %1923 = vmatprep.subr.mxu0 0.0
  %1924 = vmatpush1.msra.mxu0 %v31
  %1925 = vmatprep.subr.mxu0 0.0
  %1926 = vmatpush1.msra.mxu0 %v32
  %1927 = vmatprep.subr.mxu0 0.0
  %1928 = vmatpush1.msra.mxu0 %v33
  %1929 = vmatprep.subr.mxu0 0.0
  %1930 = vmatpush1.msra.mxu0 %v34
  %1931 = vmatprep.subr.mxu0 0.0
  %1932 = vmatpush1.msra.mxu0 %v35
  %1933 = vmatprep.subr.mxu0 0.0
  %1934 = vmatpush1.msra.mxu0 %v36
  %1935 = vmatprep.subr.mxu0 0.0
  %1936 = vmatpush1.msra.mxu0 %v37
  %1937 = vmatprep.subr.mxu0 0.0
  %1938 = vmatpush1.msra.mxu0 %v38
  %1939 = vmatprep.subr.mxu0 0.0
  %1940 = vmatpush1.msra.mxu0 %v39
  %1941 = vmatprep.subr.mxu0 0.0
  %1942 = vmatpush1.msra.mxu0 %v40
  %1943 = vmatprep.subr.mxu0 0.0
  %1944 = vmatpush1.msra.mxu0 %v41
  %1945 = vmatprep.subr.mxu0 0.0
  %1946 = vmatpush1.msra.mxu0 0.0
  %1947 = vmatprep.subr.mxu0 0.0
  %1948 = vmatpush1.msra.mxu0 0.0
  %1949 = vmatprep.subr.mxu0 0.0
  %1950 = vmatpush1.msra.mxu0 0.0
  %1951 = vmatprep.subr.mxu0 0.0
  %1952 = vmatpush1.msra.mxu0 0.0
  %1953 = vmatprep.subr.mxu0 0.0
  %1954 = vmatpush1.msra.mxu0 0.0
  %1955 = vmatprep.subr.mxu0 0.0
  %1956 = vmatpush1.msra.mxu0 0.0
  %1957 = vmatprep.subr.mxu0 0.0
  %1958 = vmatpush1.msra.mxu0 0.0
  %1959 = vmatprep.subr.mxu0 0.0
  %1960 = vmatpush1.msra.mxu0 0.0
  %1961 = vmatprep.subr.mxu0 0.0
  %1962 = vmatpush1.msra.mxu0 0.0
  %1963 = vmatprep.subr.mxu0 0.0
  %1964 = vmatpush1.msra.mxu0 0.0
  %1965 = vmatprep.subr.mxu0 0.0
  %1966 = vmatpush1.msra.mxu0 0.0
  %1967 = vmatprep.subr.mxu0 0.0
  %1968 = vmatpush1.msra.mxu0 0.0
  %1969 = vmatprep.subr.mxu0 0.0
  %1970 = vmatpush1.msra.mxu0 0.0
  %1971 = vmatprep.subr.mxu0 0.0
  %1972 = vmatpush1.msra.mxu0 0.0
  %1973 = vmatprep.subr.mxu0 0.0
  %1974 = vmatpush1.msra.mxu0 0.0
  %1975 = vmatprep.subr.mxu0 0.0
  %1976 = vmatpush1.msra.mxu0 0.0
  %1977 = vmatprep.mubr.f32.mxu0 0.0
  %1978 = vmatmul.mubr.f32.gmra.mrb[0].mxu0 %v1908
  %v1979 = vpop.f32.mrb[0].mxu0
  %v1980 = vadd.f32 0.0, %v1979
  %v1981 = vpop.f32.mrb[0].mxu0
  %1982 = vdwg.mxu0
  %v1983 = vadd.f32 %v1912, %v1980
  %v1984 = vtanh.pop %v1983
  %v1985 = vmul.f32 %v24, %v1984
  %v1986 = vadd.f32 %v1985, %v25
  %1987 = vrot.lane.b32.xlu0 %v1986, 32
  %v1988 = vpop.permute.xlu0 %1987
  %1989 = vrot.lane.b32.xlu0 %v1986, 96
  %v1990 = vpop.permute.xlu0 %1989
  %v1991 = vmul.f32 %v1988, %v1990
  %v1992 = vmul.f32 %v1986, %v1904
  %v1993 = vadd.f32 %v1992, %v1991
  %1994 = vrot.lane.b32.xlu0 %v1986, 64
  %v1995 = vpop.permute.xlu0 %1994
  %v1996 = vtanh.pop %v1993
  %v1997 = vmul.f32 %v1995, %v1996
  %s1998 = scalar_lea.vmem [#allocation4], 168
  %1999 = vst [vmem:[%s1998] sm:$0xff] %v1997
  %s2000 = scalar_lea.vmem %s0, 176
  %v2001 = vld [vmem:[%s2000] sm:$0xff]
  %2002 = vmatprep.subr.mxu0 0.0
  %2003 = vmatpush1.msra.mxu0 %v26
  %2004 = vmatprep.subr.mxu0 0.0
  %2005 = vmatpush1.msra.mxu0 %v27
  %2006 = vmatprep.subr.mxu0 0.0
  %2007 = vmatpush1.msra.mxu0 %v28
  %2008 = vmatprep.subr.mxu0 0.0
  %2009 = vmatpush1.msra.mxu0 %v29
  %2010 = vmatprep.subr.mxu0 0.0
  %2011 = vmatpush1.msra.mxu0 %v30
  %2012 = vmatprep.subr.mxu0 0.0
  %2013 = vmatpush1.msra.mxu0 %v31
  %2014 = vmatprep.subr.mxu0 0.0
  %2015 = vmatpush1.msra.mxu0 %v32
  %2016 = vmatprep.subr.mxu0 0.0
  %2017 = vmatpush1.msra.mxu0 %v33
  %2018 = vmatprep.subr.mxu0 0.0
  %2019 = vmatpush1.msra.mxu0 %v34
  %2020 = vmatprep.subr.mxu0 0.0
  %2021 = vmatpush1.msra.mxu0 %v35
  %2022 = vmatprep.subr.mxu0 0.0
  %2023 = vmatpush1.msra.mxu0 %v36
  %2024 = vmatprep.subr.mxu0 0.0
  %2025 = vmatpush1.msra.mxu0 %v37
  %2026 = vmatprep.subr.mxu0 0.0
  %2027 = vmatpush1.msra.mxu0 %v38
  %2028 = vmatprep.subr.mxu0 0.0
  %2029 = vmatpush1.msra.mxu0 %v39
  %2030 = vmatprep.subr.mxu0 0.0
  %2031 = vmatpush1.msra.mxu0 %v40
  %2032 = vmatprep.subr.mxu0 0.0
  %2033 = vmatpush1.msra.mxu0 %v41
  %2034 = vmatprep.subr.mxu0 0.0
  %2035 = vmatpush1.msra.mxu0 0.0
  %2036 = vmatprep.subr.mxu0 0.0
  %2037 = vmatpush1.msra.mxu0 0.0
  %2038 = vmatprep.subr.mxu0 0.0
  %2039 = vmatpush1.msra.mxu0 0.0
  %2040 = vmatprep.subr.mxu0 0.0
  %2041 = vmatpush1.msra.mxu0 0.0
  %2042 = vmatprep.subr.mxu0 0.0
  %2043 = vmatpush1.msra.mxu0 0.0
  %2044 = vmatprep.subr.mxu0 0.0
  %2045 = vmatpush1.msra.mxu0 0.0
  %2046 = vmatprep.subr.mxu0 0.0
  %2047 = vmatpush1.msra.mxu0 0.0
  %2048 = vmatprep.subr.mxu0 0.0
  %2049 = vmatpush1.msra.mxu0 0.0
  %2050 = vmatprep.subr.mxu0 0.0
  %2051 = vmatpush1.msra.mxu0 0.0
  %2052 = vmatprep.subr.mxu0 0.0
  %2053 = vmatpush1.msra.mxu0 0.0
  %2054 = vmatprep.subr.mxu0 0.0
  %2055 = vmatpush1.msra.mxu0 0.0
  %2056 = vmatprep.subr.mxu0 0.0
  %2057 = vmatpush1.msra.mxu0 0.0
  %2058 = vmatprep.subr.mxu0 0.0
  %2059 = vmatpush1.msra.mxu0 0.0
  %2060 = vmatprep.subr.mxu0 0.0
  %2061 = vmatpush1.msra.mxu0 0.0
  %2062 = vmatprep.subr.mxu0 0.0
  %2063 = vmatpush1.msra.mxu0 0.0
  %2064 = vmatprep.subr.mxu0 0.0
  %2065 = vmatpush1.msra.mxu0 0.0
  %2066 = vmatprep.mubr.f32.mxu0 0.0
  %2067 = vmatmul.mubr.f32.gmra.mrb[0].mxu0 %v1997
  %v2068 = vpop.f32.mrb[0].mxu0
  %v2069 = vadd.f32 0.0, %v2068
  %v2070 = vpop.f32.mrb[0].mxu0
  %2071 = vdwg.mxu0
  %v2072 = vadd.f32 %v2001, %v2069
  %v2073 = vtanh.pop %v2072
  %v2074 = vmul.f32 %v24, %v2073
  %v2075 = vadd.f32 %v2074, %v25
  %2076 = vrot.lane.b32.xlu0 %v2075, 32
  %v2077 = vpop.permute.xlu0 %2076
  %2078 = vrot.lane.b32.xlu0 %v2075, 96
  %v2079 = vpop.permute.xlu0 %2078
  %v2080 = vmul.f32 %v2077, %v2079
  %v2081 = vmul.f32 %v2075, %v1993
  %v2082 = vadd.f32 %v2081, %v2080
  %2083 = vrot.lane.b32.xlu0 %v2075, 64
  %v2084 = vpop.permute.xlu0 %2083
  %v2085 = vtanh.pop %v2082
  %v2086 = vmul.f32 %v2084, %v2085
  %s2087 = scalar_lea.vmem [#allocation4], 176
  %2088 = vst [vmem:[%s2087] sm:$0xff] %v2086
  %s2089 = scalar_lea.vmem %s0, 184
  %v2090 = vld [vmem:[%s2089] sm:$0xff]
  %2091 = vmatprep.subr.mxu0 0.0
  %2092 = vmatpush1.msra.mxu0 %v26
  %2093 = vmatprep.subr.mxu0 0.0
  %2094 = vmatpush1.msra.mxu0 %v27
  %2095 = vmatprep.subr.mxu0 0.0
  %2096 = vmatpush1.msra.mxu0 %v28
  %2097 = vmatprep.subr.mxu0 0.0
  %2098 = vmatpush1.msra.mxu0 %v29
  %2099 = vmatprep.subr.mxu0 0.0
  %2100 = vmatpush1.msra.mxu0 %v30
  %2101 = vmatprep.subr.mxu0 0.0
  %2102 = vmatpush1.msra.mxu0 %v31
  %2103 = vmatprep.subr.mxu0 0.0
  %2104 = vmatpush1.msra.mxu0 %v32
  %2105 = vmatprep.subr.mxu0 0.0
  %2106 = vmatpush1.msra.mxu0 %v33
  %2107 = vmatprep.subr.mxu0 0.0
  %2108 = vmatpush1.msra.mxu0 %v34
  %2109 = vmatprep.subr.mxu0 0.0
  %2110 = vmatpush1.msra.mxu0 %v35
  %2111 = vmatprep.subr.mxu0 0.0
  %2112 = vmatpush1.msra.mxu0 %v36
  %2113 = vmatprep.subr.mxu0 0.0
  %2114 = vmatpush1.msra.mxu0 %v37
  %2115 = vmatprep.subr.mxu0 0.0
  %2116 = vmatpush1.msra.mxu0 %v38
  %2117 = vmatprep.subr.mxu0 0.0
  %2118 = vmatpush1.msra.mxu0 %v39
  %2119 = vmatprep.subr.mxu0 0.0
  %2120 = vmatpush1.msra.mxu0 %v40
  %2121 = vmatprep.subr.mxu0 0.0
  %2122 = vmatpush1.msra.mxu0 %v41
  %2123 = vmatprep.subr.mxu0 0.0
  %2124 = vmatpush1.msra.mxu0 0.0
  %2125 = vmatprep.subr.mxu0 0.0
  %2126 = vmatpush1.msra.mxu0 0.0
  %2127 = vmatprep.subr.mxu0 0.0
  %2128 = vmatpush1.msra.mxu0 0.0
  %2129 = vmatprep.subr.mxu0 0.0
  %2130 = vmatpush1.msra.mxu0 0.0
  %2131 = vmatprep.subr.mxu0 0.0
  %2132 = vmatpush1.msra.mxu0 0.0
  %2133 = vmatprep.subr.mxu0 0.0
  %2134 = vmatpush1.msra.mxu0 0.0
  %2135 = vmatprep.subr.mxu0 0.0
  %2136 = vmatpush1.msra.mxu0 0.0
  %2137 = vmatprep.subr.mxu0 0.0
  %2138 = vmatpush1.msra.mxu0 0.0
  %2139 = vmatprep.subr.mxu0 0.0
  %2140 = vmatpush1.msra.mxu0 0.0
  %2141 = vmatprep.subr.mxu0 0.0
  %2142 = vmatpush1.msra.mxu0 0.0
  %2143 = vmatprep.subr.mxu0 0.0
  %2144 = vmatpush1.msra.mxu0 0.0
  %2145 = vmatprep.subr.mxu0 0.0
  %2146 = vmatpush1.msra.mxu0 0.0
  %2147 = vmatprep.subr.mxu0 0.0
  %2148 = vmatpush1.msra.mxu0 0.0
  %2149 = vmatprep.subr.mxu0 0.0
  %2150 = vmatpush1.msra.mxu0 0.0
  %2151 = vmatprep.subr.mxu0 0.0
  %2152 = vmatpush1.msra.mxu0 0.0
  %2153 = vmatprep.subr.mxu0 0.0
  %2154 = vmatpush1.msra.mxu0 0.0
  %2155 = vmatprep.mubr.f32.mxu0 0.0
  %2156 = vmatmul.mubr.f32.gmra.mrb[0].mxu0 %v2086
  %v2157 = vpop.f32.mrb[0].mxu0
  %v2158 = vadd.f32 0.0, %v2157
  %v2159 = vpop.f32.mrb[0].mxu0
  %2160 = vdwg.mxu0
  %v2161 = vadd.f32 %v2090, %v2158
  %v2162 = vtanh.pop %v2161
  %v2163 = vmul.f32 %v24, %v2162
  %v2164 = vadd.f32 %v2163, %v25
  %2165 = vrot.lane.b32.xlu0 %v2164, 32
  %v2166 = vpop.permute.xlu0 %2165
  %2167 = vrot.lane.b32.xlu0 %v2164, 96
  %v2168 = vpop.permute.xlu0 %2167
  %v2169 = vmul.f32 %v2166, %v2168
  %v2170 = vmul.f32 %v2164, %v2082
  %v2171 = vadd.f32 %v2170, %v2169
  %2172 = vrot.lane.b32.xlu0 %v2164, 64
  %v2173 = vpop.permute.xlu0 %2172
  %v2174 = vtanh.pop %v2171
  %v2175 = vmul.f32 %v2173, %v2174
  %s2176 = scalar_lea.vmem [#allocation4], 184
  %2177 = vst [vmem:[%s2176] sm:$0xff] %v2175
  %s2178 = scalar_lea.vmem %s0, 192
  %v2179 = vld [vmem:[%s2178] sm:$0xff]
  %2180 = vmatprep.subr.mxu0 0.0
  %2181 = vmatpush1.msra.mxu0 %v26
  %2182 = vmatprep.subr.mxu0 0.0
  %2183 = vmatpush1.msra.mxu0 %v27
  %2184 = vmatprep.subr.mxu0 0.0
  %2185 = vmatpush1.msra.mxu0 %v28
  %2186 = vmatprep.subr.mxu0 0.0
  %2187 = vmatpush1.msra.mxu0 %v29
  %2188 = vmatprep.subr.mxu0 0.0
  %2189 = vmatpush1.msra.mxu0 %v30
  %2190 = vmatprep.subr.mxu0 0.0
  %2191 = vmatpush1.msra.mxu0 %v31
  %2192 = vmatprep.subr.mxu0 0.0
  %2193 = vmatpush1.msra.mxu0 %v32
  %2194 = vmatprep.subr.mxu0 0.0
  %2195 = vmatpush1.msra.mxu0 %v33
  %2196 = vmatprep.subr.mxu0 0.0
  %2197 = vmatpush1.msra.mxu0 %v34
  %2198 = vmatprep.subr.mxu0 0.0
  %2199 = vmatpush1.msra.mxu0 %v35
  %2200 = vmatprep.subr.mxu0 0.0
  %2201 = vmatpush1.msra.mxu0 %v36
  %2202 = vmatprep.subr.mxu0 0.0
  %2203 = vmatpush1.msra.mxu0 %v37
  %2204 = vmatprep.subr.mxu0 0.0
  %2205 = vmatpush1.msra.mxu0 %v38
  %2206 = vmatprep.subr.mxu0 0.0
  %2207 = vmatpush1.msra.mxu0 %v39
  %2208 = vmatprep.subr.mxu0 0.0
  %2209 = vmatpush1.msra.mxu0 %v40
  %2210 = vmatprep.subr.mxu0 0.0
  %2211 = vmatpush1.msra.mxu0 %v41
  %2212 = vmatprep.subr.mxu0 0.0
  %2213 = vmatpush1.msra.mxu0 0.0
  %2214 = vmatprep.subr.mxu0 0.0
  %2215 = vmatpush1.msra.mxu0 0.0
  %2216 = vmatprep.subr.mxu0 0.0
  %2217 = vmatpush1.msra.mxu0 0.0
  %2218 = vmatprep.subr.mxu0 0.0
  %2219 = vmatpush1.msra.mxu0 0.0
  %2220 = vmatprep.subr.mxu0 0.0
  %2221 = vmatpush1.msra.mxu0 0.0
  %2222 = vmatprep.subr.mxu0 0.0
  %2223 = vmatpush1.msra.mxu0 0.0
  %2224 = vmatprep.subr.mxu0 0.0
  %2225 = vmatpush1.msra.mxu0 0.0
  %2226 = vmatprep.subr.mxu0 0.0
  %2227 = vmatpush1.msra.mxu0 0.0
  %2228 = vmatprep.subr.mxu0 0.0
  %2229 = vmatpush1.msra.mxu0 0.0
  %2230 = vmatprep.subr.mxu0 0.0
  %2231 = vmatpush1.msra.mxu0 0.0
  %2232 = vmatprep.subr.mxu0 0.0
  %2233 = vmatpush1.msra.mxu0 0.0
  %2234 = vmatprep.subr.mxu0 0.0
  %2235 = vmatpush1.msra.mxu0 0.0
  %2236 = vmatprep.subr.mxu0 0.0
  %2237 = vmatpush1.msra.mxu0 0.0
  %2238 = vmatprep.subr.mxu0 0.0
  %2239 = vmatpush1.msra.mxu0 0.0
  %2240 = vmatprep.subr.mxu0 0.0
  %2241 = vmatpush1.msra.mxu0 0.0
  %2242 = vmatprep.subr.mxu0 0.0
  %2243 = vmatpush1.msra.mxu0 0.0
  %2244 = vmatprep.mubr.f32.mxu0 0.0
  %2245 = vmatmul.mubr.f32.gmra.mrb[0].mxu0 %v2175
  %v2246 = vpop.f32.mrb[0].mxu0
  %v2247 = vadd.f32 0.0, %v2246
  %v2248 = vpop.f32.mrb[0].mxu0
  %2249 = vdwg.mxu0
  %v2250 = vadd.f32 %v2179, %v2247
  %v2251 = vtanh.pop %v2250
  %v2252 = vmul.f32 %v24, %v2251
  %v2253 = vadd.f32 %v2252, %v25
  %2254 = vrot.lane.b32.xlu0 %v2253, 32
  %v2255 = vpop.permute.xlu0 %2254
  %2256 = vrot.lane.b32.xlu0 %v2253, 96
  %v2257 = vpop.permute.xlu0 %2256
  %v2258 = vmul.f32 %v2255, %v2257
  %v2259 = vmul.f32 %v2253, %v2171
  %v2260 = vadd.f32 %v2259, %v2258
  %2261 = vrot.lane.b32.xlu0 %v2253, 64
  %v2262 = vpop.permute.xlu0 %2261
  %v2263 = vtanh.pop %v2260
  %v2264 = vmul.f32 %v2262, %v2263
  %s2265 = scalar_lea.vmem [#allocation4], 192
  %2266 = vst [vmem:[%s2265] sm:$0xff] %v2264
  %s2267 = scalar_lea.vmem %s0, 200
  %v2268 = vld [vmem:[%s2267] sm:$0xff]
  %2269 = vmatprep.subr.mxu0 0.0
  %2270 = vmatpush1.msra.mxu0 %v26
  %2271 = vmatprep.subr.mxu0 0.0
  %2272 = vmatpush1.msra.mxu0 %v27
  %2273 = vmatprep.subr.mxu0 0.0
  %2274 = vmatpush1.msra.mxu0 %v28
  %2275 = vmatprep.subr.mxu0 0.0
  %2276 = vmatpush1.msra.mxu0 %v29
  %2277 = vmatprep.subr.mxu0 0.0
  %2278 = vmatpush1.msra.mxu0 %v30
  %2279 = vmatprep.subr.mxu0 0.0
  %2280 = vmatpush1.msra.mxu0 %v31
  %2281 = vmatprep.subr.mxu0 0.0
  %2282 = vmatpush1.msra.mxu0 %v32
  %2283 = vmatprep.subr.mxu0 0.0
  %2284 = vmatpush1.msra.mxu0 %v33
  %2285 = vmatprep.subr.mxu0 0.0
  %2286 = vmatpush1.msra.mxu0 %v34
  %2287 = vmatprep.subr.mxu0 0.0
  %2288 = vmatpush1.msra.mxu0 %v35
  %2289 = vmatprep.subr.mxu0 0.0
  %2290 = vmatpush1.msra.mxu0 %v36
  %2291 = vmatprep.subr.mxu0 0.0
  %2292 = vmatpush1.msra.mxu0 %v37
  %2293 = vmatprep.subr.mxu0 0.0
  %2294 = vmatpush1.msra.mxu0 %v38
  %2295 = vmatprep.subr.mxu0 0.0
  %2296 = vmatpush1.msra.mxu0 %v39
  %2297 = vmatprep.subr.mxu0 0.0
  %2298 = vmatpush1.msra.mxu0 %v40
  %2299 = vmatprep.subr.mxu0 0.0
  %2300 = vmatpush1.msra.mxu0 %v41
  %2301 = vmatprep.subr.mxu0 0.0
  %2302 = vmatpush1.msra.mxu0 0.0
  %2303 = vmatprep.subr.mxu0 0.0
  %2304 = vmatpush1.msra.mxu0 0.0
  %2305 = vmatprep.subr.mxu0 0.0
  %2306 = vmatpush1.msra.mxu0 0.0
  %2307 = vmatprep.subr.mxu0 0.0
  %2308 = vmatpush1.msra.mxu0 0.0
  %2309 = vmatprep.subr.mxu0 0.0
  %2310 = vmatpush1.msra.mxu0 0.0
  %2311 = vmatprep.subr.mxu0 0.0
  %2312 = vmatpush1.msra.mxu0 0.0
  %2313 = vmatprep.subr.mxu0 0.0
  %2314 = vmatpush1.msra.mxu0 0.0
  %2315 = vmatprep.subr.mxu0 0.0
  %2316 = vmatpush1.msra.mxu0 0.0
  %2317 = vmatprep.subr.mxu0 0.0
  %2318 = vmatpush1.msra.mxu0 0.0
  %2319 = vmatprep.subr.mxu0 0.0
  %2320 = vmatpush1.msra.mxu0 0.0
  %2321 = vmatprep.subr.mxu0 0.0
  %2322 = vmatpush1.msra.mxu0 0.0
  %2323 = vmatprep.subr.mxu0 0.0
  %2324 = vmatpush1.msra.mxu0 0.0
  %2325 = vmatprep.subr.mxu0 0.0
  %2326 = vmatpush1.msra.mxu0 0.0
  %2327 = vmatprep.subr.mxu0 0.0
  %2328 = vmatpush1.msra.mxu0 0.0
  %2329 = vmatprep.subr.mxu0 0.0
  %2330 = vmatpush1.msra.mxu0 0.0
  %2331 = vmatprep.subr.mxu0 0.0
  %2332 = vmatpush1.msra.mxu0 0.0
  %2333 = vmatprep.mubr.f32.mxu0 0.0
  %2334 = vmatmul.mubr.f32.gmra.mrb[0].mxu0 %v2264
  %v2335 = vpop.f32.mrb[0].mxu0
  %v2336 = vadd.f32 0.0, %v2335
  %v2337 = vpop.f32.mrb[0].mxu0
  %2338 = vdwg.mxu0
  %v2339 = vadd.f32 %v2268, %v2336
  %v2340 = vtanh.pop %v2339
  %v2341 = vmul.f32 %v24, %v2340
  %v2342 = vadd.f32 %v2341, %v25
  %2343 = vrot.lane.b32.xlu0 %v2342, 32
  %v2344 = vpop.permute.xlu0 %2343
  %2345 = vrot.lane.b32.xlu0 %v2342, 96
  %v2346 = vpop.permute.xlu0 %2345
  %v2347 = vmul.f32 %v2344, %v2346
  %v2348 = vmul.f32 %v2342, %v2260
  %v2349 = vadd.f32 %v2348, %v2347
  %2350 = vrot.lane.b32.xlu0 %v2342, 64
  %v2351 = vpop.permute.xlu0 %2350
  %v2352 = vtanh.pop %v2349
  %v2353 = vmul.f32 %v2351, %v2352
  %s2354 = scalar_lea.vmem [#allocation4], 200
  %2355 = vst [vmem:[%s2354] sm:$0xff] %v2353
  %s2356 = scalar_lea.vmem %s0, 208
  %v2357 = vld [vmem:[%s2356] sm:$0xff]
  %2358 = vmatprep.subr.mxu0 0.0
  %2359 = vmatpush1.msra.mxu0 %v26
  %2360 = vmatprep.subr.mxu0 0.0
  %2361 = vmatpush1.msra.mxu0 %v27
  %2362 = vmatprep.subr.mxu0 0.0
  %2363 = vmatpush1.msra.mxu0 %v28
  %2364 = vmatprep.subr.mxu0 0.0
  %2365 = vmatpush1.msra.mxu0 %v29
  %2366 = vmatprep.subr.mxu0 0.0
  %2367 = vmatpush1.msra.mxu0 %v30
  %2368 = vmatprep.subr.mxu0 0.0
  %2369 = vmatpush1.msra.mxu0 %v31
  %2370 = vmatprep.subr.mxu0 0.0
  %2371 = vmatpush1.msra.mxu0 %v32
  %2372 = vmatprep.subr.mxu0 0.0
  %2373 = vmatpush1.msra.mxu0 %v33
  %2374 = vmatprep.subr.mxu0 0.0
  %2375 = vmatpush1.msra.mxu0 %v34
  %2376 = vmatprep.subr.mxu0 0.0
  %2377 = vmatpush1.msra.mxu0 %v35
  %2378 = vmatprep.subr.mxu0 0.0
  %2379 = vmatpush1.msra.mxu0 %v36
  %2380 = vmatprep.subr.mxu0 0.0
  %2381 = vmatpush1.msra.mxu0 %v37
  %2382 = vmatprep.subr.mxu0 0.0
  %2383 = vmatpush1.msra.mxu0 %v38
  %2384 = vmatprep.subr.mxu0 0.0
  %2385 = vmatpush1.msra.mxu0 %v39
  %2386 = vmatprep.subr.mxu0 0.0
  %2387 = vmatpush1.msra.mxu0 %v40
  %2388 = vmatprep.subr.mxu0 0.0
  %2389 = vmatpush1.msra.mxu0 %v41
  %2390 = vmatprep.subr.mxu0 0.0
  %2391 = vmatpush1.msra.mxu0 0.0
  %2392 = vmatprep.subr.mxu0 0.0
  %2393 = vmatpush1.msra.mxu0 0.0
  %2394 = vmatprep.subr.mxu0 0.0
  %2395 = vmatpush1.msra.mxu0 0.0
  %2396 = vmatprep.subr.mxu0 0.0
  %2397 = vmatpush1.msra.mxu0 0.0
  %2398 = vmatprep.subr.mxu0 0.0
  %2399 = vmatpush1.msra.mxu0 0.0
  %2400 = vmatprep.subr.mxu0 0.0
  %2401 = vmatpush1.msra.mxu0 0.0
  %2402 = vmatprep.subr.mxu0 0.0
  %2403 = vmatpush1.msra.mxu0 0.0
  %2404 = vmatprep.subr.mxu0 0.0
  %2405 = vmatpush1.msra.mxu0 0.0
  %2406 = vmatprep.subr.mxu0 0.0
  %2407 = vmatpush1.msra.mxu0 0.0
  %2408 = vmatprep.subr.mxu0 0.0
  %2409 = vmatpush1.msra.mxu0 0.0
  %2410 = vmatprep.subr.mxu0 0.0
  %2411 = vmatpush1.msra.mxu0 0.0
  %2412 = vmatprep.subr.mxu0 0.0
  %2413 = vmatpush1.msra.mxu0 0.0
  %2414 = vmatprep.subr.mxu0 0.0
  %2415 = vmatpush1.msra.mxu0 0.0
  %2416 = vmatprep.subr.mxu0 0.0
  %2417 = vmatpush1.msra.mxu0 0.0
  %2418 = vmatprep.subr.mxu0 0.0
  %2419 = vmatpush1.msra.mxu0 0.0
  %2420 = vmatprep.subr.mxu0 0.0
  %2421 = vmatpush1.msra.mxu0 0.0
  %2422 = vmatprep.mubr.f32.mxu0 0.0
  %2423 = vmatmul.mubr.f32.gmra.mrb[0].mxu0 %v2353
  %v2424 = vpop.f32.mrb[0].mxu0
  %v2425 = vadd.f32 0.0, %v2424
  %v2426 = vpop.f32.mrb[0].mxu0
  %2427 = vdwg.mxu0
  %v2428 = vadd.f32 %v2357, %v2425
  %v2429 = vtanh.pop %v2428
  %v2430 = vmul.f32 %v24, %v2429
  %v2431 = vadd.f32 %v2430, %v25
  %2432 = vrot.lane.b32.xlu0 %v2431, 32
  %v2433 = vpop.permute.xlu0 %2432
  %2434 = vrot.lane.b32.xlu0 %v2431, 96
  %v2435 = vpop.permute.xlu0 %2434
  %v2436 = vmul.f32 %v2433, %v2435
  %v2437 = vmul.f32 %v2431, %v2349
  %v2438 = vadd.f32 %v2437, %v2436
  %2439 = vrot.lane.b32.xlu0 %v2431, 64
  %v2440 = vpop.permute.xlu0 %2439
  %v2441 = vtanh.pop %v2438
  %v2442 = vmul.f32 %v2440, %v2441
  %s2443 = scalar_lea.vmem [#allocation4], 208
  %2444 = vst [vmem:[%s2443] sm:$0xff] %v2442
  %s2445 = scalar_lea.vmem %s0, 216
  %v2446 = vld [vmem:[%s2445] sm:$0xff]
  %2447 = vmatprep.subr.mxu0 0.0
  %2448 = vmatpush1.msra.mxu0 %v26
  %2449 = vmatprep.subr.mxu0 0.0
  %2450 = vmatpush1.msra.mxu0 %v27
  %2451 = vmatprep.subr.mxu0 0.0
  %2452 = vmatpush1.msra.mxu0 %v28
  %2453 = vmatprep.subr.mxu0 0.0
  %2454 = vmatpush1.msra.mxu0 %v29
  %2455 = vmatprep.subr.mxu0 0.0
  %2456 = vmatpush1.msra.mxu0 %v30
  %2457 = vmatprep.subr.mxu0 0.0
  %2458 = vmatpush1.msra.mxu0 %v31
  %2459 = vmatprep.subr.mxu0 0.0
  %2460 = vmatpush1.msra.mxu0 %v32
  %2461 = vmatprep.subr.mxu0 0.0
  %2462 = vmatpush1.msra.mxu0 %v33
  %2463 = vmatprep.subr.mxu0 0.0
  %2464 = vmatpush1.msra.mxu0 %v34
  %2465 = vmatprep.subr.mxu0 0.0
  %2466 = vmatpush1.msra.mxu0 %v35
  %2467 = vmatprep.subr.mxu0 0.0
  %2468 = vmatpush1.msra.mxu0 %v36
  %2469 = vmatprep.subr.mxu0 0.0
  %2470 = vmatpush1.msra.mxu0 %v37
  %2471 = vmatprep.subr.mxu0 0.0
  %2472 = vmatpush1.msra.mxu0 %v38
  %2473 = vmatprep.subr.mxu0 0.0
  %2474 = vmatpush1.msra.mxu0 %v39
  %2475 = vmatprep.subr.mxu0 0.0
  %2476 = vmatpush1.msra.mxu0 %v40
  %2477 = vmatprep.subr.mxu0 0.0
  %2478 = vmatpush1.msra.mxu0 %v41
  %2479 = vmatprep.subr.mxu0 0.0
  %2480 = vmatpush1.msra.mxu0 0.0
  %2481 = vmatprep.subr.mxu0 0.0
  %2482 = vmatpush1.msra.mxu0 0.0
  %2483 = vmatprep.subr.mxu0 0.0
  %2484 = vmatpush1.msra.mxu0 0.0
  %2485 = vmatprep.subr.mxu0 0.0
  %2486 = vmatpush1.msra.mxu0 0.0
  %2487 = vmatprep.subr.mxu0 0.0
  %2488 = vmatpush1.msra.mxu0 0.0
  %2489 = vmatprep.subr.mxu0 0.0
  %2490 = vmatpush1.msra.mxu0 0.0
  %2491 = vmatprep.subr.mxu0 0.0
  %2492 = vmatpush1.msra.mxu0 0.0
  %2493 = vmatprep.subr.mxu0 0.0
  %2494 = vmatpush1.msra.mxu0 0.0
  %2495 = vmatprep.subr.mxu0 0.0
  %2496 = vmatpush1.msra.mxu0 0.0
  %2497 = vmatprep.subr.mxu0 0.0
  %2498 = vmatpush1.msra.mxu0 0.0
  %2499 = vmatprep.subr.mxu0 0.0
  %2500 = vmatpush1.msra.mxu0 0.0
  %2501 = vmatprep.subr.mxu0 0.0
  %2502 = vmatpush1.msra.mxu0 0.0
  %2503 = vmatprep.subr.mxu0 0.0
  %2504 = vmatpush1.msra.mxu0 0.0
  %2505 = vmatprep.subr.mxu0 0.0
  %2506 = vmatpush1.msra.mxu0 0.0
  %2507 = vmatprep.subr.mxu0 0.0
  %2508 = vmatpush1.msra.mxu0 0.0
  %2509 = vmatprep.subr.mxu0 0.0
  %2510 = vmatpush1.msra.mxu0 0.0
  %2511 = vmatprep.mubr.f32.mxu0 0.0
  %2512 = vmatmul.mubr.f32.gmra.mrb[0].mxu0 %v2442
  %v2513 = vpop.f32.mrb[0].mxu0
  %v2514 = vadd.f32 0.0, %v2513
  %v2515 = vpop.f32.mrb[0].mxu0
  %2516 = vdwg.mxu0
  %v2517 = vadd.f32 %v2446, %v2514
  %v2518 = vtanh.pop %v2517
  %v2519 = vmul.f32 %v24, %v2518
  %v2520 = vadd.f32 %v2519, %v25
  %2521 = vrot.lane.b32.xlu0 %v2520, 32
  %v2522 = vpop.permute.xlu0 %2521
  %2523 = vrot.lane.b32.xlu0 %v2520, 96
  %v2524 = vpop.permute.xlu0 %2523
  %v2525 = vmul.f32 %v2522, %v2524
  %v2526 = vmul.f32 %v2520, %v2438
  %v2527 = vadd.f32 %v2526, %v2525
  %2528 = vrot.lane.b32.xlu0 %v2520, 64
  %v2529 = vpop.permute.xlu0 %2528
  %v2530 = vtanh.pop %v2527
  %v2531 = vmul.f32 %v2529, %v2530
  %s2532 = scalar_lea.vmem [#allocation4], 216
  %2533 = vst [vmem:[%s2532] sm:$0xff] %v2531
  %s2534 = scalar_lea.vmem %s0, 224
  %v2535 = vld [vmem:[%s2534] sm:$0xff]
  %2536 = vmatprep.subr.mxu0 0.0
  %2537 = vmatpush1.msra.mxu0 %v26
  %2538 = vmatprep.subr.mxu0 0.0
  %2539 = vmatpush1.msra.mxu0 %v27
  %2540 = vmatprep.subr.mxu0 0.0
  %2541 = vmatpush1.msra.mxu0 %v28
  %2542 = vmatprep.subr.mxu0 0.0
  %2543 = vmatpush1.msra.mxu0 %v29
  %2544 = vmatprep.subr.mxu0 0.0
  %2545 = vmatpush1.msra.mxu0 %v30
  %2546 = vmatprep.subr.mxu0 0.0
  %2547 = vmatpush1.msra.mxu0 %v31
  %2548 = vmatprep.subr.mxu0 0.0
  %2549 = vmatpush1.msra.mxu0 %v32
  %2550 = vmatprep.subr.mxu0 0.0
  %2551 = vmatpush1.msra.mxu0 %v33
  %2552 = vmatprep.subr.mxu0 0.0
  %2553 = vmatpush1.msra.mxu0 %v34
  %2554 = vmatprep.subr.mxu0 0.0
  %2555 = vmatpush1.msra.mxu0 %v35
  %2556 = vmatprep.subr.mxu0 0.0
  %2557 = vmatpush1.msra.mxu0 %v36
  %2558 = vmatprep.subr.mxu0 0.0
  %2559 = vmatpush1.msra.mxu0 %v37
  %2560 = vmatprep.subr.mxu0 0.0
  %2561 = vmatpush1.msra.mxu0 %v38
  %2562 = vmatprep.subr.mxu0 0.0
  %2563 = vmatpush1.msra.mxu0 %v39
  %2564 = vmatprep.subr.mxu0 0.0
  %2565 = vmatpush1.msra.mxu0 %v40
  %2566 = vmatprep.subr.mxu0 0.0
  %2567 = vmatpush1.msra.mxu0 %v41
  %2568 = vmatprep.subr.mxu0 0.0
  %2569 = vmatpush1.msra.mxu0 0.0
  %2570 = vmatprep.subr.mxu0 0.0
  %2571 = vmatpush1.msra.mxu0 0.0
  %2572 = vmatprep.subr.mxu0 0.0
  %2573 = vmatpush1.msra.mxu0 0.0
  %2574 = vmatprep.subr.mxu0 0.0
  %2575 = vmatpush1.msra.mxu0 0.0
  %2576 = vmatprep.subr.mxu0 0.0
  %2577 = vmatpush1.msra.mxu0 0.0
  %2578 = vmatprep.subr.mxu0 0.0
  %2579 = vmatpush1.msra.mxu0 0.0
  %2580 = vmatprep.subr.mxu0 0.0
  %2581 = vmatpush1.msra.mxu0 0.0
  %2582 = vmatprep.subr.mxu0 0.0
  %2583 = vmatpush1.msra.mxu0 0.0
  %2584 = vmatprep.subr.mxu0 0.0
  %2585 = vmatpush1.msra.mxu0 0.0
  %2586 = vmatprep.subr.mxu0 0.0
  %2587 = vmatpush1.msra.mxu0 0.0
  %2588 = vmatprep.subr.mxu0 0.0
  %2589 = vmatpush1.msra.mxu0 0.0
  %2590 = vmatprep.subr.mxu0 0.0
  %2591 = vmatpush1.msra.mxu0 0.0
  %2592 = vmatprep.subr.mxu0 0.0
  %2593 = vmatpush1.msra.mxu0 0.0
  %2594 = vmatprep.subr.mxu0 0.0
  %2595 = vmatpush1.msra.mxu0 0.0
  %2596 = vmatprep.subr.mxu0 0.0
  %2597 = vmatpush1.msra.mxu0 0.0
  %2598 = vmatprep.subr.mxu0 0.0
  %2599 = vmatpush1.msra.mxu0 0.0
  %2600 = vmatprep.mubr.f32.mxu0 0.0
  %2601 = vmatmul.mubr.f32.gmra.mrb[0].mxu0 %v2531
  %v2602 = vpop.f32.mrb[0].mxu0
  %v2603 = vadd.f32 0.0, %v2602
  %v2604 = vpop.f32.mrb[0].mxu0
  %2605 = vdwg.mxu0
  %v2606 = vadd.f32 %v2535, %v2603
  %v2607 = vtanh.pop %v2606
  %v2608 = vmul.f32 %v24, %v2607
  %v2609 = vadd.f32 %v2608, %v25
  %2610 = vrot.lane.b32.xlu0 %v2609, 32
  %v2611 = vpop.permute.xlu0 %2610
  %2612 = vrot.lane.b32.xlu0 %v2609, 96
  %v2613 = vpop.permute.xlu0 %2612
  %v2614 = vmul.f32 %v2611, %v2613
  %v2615 = vmul.f32 %v2609, %v2527
  %v2616 = vadd.f32 %v2615, %v2614
  %2617 = vrot.lane.b32.xlu0 %v2609, 64
  %v2618 = vpop.permute.xlu0 %2617
  %v2619 = vtanh.pop %v2616
  %v2620 = vmul.f32 %v2618, %v2619
  %s2621 = scalar_lea.vmem [#allocation4], 224
  %2622 = vst [vmem:[%s2621] sm:$0xff] %v2620
  %s2623 = scalar_lea.vmem %s0, 232
  %v2624 = vld [vmem:[%s2623] sm:$0xff]
  %2625 = vmatprep.subr.mxu0 0.0
  %2626 = vmatpush1.msra.mxu0 %v26
  %2627 = vmatprep.subr.mxu0 0.0
  %2628 = vmatpush1.msra.mxu0 %v27
  %2629 = vmatprep.subr.mxu0 0.0
  %2630 = vmatpush1.msra.mxu0 %v28
  %2631 = vmatprep.subr.mxu0 0.0
  %2632 = vmatpush1.msra.mxu0 %v29
  %2633 = vmatprep.subr.mxu0 0.0
  %2634 = vmatpush1.msra.mxu0 %v30
  %2635 = vmatprep.subr.mxu0 0.0
  %2636 = vmatpush1.msra.mxu0 %v31
  %2637 = vmatprep.subr.mxu0 0.0
  %2638 = vmatpush1.msra.mxu0 %v32
  %2639 = vmatprep.subr.mxu0 0.0
  %2640 = vmatpush1.msra.mxu0 %v33
  %2641 = vmatprep.subr.mxu0 0.0
  %2642 = vmatpush1.msra.mxu0 %v34
  %2643 = vmatprep.subr.mxu0 0.0
  %2644 = vmatpush1.msra.mxu0 %v35
  %2645 = vmatprep.subr.mxu0 0.0
  %2646 = vmatpush1.msra.mxu0 %v36
  %2647 = vmatprep.subr.mxu0 0.0
  %2648 = vmatpush1.msra.mxu0 %v37
  %2649 = vmatprep.subr.mxu0 0.0
  %2650 = vmatpush1.msra.mxu0 %v38
  %2651 = vmatprep.subr.mxu0 0.0
  %2652 = vmatpush1.msra.mxu0 %v39
  %2653 = vmatprep.subr.mxu0 0.0
  %2654 = vmatpush1.msra.mxu0 %v40
  %2655 = vmatprep.subr.mxu0 0.0
  %2656 = vmatpush1.msra.mxu0 %v41
  %2657 = vmatprep.subr.mxu0 0.0
  %2658 = vmatpush1.msra.mxu0 0.0
  %2659 = vmatprep.subr.mxu0 0.0
  %2660 = vmatpush1.msra.mxu0 0.0
  %2661 = vmatprep.subr.mxu0 0.0
  %2662 = vmatpush1.msra.mxu0 0.0
  %2663 = vmatprep.subr.mxu0 0.0
  %2664 = vmatpush1.msra.mxu0 0.0
  %2665 = vmatprep.subr.mxu0 0.0
  %2666 = vmatpush1.msra.mxu0 0.0
  %2667 = vmatprep.subr.mxu0 0.0
  %2668 = vmatpush1.msra.mxu0 0.0
  %2669 = vmatprep.subr.mxu0 0.0
  %2670 = vmatpush1.msra.mxu0 0.0
  %2671 = vmatprep.subr.mxu0 0.0
  %2672 = vmatpush1.msra.mxu0 0.0
  %2673 = vmatprep.subr.mxu0 0.0
  %2674 = vmatpush1.msra.mxu0 0.0
  %2675 = vmatprep.subr.mxu0 0.0
  %2676 = vmatpush1.msra.mxu0 0.0
  %2677 = vmatprep.subr.mxu0 0.0
  %2678 = vmatpush1.msra.mxu0 0.0
  %2679 = vmatprep.subr.mxu0 0.0
  %2680 = vmatpush1.msra.mxu0 0.0
  %2681 = vmatprep.subr.mxu0 0.0
  %2682 = vmatpush1.msra.mxu0 0.0
  %2683 = vmatprep.subr.mxu0 0.0
  %2684 = vmatpush1.msra.mxu0 0.0
  %2685 = vmatprep.subr.mxu0 0.0
  %2686 = vmatpush1.msra.mxu0 0.0
  %2687 = vmatprep.subr.mxu0 0.0
  %2688 = vmatpush1.msra.mxu0 0.0
  %2689 = vmatprep.mubr.f32.mxu0 0.0
  %2690 = vmatmul.mubr.f32.gmra.mrb[0].mxu0 %v2620
  %v2691 = vpop.f32.mrb[0].mxu0
  %v2692 = vadd.f32 0.0, %v2691
  %v2693 = vpop.f32.mrb[0].mxu0
  %2694 = vdwg.mxu0
  %v2695 = vadd.f32 %v2624, %v2692
  %v2696 = vtanh.pop %v2695
  %v2697 = vmul.f32 %v24, %v2696
  %v2698 = vadd.f32 %v2697, %v25
  %2699 = vrot.lane.b32.xlu0 %v2698, 32
  %v2700 = vpop.permute.xlu0 %2699
  %2701 = vrot.lane.b32.xlu0 %v2698, 96
  %v2702 = vpop.permute.xlu0 %2701
  %v2703 = vmul.f32 %v2700, %v2702
  %v2704 = vmul.f32 %v2698, %v2616
  %v2705 = vadd.f32 %v2704, %v2703
  %2706 = vrot.lane.b32.xlu0 %v2698, 64
  %v2707 = vpop.permute.xlu0 %2706
  %v2708 = vtanh.pop %v2705
  %v2709 = vmul.f32 %v2707, %v2708
  %s2710 = scalar_lea.vmem [#allocation4], 232
  %2711 = vst [vmem:[%s2710] sm:$0xff] %v2709
  %s2712 = scalar_lea.vmem %s0, 240
  %v2713 = vld [vmem:[%s2712] sm:$0xff]
  %2714 = vmatprep.subr.mxu0 0.0
  %2715 = vmatpush1.msra.mxu0 %v26
  %2716 = vmatprep.subr.mxu0 0.0
  %2717 = vmatpush1.msra.mxu0 %v27
  %2718 = vmatprep.subr.mxu0 0.0
  %2719 = vmatpush1.msra.mxu0 %v28
  %2720 = vmatprep.subr.mxu0 0.0
  %2721 = vmatpush1.msra.mxu0 %v29
  %2722 = vmatprep.subr.mxu0 0.0
  %2723 = vmatpush1.msra.mxu0 %v30
  %2724 = vmatprep.subr.mxu0 0.0
  %2725 = vmatpush1.msra.mxu0 %v31
  %2726 = vmatprep.subr.mxu0 0.0
  %2727 = vmatpush1.msra.mxu0 %v32
  %2728 = vmatprep.subr.mxu0 0.0
  %2729 = vmatpush1.msra.mxu0 %v33
  %2730 = vmatprep.subr.mxu0 0.0
  %2731 = vmatpush1.msra.mxu0 %v34
  %2732 = vmatprep.subr.mxu0 0.0
  %2733 = vmatpush1.msra.mxu0 %v35
  %2734 = vmatprep.subr.mxu0 0.0
  %2735 = vmatpush1.msra.mxu0 %v36
  %2736 = vmatprep.subr.mxu0 0.0
  %2737 = vmatpush1.msra.mxu0 %v37
  %2738 = vmatprep.subr.mxu0 0.0
  %2739 = vmatpush1.msra.mxu0 %v38
  %2740 = vmatprep.subr.mxu0 0.0
  %2741 = vmatpush1.msra.mxu0 %v39
  %2742 = vmatprep.subr.mxu0 0.0
  %2743 = vmatpush1.msra.mxu0 %v40
  %2744 = vmatprep.subr.mxu0 0.0
  %2745 = vmatpush1.msra.mxu0 %v41
  %2746 = vmatprep.subr.mxu0 0.0
  %2747 = vmatpush1.msra.mxu0 0.0
  %2748 = vmatprep.subr.mxu0 0.0
  %2749 = vmatpush1.msra.mxu0 0.0
  %2750 = vmatprep.subr.mxu0 0.0
  %2751 = vmatpush1.msra.mxu0 0.0
  %2752 = vmatprep.subr.mxu0 0.0
  %2753 = vmatpush1.msra.mxu0 0.0
  %2754 = vmatprep.subr.mxu0 0.0
  %2755 = vmatpush1.msra.mxu0 0.0
  %2756 = vmatprep.subr.mxu0 0.0
  %2757 = vmatpush1.msra.mxu0 0.0
  %2758 = vmatprep.subr.mxu0 0.0
  %2759 = vmatpush1.msra.mxu0 0.0
  %2760 = vmatprep.subr.mxu0 0.0
  %2761 = vmatpush1.msra.mxu0 0.0
  %2762 = vmatprep.subr.mxu0 0.0
  %2763 = vmatpush1.msra.mxu0 0.0
  %2764 = vmatprep.subr.mxu0 0.0
  %2765 = vmatpush1.msra.mxu0 0.0
  %2766 = vmatprep.subr.mxu0 0.0
  %2767 = vmatpush1.msra.mxu0 0.0
  %2768 = vmatprep.subr.mxu0 0.0
  %2769 = vmatpush1.msra.mxu0 0.0
  %2770 = vmatprep.subr.mxu0 0.0
  %2771 = vmatpush1.msra.mxu0 0.0
  %2772 = vmatprep.subr.mxu0 0.0
  %2773 = vmatpush1.msra.mxu0 0.0
  %2774 = vmatprep.subr.mxu0 0.0
  %2775 = vmatpush1.msra.mxu0 0.0
  %2776 = vmatprep.subr.mxu0 0.0
  %2777 = vmatpush1.msra.mxu0 0.0
  %2778 = vmatprep.mubr.f32.mxu0 0.0
  %2779 = vmatmul.mubr.f32.gmra.mrb[0].mxu0 %v2709
  %v2780 = vpop.f32.mrb[0].mxu0
  %v2781 = vadd.f32 0.0, %v2780
  %v2782 = vpop.f32.mrb[0].mxu0
  %2783 = vdwg.mxu0
  %v2784 = vadd.f32 %v2713, %v2781
  %v2785 = vtanh.pop %v2784
  %v2786 = vmul.f32 %v24, %v2785
  %v2787 = vadd.f32 %v2786, %v25
  %2788 = vrot.lane.b32.xlu0 %v2787, 32
  %v2789 = vpop.permute.xlu0 %2788
  %2790 = vrot.lane.b32.xlu0 %v2787, 96
  %v2791 = vpop.permute.xlu0 %2790
  %v2792 = vmul.f32 %v2789, %v2791
  %v2793 = vmul.f32 %v2787, %v2705
  %v2794 = vadd.f32 %v2793, %v2792
  %2795 = vrot.lane.b32.xlu0 %v2787, 64
  %v2796 = vpop.permute.xlu0 %2795
  %v2797 = vtanh.pop %v2794
  %v2798 = vmul.f32 %v2796, %v2797
  %s2799 = scalar_lea.vmem [#allocation4], 240
  %2800 = vst [vmem:[%s2799] sm:$0xff] %v2798
  %s2801 = scalar_lea.vmem %s0, 248
  %v2802 = vld [vmem:[%s2801] sm:$0xff]
  %2803 = vmatprep.subr.mxu0 0.0
  %2804 = vmatpush1.msra.mxu0 %v26
  %2805 = vmatprep.subr.mxu0 0.0
  %2806 = vmatpush1.msra.mxu0 %v27
  %2807 = vmatprep.subr.mxu0 0.0
  %2808 = vmatpush1.msra.mxu0 %v28
  %2809 = vmatprep.subr.mxu0 0.0
  %2810 = vmatpush1.msra.mxu0 %v29
  %2811 = vmatprep.subr.mxu0 0.0
  %2812 = vmatpush1.msra.mxu0 %v30
  %2813 = vmatprep.subr.mxu0 0.0
  %2814 = vmatpush1.msra.mxu0 %v31
  %2815 = vmatprep.subr.mxu0 0.0
  %2816 = vmatpush1.msra.mxu0 %v32
  %2817 = vmatprep.subr.mxu0 0.0
  %2818 = vmatpush1.msra.mxu0 %v33
  %2819 = vmatprep.subr.mxu0 0.0
  %2820 = vmatpush1.msra.mxu0 %v34
  %2821 = vmatprep.subr.mxu0 0.0
  %2822 = vmatpush1.msra.mxu0 %v35
  %2823 = vmatprep.subr.mxu0 0.0
  %2824 = vmatpush1.msra.mxu0 %v36
  %2825 = vmatprep.subr.mxu0 0.0
  %2826 = vmatpush1.msra.mxu0 %v37
  %2827 = vmatprep.subr.mxu0 0.0
  %2828 = vmatpush1.msra.mxu0 %v38
  %2829 = vmatprep.subr.mxu0 0.0
  %2830 = vmatpush1.msra.mxu0 %v39
  %2831 = vmatprep.subr.mxu0 0.0
  %2832 = vmatpush1.msra.mxu0 %v40
  %2833 = vmatprep.subr.mxu0 0.0
  %2834 = vmatpush1.msra.mxu0 %v41
  %2835 = vmatprep.subr.mxu0 0.0
  %2836 = vmatpush1.msra.mxu0 0.0
  %2837 = vmatprep.subr.mxu0 0.0
  %2838 = vmatpush1.msra.mxu0 0.0
  %2839 = vmatprep.subr.mxu0 0.0
  %2840 = vmatpush1.msra.mxu0 0.0
  %2841 = vmatprep.subr.mxu0 0.0
  %2842 = vmatpush1.msra.mxu0 0.0
  %2843 = vmatprep.subr.mxu0 0.0
  %2844 = vmatpush1.msra.mxu0 0.0
  %2845 = vmatprep.subr.mxu0 0.0
  %2846 = vmatpush1.msra.mxu0 0.0
  %2847 = vmatprep.subr.mxu0 0.0
  %2848 = vmatpush1.msra.mxu0 0.0
  %2849 = vmatprep.subr.mxu0 0.0
  %2850 = vmatpush1.msra.mxu0 0.0
  %2851 = vmatprep.subr.mxu0 0.0
  %2852 = vmatpush1.msra.mxu0 0.0
  %2853 = vmatprep.subr.mxu0 0.0
  %2854 = vmatpush1.msra.mxu0 0.0
  %2855 = vmatprep.subr.mxu0 0.0
  %2856 = vmatpush1.msra.mxu0 0.0
  %2857 = vmatprep.subr.mxu0 0.0
  %2858 = vmatpush1.msra.mxu0 0.0
  %2859 = vmatprep.subr.mxu0 0.0
  %2860 = vmatpush1.msra.mxu0 0.0
  %2861 = vmatprep.subr.mxu0 0.0
  %2862 = vmatpush1.msra.mxu0 0.0
  %2863 = vmatprep.subr.mxu0 0.0
  %2864 = vmatpush1.msra.mxu0 0.0
  %2865 = vmatprep.subr.mxu0 0.0
  %2866 = vmatpush1.msra.mxu0 0.0
  %2867 = vmatprep.mubr.f32.mxu0 0.0
  %2868 = vmatmul.mubr.f32.gmra.mrb[0].mxu0 %v2798
  %v2869 = vpop.f32.mrb[0].mxu0
  %v2870 = vadd.f32 0.0, %v2869
  %v2871 = vpop.f32.mrb[0].mxu0
  %2872 = vdwg.mxu0
  %v2873 = vadd.f32 %v2802, %v2870
  %v2874 = vtanh.pop %v2873
  %v2875 = vmul.f32 %v24, %v2874
  %v2876 = vadd.f32 %v2875, %v25
  %2877 = vrot.lane.b32.xlu0 %v2876, 32
  %v2878 = vpop.permute.xlu0 %2877
  %2879 = vrot.lane.b32.xlu0 %v2876, 96
  %v2880 = vpop.permute.xlu0 %2879
  %v2881 = vmul.f32 %v2878, %v2880
  %v2882 = vmul.f32 %v2876, %v2794
  %v2883 = vadd.f32 %v2882, %v2881
  %2884 = vrot.lane.b32.xlu0 %v2876, 64
  %v2885 = vpop.permute.xlu0 %2884
  %v2886 = vtanh.pop %v2883
  %v2887 = vmul.f32 %v2885, %v2886
  %s2888 = scalar_lea.vmem [#allocation4], 248
  %2889 = vst [vmem:[%s2888] sm:$0xff] %v2887
  %2890 = vst [vmem:[#allocation2] sm:$0xff] %v2887
  %2891 = vst [vmem:[#allocation3] sm:$0xff] %v2883
  %v2892 = vld [vmem:[#allocation4] sm:$0xff]
  %v2893 = vld [vmem:[#allocation4 + $0x8] sm:$0xff]
  %v2894 = vld [vmem:[#allocation4 + $0x10] sm:$0xff]
  %v2895 = vld [vmem:[#allocation4 + $0x18] sm:$0xff]
  %v2896 = vld [vmem:[#allocation4 + $0x20] sm:$0xff]
  %v2897 = vld [vmem:[#allocation4 + $0x28] sm:$0xff]
  %v2898 = vld [vmem:[#allocation4 + $0x30] sm:$0xff]
  %v2899 = vld [vmem:[#allocation4 + $0x38] sm:$0xff]
  %v2900 = vld [vmem:[#allocation4 + $0x40] sm:$0xff]
  %v2901 = vld [vmem:[#allocation4 + $0x48] sm:$0xff]
  %v2902 = vld [vmem:[#allocation4 + $0x50] sm:$0xff]
  %v2903 = vld [vmem:[#allocation4 + $0x58] sm:$0xff]
  %v2904 = vld [vmem:[#allocation4 + $0x60] sm:$0xff]
  %v2905 = vld [vmem:[#allocation4 + $0x68] sm:$0xff]
  %v2906 = vld [vmem:[#allocation4 + $0x70] sm:$0xff]
  %v2907 = vld [vmem:[#allocation4 + $0x78] sm:$0xff]
  %v2908 = vld [vmem:[#allocation4 + $0x80] sm:$0xff]
  %v2909 = vld [vmem:[#allocation4 + $0x88] sm:$0xff]
  %v2910 = vld [vmem:[#allocation4 + $0x90] sm:$0xff]
  %v2911 = vld [vmem:[#allocation4 + $0x98] sm:$0xff]
  %v2912 = vld [vmem:[#allocation4 + $0xa0] sm:$0xff]
  %v2913 = vld [vmem:[#allocation4 + $0xa8] sm:$0xff]
  %v2914 = vld [vmem:[#allocation4 + $0xb0] sm:$0xff]
  %v2915 = vld [vmem:[#allocation4 + $0xb8] sm:$0xff]
  %v2916 = vld [vmem:[#allocation4 + $0xc0] sm:$0xff]
  %v2917 = vld [vmem:[#allocation4 + $0xc8] sm:$0xff]
  %v2918 = vld [vmem:[#allocation4 + $0xd0] sm:$0xff]
  %v2919 = vld [vmem:[#allocation4 + $0xd8] sm:$0xff]
  %v2920 = vld [vmem:[#allocation4 + $0xe0] sm:$0xff]
  %v2921 = vld [vmem:[#allocation4 + $0xe8] sm:$0xff]
  %v2922 = vld [vmem:[#allocation4 + $0xf0] sm:$0xff]
  %v2923 = vld [vmem:[#allocation4 + $0xf8] sm:$0xff]
  %2924 = vst [vmem:[%s2] sm:$0xff] %v2892
  %2925 = vst [vmem:[%s2 + $0x8] sm:$0xff] %v2893
  %2926 = vst [vmem:[%s2 + $0x10] sm:$0xff] %v2894
  %2927 = vst [vmem:[%s2 + $0x18] sm:$0xff] %v2895
  %2928 = vst [vmem:[%s2 + $0x20] sm:$0xff] %v2896
  %2929 = vst [vmem:[%s2 + $0x28] sm:$0xff] %v2897
  %2930 = vst [vmem:[%s2 + $0x30] sm:$0xff] %v2898
  %2931 = vst [vmem:[%s2 + $0x38] sm:$0xff] %v2899
  %2932 = vst [vmem:[%s2 + $0x40] sm:$0xff] %v2900
  %2933 = vst [vmem:[%s2 + $0x48] sm:$0xff] %v2901
  %2934 = vst [vmem:[%s2 + $0x50] sm:$0xff] %v2902
  %2935 = vst [vmem:[%s2 + $0x58] sm:$0xff] %v2903
  %2936 = vst [vmem:[%s2 + $0x60] sm:$0xff] %v2904
  %2937 = vst [vmem:[%s2 + $0x68] sm:$0xff] %v2905
  %2938 = vst [vmem:[%s2 + $0x70] sm:$0xff] %v2906
  %2939 = vst [vmem:[%s2 + $0x78] sm:$0xff] %v2907
  %2940 = vst [vmem:[%s2 + $0x80] sm:$0xff] %v2908
  %2941 = vst [vmem:[%s2 + $0x88] sm:$0xff] %v2909
  %2942 = vst [vmem:[%s2 + $0x90] sm:$0xff] %v2910
  %2943 = vst [vmem:[%s2 + $0x98] sm:$0xff] %v2911
  %2944 = vst [vmem:[%s2 + $0xa0] sm:$0xff] %v2912
  %2945 = vst [vmem:[%s2 + $0xa8] sm:$0xff] %v2913
  %2946 = vst [vmem:[%s2 + $0xb0] sm:$0xff] %v2914
  %2947 = vst [vmem:[%s2 + $0xb8] sm:$0xff] %v2915
  %2948 = vst [vmem:[%s2 + $0xc0] sm:$0xff] %v2916
  %2949 = vst [vmem:[%s2 + $0xc8] sm:$0xff] %v2917
  %2950 = vst [vmem:[%s2 + $0xd0] sm:$0xff] %v2918
  %2951 = vst [vmem:[%s2 + $0xd8] sm:$0xff] %v2919
  %2952 = vst [vmem:[%s2 + $0xe0] sm:$0xff] %v2920
  %2953 = vst [vmem:[%s2 + $0xe8] sm:$0xff] %v2921
  %2954 = vst [vmem:[%s2 + $0xf0] sm:$0xff] %v2922
  %2955 = vst [vmem:[%s2 + $0xf8] sm:$0xff] %v2923
  // Predicated region
  $region14: #{ttlstm_forward.3} parent=0 // pred_check
    %p2956 = pneg %p13
  $region15: #{ttlstm_forward.3} parent=0 // pred_check_branch
    %2958 = sbr.rel (%p2956) target = $region17
  $region16: #{ttlstm_forward.3} parent=0 // pred_region
    %2959 = vst [vmem:[%s3] sm:$0xff] %v2883
  $region17: #{ttlstm_forward.3} parent=0 // pred_fallthru
    _
  // Predicated region
  $region18: #{ttlstm_forward.3} parent=0 // pred_check
    _
  $region19: #{ttlstm_forward.3} parent=0 // pred_check_branch
    %2961 = sbr.rel (0) target = $region21
  $region20: #{ttlstm_forward.3} parent=0 // pred_region
    _
  $region21: #{ttlstm_forward.3} parent=0 // pred_fallthru
    _
  // Predicated region
  $region22: #{ttlstm_forward.3} parent=0 // pred_check
    _
  $region23: #{ttlstm_forward.3} parent=0 // pred_check_branch
    %2963 = sbr.rel (0) target = $region25
  $region24: #{ttlstm_forward.3} parent=0 // pred_region
    _
  $region25: #{ttlstm_forward.3} parent=0 // pred_fallthru
    _
  // Predicated region
  $region26: #{ttlstm_forward.3} parent=0 // pred_check
    _
  $region27: #{ttlstm_forward.3} parent=0 // pred_check_branch
    %2965 = sbr.rel (0) target = $region29
  $region28: #{ttlstm_forward.3} parent=0 // pred_region
    _
  $region29: #{ttlstm_forward.3} parent=0 // pred_fallthru
    _
  // Predicated region
  $region30: #{ttlstm_forward.3} parent=0 // pred_check
    _
  $region31: #{ttlstm_forward.3} parent=0 // pred_check_branch
    %2967 = sbr.rel (0) target = $region33
  $region32: #{ttlstm_forward.3} parent=0 // pred_region
    _
  $region33: #{ttlstm_forward.3} parent=0 // pred_fallthru
    _

</llo_original>
